<compile_context>
chip_gen: v5e
topology: v5e:2x2
jax: 0.10.0
libtpu: 0.0.40
codegen_flags: <defaults>
</compile_context>

<pallas_src>
import math

import jax
import jax.numpy as jnp
import numpy as np
from jax.experimental import pallas as pl
from jax.experimental.pallas import tpu as pltpu

# ----------------------------------------------------------------------------
# Small synthetic "PhoBERT-like" config (scaled down from 12 layers x 768).
# ----------------------------------------------------------------------------
B = 2             # batch
S = 8             # sequence length
H = 32            # hidden size
NH = 4            # attention heads
HD = H // NH      # head dim
FF = 64           # ffn intermediate size
NUM_LAYERS = 2
VOCAB = 100
NUM_CLASSES = 5
LOGIT_PAD = 128   # lane-dense padded logits width (sliced back in the wrapper)
LN_EPS = 1e-12

# --- row layout of the packed global "misc" slab (16, 128) ---
_ROW_POS = 0                  # rows [0, S)        : pos_emb + tok_emb, lanes [0, H)
_ROW_HMASK = S                # rows [S, S+NH)     : per-head lane masks, lanes [0, H)
_ROW_LNG = S + NH             # embedding-LN gamma
_ROW_LNB = S + NH + 1         # embedding-LN beta
_ROW_BP = S + NH + 2          # pooler bias
_ROW_BFC = S + NH + 3         # classifier bias, lane-padded to 128
MISC_ROWS = S + NH + 4        # = 16

# --- row layout of the packed per-layer "vecs" slab (L, 10, 128) ---
_V_BQ, _V_BK, _V_BV, _V_BO, _V_B1, _V_B2, _V_L1G, _V_L1B, _V_L2G, _V_L2B = range(10)
VEC_ROWS = 10


def _layernorm(x, g, b):
    mu = jnp.mean(x, axis=-1, keepdims=True)
    var = jnp.mean((x - mu) ** 2, axis=-1, keepdims=True)
    return (x - mu) * jax.lax.rsqrt(var + LN_EPS) * g + b


def _gelu(x):
    # tanh approximation of GELU (EUP-friendly on TPU).
    c = math.sqrt(2.0 / math.pi)
    return 0.5 * x * (1.0 + jnp.tanh(c * (x + 0.044715 * x * x * x)))


# ----------------------------------------------------------------------------
# Fused forward kernel:
#   one-hot embedding gather -> embedding-LN -> NUM_LAYERS encoder layers
#   (head-masked batched attention + FFN, post-LN) -> pooler + classifier.
# ----------------------------------------------------------------------------
def fused_forward_kernel(ids_ref, mask_ref, wemb_ref, misc_ref, vecs_ref,
                         wqkv_ref, wo_ref, w1_ref, w2_ref, wp_ref, wfc_ref,
                         out_ref):
    n = B * S
    scale = 1.0 / math.sqrt(HD)

    # ---- Embedding lookup fused in-kernel as a single one-hot MXU matmul ----
    ids = ids_ref[...]                                             # (n, 1) int32
    vocab_iota = jax.lax.broadcasted_iota(jnp.int32, (n, VOCAB), 1)
    onehot = (vocab_iota == ids).astype(jnp.float32)               # (n, VOCAB)
    emb = jnp.dot(onehot, wemb_ref[...],
                  preferred_element_type=jnp.float32)              # (n, H)
    pos_tok = misc_ref[_ROW_POS:_ROW_POS + S, 0:H]                 # (S, H)
    emb = (emb.reshape(B, S, H) + pos_tok).reshape(n, H)
    x = _layernorm(emb,
                   misc_ref[_ROW_LNG:_ROW_LNG + 1, 0:H],
                   misc_ref[_ROW_LNB:_ROW_LNB + 1, 0:H])

    # Additive attention bias from the int mask, built once (hoisted).
    bias = (1.0 - mask_ref[...].astype(jnp.float32)) * -1e9        # (B, 1, S)

    for l in range(NUM_LAYERS):
        # q / k / v projections; weights are static slices of the layer slab.
        q = jnp.dot(x, wqkv_ref[l, 0], preferred_element_type=jnp.float32) \
            + vecs_ref[l, _V_BQ:_V_BQ + 1, 0:H]
        k = jnp.dot(x, wqkv_ref[l, 1], preferred_element_type=jnp.float32) \
            + vecs_ref[l, _V_BK:_V_BK + 1, 0:H]
        v = jnp.dot(x, wqkv_ref[l, 2], preferred_element_type=jnp.float32) \
            + vecs_ref[l, _V_BV:_V_BV + 1, 0:H]
        q3 = q.reshape(B, S, H)                                    # leading split only
        k3 = k.reshape(B, S, H)
        v3 = v.reshape(B, S, H)

        # Head-batched attention with NO lane slices / concatenates:
        # a constant per-head lane mask on Q restricts the full-H contraction
        # to that head's lanes, and the V-masked context terms sum directly
        # into the concatenated (B, S, H) layout.
        ctx3 = jnp.zeros((B, S, H), jnp.float32)
        for h in range(NH):
            mh = misc_ref[_ROW_HMASK + h:_ROW_HMASK + h + 1, 0:H]   # (1, H)
            s = jnp.einsum("bqc,bkc->bqk", q3 * mh, k3,
                           preferred_element_type=jnp.float32)      # (B, S, S)
            s = s * scale + bias
            # NOTE: fully-masked query rows degrade to uniform attention
            # (matches jax.nn.softmax / the reference semantics).
            m = jnp.max(s, axis=-1, keepdims=True)
            p = jnp.exp(s - m)
            p = p / jnp.sum(p, axis=-1, keepdims=True)              # exact divide
            ctx3 = ctx3 + jnp.einsum("bqk,bkc->bqc", p, v3 * mh,
                                     preferred_element_type=jnp.float32)
        ctx = ctx3.reshape(n, H)

        attn = jnp.dot(ctx, wo_ref[l], preferred_element_type=jnp.float32) \
            + vecs_ref[l, _V_BO:_V_BO + 1, 0:H]
        y = _layernorm(x + attn,
                       vecs_ref[l, _V_L1G:_V_L1G + 1, 0:H],
                       vecs_ref[l, _V_L1B:_V_L1B + 1, 0:H])
        hdn = _gelu(jnp.dot(y, w1_ref[l], preferred_element_type=jnp.float32)
                    + vecs_ref[l, _V_B1:_V_B1 + 1, 0:FF])
        ff = jnp.dot(hdn, w2_ref[l], preferred_element_type=jnp.float32) \
            + vecs_ref[l, _V_B2:_V_B2 + 1, 0:H]
        x = _layernorm(y + ff,
                       vecs_ref[l, _V_L2G:_V_L2G + 1, 0:H],
                       vecs_ref[l, _V_L2B:_V_L2B + 1, 0:H])

    # Pooler + classifier on ALL rows so the output store is a dense,
    # unmasked (B*S, 128) = 2 full (8, 128) tiles; the wrapper picks the CLS
    # rows and the real class columns.  (dropout: identity at inference)
    pooled = jnp.tanh(jnp.dot(x, wp_ref[...], preferred_element_type=jnp.float32)
                      + misc_ref[_ROW_BP:_ROW_BP + 1, 0:H])
    logits = jnp.dot(pooled, wfc_ref[...], preferred_element_type=jnp.float32) \
        + misc_ref[_ROW_BFC:_ROW_BFC + 1, 0:LOGIT_PAD]
    out_ref[...] = logits.astype(out_ref.dtype)


# ----------------------------------------------------------------------------
# Wrapper (jit'ed so the tiny glue fuses around the single custom call).
# ----------------------------------------------------------------------------
@jax.jit
def intent_model_forward(input_ids, attention_mask, params):
    ids2 = input_ids.reshape(B * S, 1).astype(jnp.int32)
    mask3 = attention_mask.reshape(B, 1, S).astype(jnp.int32)

    inputs = (ids2, mask3,
              params["word_emb"], params["k_misc"], params["k_vecs"],
              params["k_wqkv"], params["wo"], params["w1"], params["w2"],
              params["wp"], params["k_wfc_pad"])

    vmem = pl.BlockSpec(memory_space=pltpu.MemorySpace.VMEM)
    logits_all = pl.pallas_call(
        fused_forward_kernel,
        out_shape=jax.ShapeDtypeStruct((B * S, LOGIT_PAD), jnp.float32),
        in_specs=[vmem] * len(inputs),
        out_specs=vmem,
    )(*inputs)
    # Dense (B*S, 128) store in the kernel; CLS rows + real classes here.
    return logits_all.reshape(B, S, LOGIT_PAD)[:, 0, :NUM_CLASSES]


# ----------------------------------------------------------------------------
# Pure-JAX reference (same math, same stacked params) for correctness check
# ----------------------------------------------------------------------------
def ref_forward(input_ids, attention_mask, params):
    emb = (params["word_emb"][input_ids]
           + params["pos_emb"][None, :, :]
           + params["tok_emb"][None, None, :])
    x = _layernorm(emb, params["ln_emb_g"], params["ln_emb_b"])       # (B,S,H)
    mask_add = (1.0 - attention_mask.astype(jnp.float32)) * -1e9      # (B, S)

    for l in range(NUM_LAYERS):
        qkv = x @ params["wqkv"][l] + params["bqkv"][l]               # (B,S,3H)
        q, k, v = jnp.split(qkv, 3, axis=-1)

        def heads(t):
            return t.reshape(B, S, NH, HD).transpose(0, 2, 1, 3)      # (B,NH,S,HD)

        qh, kh, vh = heads(q), heads(k), heads(v)
        s = (jnp.einsum("bhqd,bhkd->bhqk", qh, kh) / math.sqrt(HD)
             + mask_add[:, None, None, :])
        p = jax.nn.softmax(s, axis=-1)
        ctx = (jnp.einsum("bhqk,bhkd->bhqd", p, vh)
               .transpose(0, 2, 1, 3).reshape(B, S, H))
        attn = ctx @ params["wo"][l] + params["bo"][l]
        y = _layernorm(x + attn, params["ln1g"][l], params["ln1b"][l])
        ff = _gelu(y @ params["w1"][l] + params["b1"][l]) @ params["w2"][l] \
            + params["b2"][l]
        x = _layernorm(y + ff, params["ln2g"][l], params["ln2b"][l])

    cls = x[:, 0, :]
    pooled = jnp.tanh(cls @ params["wp"] + params["bp"])
    return pooled @ params["wfc"] + params["bfc"]


# ----------------------------------------------------------------------------
# Deterministic parameter init + one-time packing of the kernel-side slabs
# ----------------------------------------------------------------------------
def init_params(key):
    def nrm(k, shape, scale=0.02):
        return (scale * jax.random.normal(k, shape)).astype(jnp.float32)

    ks = jax.random.split(key, 6)
    params = {
        "word_emb": nrm(ks[0], (VOCAB, H)),
        "pos_emb": nrm(ks[1], (S, H)),
        "tok_emb": nrm(ks[2], (H,)),
        "ln_emb_g": jnp.ones((1, H), jnp.float32),
        "ln_emb_b": jnp.zeros((1, H), jnp.float32),
        "wp": nrm(ks[3], (H, H)),
        "bp": nrm(ks[4], (1, H)),
        "wfc": nrm(ks[5], (H, NUM_CLASSES)),
        "bfc": jnp.zeros((1, NUM_CLASSES), jnp.float32),
    }

    stacks = {name: [] for name in
              ("wqkv", "bqkv", "wo", "bo", "ln1g", "ln1b",
               "w1", "b1", "w2", "b2", "ln2g", "ln2b")}
    for i in range(NUM_LAYERS):
        lk = jax.random.split(jax.random.fold_in(key, 100 + i), 8)
        stacks["wqkv"].append(nrm(lk[0], (H, 3 * H)))
        stacks["bqkv"].append(nrm(lk[1], (1, 3 * H)))
        stacks["wo"].append(nrm(lk[2], (H, H)))
        stacks["bo"].append(nrm(lk[3], (1, H)))
        stacks["ln1g"].append(jnp.ones((1, H), jnp.float32))
        stacks["ln1b"].append(jnp.zeros((1, H), jnp.float32))
        stacks["w1"].append(nrm(lk[4], (H, FF)))
        stacks["b1"].append(nrm(lk[5], (1, FF)))
        stacks["w2"].append(nrm(lk[6], (FF, H)))
        stacks["b2"].append(nrm(lk[7], (1, H)))
        stacks["ln2g"].append(jnp.ones((1, H), jnp.float32))
        stacks["ln2b"].append(jnp.zeros((1, H), jnp.float32))

    for name, lst in stacks.items():
        params[name] = jnp.stack(lst)                                # (L, ...)

    # ---- one-time packing of kernel-side constants (hoisted out of the
    #      per-call path; nothing below is rebuilt at inference time) ----
    wqkv = np.asarray(params["wqkv"])                                # (L, H, 3H)
    params["k_wqkv"] = jnp.asarray(
        np.stack([wqkv[:, :, 0:H], wqkv[:, :, H:2 * H], wqkv[:, :, 2 * H:3 * H]],
                 axis=1))                                            # (L, 3, H, H)

    vecs = np.zeros((NUM_LAYERS, VEC_ROWS, 128), np.float32)
    bqkv = np.asarray(params["bqkv"])
    for l in range(NUM_LAYERS):
        vecs[l, _V_BQ, :H] = bqkv[l, 0, 0:H]
        vecs[l, _V_BK, :H] = bqkv[l, 0, H:2 * H]
        vecs[l, _V_BV, :H] = bqkv[l, 0, 2 * H:3 * H]
        vecs[l, _V_BO, :H] = np.asarray(params["bo"][l, 0])
        vecs[l, _V_B1, :FF] = np.asarray(params["b1"][l, 0])
        vecs[l, _V_B2, :H] = np.asarray(params["b2"][l, 0])
        vecs[l, _V_L1G, :H] = np.asarray(params["ln1g"][l, 0])
        vecs[l, _V_L1B, :H] = np.asarray(params["ln1b"][l, 0])
        vecs[l, _V_L2G, :H] = np.asarray(params["ln2g"][l, 0])
        vecs[l, _V_L2B, :H] = np.asarray(params["ln2b"][l, 0])
    params["k_vecs"] = jnp.asarray(vecs)                             # (L, 10, 128)

    misc = np.zeros((MISC_ROWS, 128), np.float32)
    misc[_ROW_POS:_ROW_POS + S, :H] = (np.asarray(params["pos_emb"])
                                       + np.asarray(params["tok_emb"])[None, :])
    for h in range(NH):                                              # head lane masks
        misc[_ROW_HMASK + h, h * HD:(h + 1) * HD] = 1.0
    misc[_ROW_LNG, :H] = np.asarray(params["ln_emb_g"][0])
    misc[_ROW_LNB, :H] = np.asarray(params["ln_emb_b"][0])
    misc[_ROW_BP, :H] = np.asarray(params["bp"][0])
    misc[_ROW_BFC, :NUM_CLASSES] = np.asarray(params["bfc"][0])
    params["k_misc"] = jnp.asarray(misc)                             # (16, 128)

    wfc_pad = np.zeros((H, LOGIT_PAD), np.float32)
    wfc_pad[:, :NUM_CLASSES] = np.asarray(params["wfc"])
    params["k_wfc_pad"] = jnp.asarray(wfc_pad)                       # (H, 128)

    # TODO(synk): at real PhoBERT scale store the weight slabs in bfloat16 and
    #             stream per layer (f32 accumulation via preferred_element_type).
    return params


if __name__ == "__main__":
    key = jax.random.PRNGKey(0)
    params = init_params(key)

    ids_key = jax.random.fold_in(key, 999)
    input_ids = jax.random.randint(ids_key, (B, S), 0, VOCAB, dtype=jnp.int32)
    attention_mask = jnp.array([[1, 1, 1, 1, 1, 1, 1, 1],
                                [1, 1, 1, 1, 1, 1, 0, 0]], dtype=jnp.int32)

    logits = intent_model_forward(input_ids, attention_mask, params)
    logits = jax.block_until_ready(logits)

    ref = jax.block_until_ready(ref_forward(input_ids, attention_mask, params))
    if not np.allclose(np.asarray(logits), np.asarray(ref), rtol=1e-3, atol=1e-3):
        raise AssertionError("Pallas kernel output does not match JAX reference")

    print("KERNEL_OK")
</pallas_src>

<mosaic_0001>
module attributes {stable_mosaic.version = 11 : i64} {
  func.func @fused_forward_kernel(%arg0: memref<16x1xi32, #tpu.memory_space<vmem>>, %arg1: memref<2x1x8xi32, #tpu.memory_space<vmem>>, %arg2: memref<100x32xf32, #tpu.memory_space<vmem>>, %arg3: memref<16x128xf32, #tpu.memory_space<vmem>>, %arg4: memref<2x10x128xf32, #tpu.memory_space<vmem>>, %arg5: memref<2x3x32x32xf32, #tpu.memory_space<vmem>>, %arg6: memref<2x32x32xf32, #tpu.memory_space<vmem>>, %arg7: memref<2x32x64xf32, #tpu.memory_space<vmem>>, %arg8: memref<2x64x32xf32, #tpu.memory_space<vmem>>, %arg9: memref<32x32xf32, #tpu.memory_space<vmem>>, %arg10: memref<32x128xf32, #tpu.memory_space<vmem>>, %arg11: memref<16x128xf32, #tpu.memory_space<vmem>>) attributes {dimension_semantics = [], scalar_prefetch = 0 : i64, scratch_operands = 0 : i64, tpu.core_type = #tpu.core_type<tc>} {
    %c0 = arith.constant 0 : index
    %c0_0 = arith.constant 0 : index
    %0 = vector.load %arg0[%c0, %c0_0] : memref<16x1xi32, #tpu.memory_space<vmem>>, vector<16x1xi32>
    %1 = tpu.iota {dimensions = array<i32: 1>} : vector<16x100xi32>
    %2 = vector.broadcast %0 : vector<16x1xi32> to vector<16x100xi32>
    %3 = arith.cmpi eq, %1, %2 : vector<16x100xi32>
    %4 = arith.extui %3 : vector<16x100xi1> to vector<16x100xi32>
    %5 = arith.sitofp %4 : vector<16x100xi32> to vector<16x100xf32>
    %c0_1 = arith.constant 0 : index
    %c0_2 = arith.constant 0 : index
    %6 = vector.load %arg2[%c0_1, %c0_2] : memref<100x32xf32, #tpu.memory_space<vmem>>, vector<100x32xf32>
    %cst = arith.constant dense<0.000000e+00> : vector<16x32xf32>
    %7 = tpu.matmul %5, %6, %cst {dimension_numbers = #tpu.dot_dimension_numbers<[1], [0], [0], [1], [0, 0, 1, 1], [], []>} : vector<16x100xf32>, vector<100x32xf32>, vector<16x32xf32> -> vector<16x32xf32>
    %c0_3 = arith.constant 0 : index
    %c0_4 = arith.constant 0 : index
    %8 = vector.load %arg3[%c0_3, %c0_4] : memref<16x128xf32, #tpu.memory_space<vmem>>, vector<8x32xf32>
    %9 = vector.shape_cast %7 : vector<16x32xf32> to vector<2x8x32xf32>
    %10 = vector.shape_cast %8 : vector<8x32xf32> to vector<1x8x32xf32>
    %11 = vector.broadcast %10 : vector<1x8x32xf32> to vector<2x8x32xf32>
    %12 = arith.addf %9, %11 : vector<2x8x32xf32>
    %13 = vector.shape_cast %12 : vector<2x8x32xf32> to vector<16x32xf32>
    %c12 = arith.constant 12 : index
    %c0_5 = arith.constant 0 : index
    %14 = vector.load %arg3[%c12, %c0_5] : memref<16x128xf32, #tpu.memory_space<vmem>>, vector<1x32xf32>
    %c13 = arith.constant 13 : index
    %c0_6 = arith.constant 0 : index
    %15 = vector.load %arg3[%c13, %c0_6] : memref<16x128xf32, #tpu.memory_space<vmem>>, vector<1x32xf32>
    %cst_7 = arith.constant dense<0.000000e+00> : vector<16xf32>
    %16 = vector.multi_reduction <add>, %13, %cst_7 [1] : vector<16x32xf32> to vector<16xf32>
    %17 = vector.shape_cast %16 : vector<16xf32> to vector<16x1xf32>
    %cst_8 = arith.constant 3.200000e+01 : f32
    %18 = vector.broadcast %cst_8 : f32 to vector<16x1xf32>
    %19 = arith.divf %17, %18 : vector<16x1xf32>
    %20 = vector.broadcast %19 : vector<16x1xf32> to vector<16x32xf32>
    %21 = arith.subf %13, %20 : vector<16x32xf32>
    %22 = arith.mulf %21, %21 : vector<16x32xf32>
    %cst_9 = arith.constant dense<0.000000e+00> : vector<16xf32>
    %23 = vector.multi_reduction <add>, %22, %cst_9 [1] : vector<16x32xf32> to vector<16xf32>
    %24 = vector.shape_cast %23 : vector<16xf32> to vector<16x1xf32>
    %cst_10 = arith.constant 3.200000e+01 : f32
    %25 = vector.broadcast %cst_10 : f32 to vector<16x1xf32>
    %26 = arith.divf %24, %25 : vector<16x1xf32>
    %27 = vector.broadcast %19 : vector<16x1xf32> to vector<16x32xf32>
    %28 = arith.subf %13, %27 : vector<16x32xf32>
    %cst_11 = arith.constant 9.99999996E-13 : f32
    %29 = vector.broadcast %cst_11 : f32 to vector<16x1xf32>
    %30 = arith.addf %26, %29 : vector<16x1xf32>
    %31 = math.rsqrt %30 : vector<16x1xf32>
    %32 = vector.broadcast %31 : vector<16x1xf32> to vector<16x32xf32>
    %33 = arith.mulf %28, %32 : vector<16x32xf32>
    %34 = vector.broadcast %14 : vector<1x32xf32> to vector<16x32xf32>
    %35 = arith.mulf %33, %34 : vector<16x32xf32>
    %36 = vector.broadcast %15 : vector<1x32xf32> to vector<16x32xf32>
    %37 = arith.addf %35, %36 : vector<16x32xf32>
    %c0_12 = arith.constant 0 : index
    %c0_13 = arith.constant 0 : index
    %c0_14 = arith.constant 0 : index
    %38 = vector.load %arg1[%c0_12, %c0_13, %c0_14] : memref<2x1x8xi32, #tpu.memory_space<vmem>>, vector<2x1x8xi32>
    %39 = arith.sitofp %38 : vector<2x1x8xi32> to vector<2x1x8xf32>
    %cst_15 = arith.constant 1.000000e+00 : f32
    %40 = vector.broadcast %cst_15 : f32 to vector<2x1x8xf32>
    %41 = arith.subf %40, %39 : vector<2x1x8xf32>
    %cst_16 = arith.constant -1.000000e+09 : f32
    %42 = vector.broadcast %cst_16 : f32 to vector<2x1x8xf32>
    %43 = arith.mulf %41, %42 : vector<2x1x8xf32>
    %c0_17 = arith.constant 0 : index
    %c0_18 = arith.constant 0 : index
    %c0_19 = arith.constant 0 : index
    %c0_20 = arith.constant 0 : index
    %44 = vector.load %arg5[%c0_17, %c0_18, %c0_19, %c0_20] : memref<2x3x32x32xf32, #tpu.memory_space<vmem>>, vector<1x1x32x32xf32>
    %45 = vector.shape_cast %44 : vector<1x1x32x32xf32> to vector<32x32xf32>
    %cst_21 = arith.constant dense<0.000000e+00> : vector<16x32xf32>
    %46 = tpu.matmul %37, %45, %cst_21 {dimension_numbers = #tpu.dot_dimension_numbers<[1], [0], [0], [1], [0, 0, 1, 1], [], []>} : vector<16x32xf32>, vector<32x32xf32>, vector<16x32xf32> -> vector<16x32xf32>
    %c0_22 = arith.constant 0 : index
    %c0_23 = arith.constant 0 : index
    %c0_24 = arith.constant 0 : index
    %47 = vector.load %arg4[%c0_22, %c0_23, %c0_24] : memref<2x10x128xf32, #tpu.memory_space<vmem>>, vector<1x1x32xf32>
    %48 = vector.shape_cast %47 : vector<1x1x32xf32> to vector<1x32xf32>
    %49 = vector.broadcast %48 : vector<1x32xf32> to vector<16x32xf32>
    %50 = arith.addf %46, %49 : vector<16x32xf32>
    %c0_25 = arith.constant 0 : index
    %c1 = arith.constant 1 : index
    %c0_26 = arith.constant 0 : index
    %c0_27 = arith.constant 0 : index
    %51 = vector.load %arg5[%c0_25, %c1, %c0_26, %c0_27] : memref<2x3x32x32xf32, #tpu.memory_space<vmem>>, vector<1x1x32x32xf32>
    %52 = vector.shape_cast %51 : vector<1x1x32x32xf32> to vector<32x32xf32>
    %cst_28 = arith.constant dense<0.000000e+00> : vector<16x32xf32>
    %53 = tpu.matmul %37, %52, %cst_28 {dimension_numbers = #tpu.dot_dimension_numbers<[1], [0], [0], [1], [0, 0, 1, 1], [], []>} : vector<16x32xf32>, vector<32x32xf32>, vector<16x32xf32> -> vector<16x32xf32>
    %c0_29 = arith.constant 0 : index
    %c1_30 = arith.constant 1 : index
    %c0_31 = arith.constant 0 : index
    %54 = vector.load %arg4[%c0_29, %c1_30, %c0_31] : memref<2x10x128xf32, #tpu.memory_space<vmem>>, vector<1x1x32xf32>
    %55 = vector.shape_cast %54 : vector<1x1x32xf32> to vector<1x32xf32>
    %56 = vector.broadcast %55 : vector<1x32xf32> to vector<16x32xf32>
    %57 = arith.addf %53, %56 : vector<16x32xf32>
    %c0_32 = arith.constant 0 : index
    %c2 = arith.constant 2 : index
    %c0_33 = arith.constant 0 : index
    %c0_34 = arith.constant 0 : index
    %58 = vector.load %arg5[%c0_32, %c2, %c0_33, %c0_34] : memref<2x3x32x32xf32, #tpu.memory_space<vmem>>, vector<1x1x32x32xf32>
    %59 = vector.shape_cast %58 : vector<1x1x32x32xf32> to vector<32x32xf32>
    %cst_35 = arith.constant dense<0.000000e+00> : vector<16x32xf32>
    %60 = tpu.matmul %37, %59, %cst_35 {dimension_numbers = #tpu.dot_dimension_numbers<[1], [0], [0], [1], [0, 0, 1, 1], [], []>} : vector<16x32xf32>, vector<32x32xf32>, vector<16x32xf32> -> vector<16x32xf32>
    %c0_36 = arith.constant 0 : index
    %c2_37 = arith.constant 2 : index
    %c0_38 = arith.constant 0 : index
    %61 = vector.load %arg4[%c0_36, %c2_37, %c0_38] : memref<2x10x128xf32, #tpu.memory_space<vmem>>, vector<1x1x32xf32>
    %62 = vector.shape_cast %61 : vector<1x1x32xf32> to vector<1x32xf32>
    %63 = vector.broadcast %62 : vector<1x32xf32> to vector<16x32xf32>
    %64 = arith.addf %60, %63 : vector<16x32xf32>
    %65 = vector.shape_cast %50 : vector<16x32xf32> to vector<2x8x32xf32>
    %66 = vector.shape_cast %57 : vector<16x32xf32> to vector<2x8x32xf32>
    %67 = vector.shape_cast %64 : vector<16x32xf32> to vector<2x8x32xf32>
    %cst_39 = arith.constant 0.000000e+00 : f32
    %68 = vector.broadcast %cst_39 : f32 to vector<2x8x32xf32>
    %c8 = arith.constant 8 : index
    %c0_40 = arith.constant 0 : index
    %69 = vector.load %arg3[%c8, %c0_40] : memref<16x128xf32, #tpu.memory_space<vmem>>, vector<1x32xf32>
    %70 = vector.shape_cast %69 : vector<1x32xf32> to vector<1x1x32xf32>
    %71 = vector.broadcast %70 : vector<1x1x32xf32> to vector<2x8x32xf32>
    %72 = arith.mulf %65, %71 : vector<2x8x32xf32>
    "tpu.trace_start"() <{level = 10 : i32, message = "bqc,bkc->bqk"}> : () -> ()
    %cst_41 = arith.constant dense<0.000000e+00> : vector<2x8x8xf32>
    %73 = tpu.matmul %72, %66, %cst_41 {dimension_numbers = #tpu.dot_dimension_numbers<[2], [2], [1], [1], [0, 0, 0, 1, 1, 1], [0], [0]>} : vector<2x8x32xf32>, vector<2x8x32xf32>, vector<2x8x8xf32> -> vector<2x8x8xf32>
    "tpu.trace_stop"() : () -> ()
    %cst_42 = arith.constant 0.353553385 : f32
    %74 = vector.broadcast %cst_42 : f32 to vector<2x8x8xf32>
    %75 = arith.mulf %73, %74 : vector<2x8x8xf32>
    %76 = vector.broadcast %43 : vector<2x1x8xf32> to vector<2x8x8xf32>
    %77 = arith.addf %75, %76 : vector<2x8x8xf32>
    %cst_43 = arith.constant dense<0xFF800000> : vector<2x8xf32>
    %78 = vector.multi_reduction <maximumf>, %77, %cst_43 [2] : vector<2x8x8xf32> to vector<2x8xf32>
    %79 = vector.shape_cast %78 : vector<2x8xf32> to vector<2x8x1xf32>
    %80 = vector.broadcast %79 : vector<2x8x1xf32> to vector<2x8x8xf32>
    %81 = arith.subf %77, %80 : vector<2x8x8xf32>
    %82 = math.exp %81 : vector<2x8x8xf32>
    %cst_44 = arith.constant dense<0.000000e+00> : vector<2x8xf32>
    %83 = vector.multi_reduction <add>, %82, %cst_44 [2] : vector<2x8x8xf32> to vector<2x8xf32>
    %84 = vector.shape_cast %83 : vector<2x8xf32> to vector<2x8x1xf32>
    %85 = vector.broadcast %84 : vector<2x8x1xf32> to vector<2x8x8xf32>
    %86 = arith.divf %82, %85 : vector<2x8x8xf32>
    %87 = vector.shape_cast %69 : vector<1x32xf32> to vector<1x1x32xf32>
    %88 = vector.broadcast %87 : vector<1x1x32xf32> to vector<2x8x32xf32>
    %89 = arith.mulf %67, %88 : vector<2x8x32xf32>
    "tpu.trace_start"() <{level = 10 : i32, message = "bqk,bkc->bqc"}> : () -> ()
    %cst_45 = arith.constant dense<0.000000e+00> : vector<2x8x32xf32>
    %90 = tpu.matmul %86, %89, %cst_45 {dimension_numbers = #tpu.dot_dimension_numbers<[2], [1], [1], [2], [0, 0, 0, 1, 1, 2], [0], [0]>} : vector<2x8x8xf32>, vector<2x8x32xf32>, vector<2x8x32xf32> -> vector<2x8x32xf32>
    "tpu.trace_stop"() : () -> ()
    %91 = arith.addf %68, %90 : vector<2x8x32xf32>
    %c9 = arith.constant 9 : index
    %c0_46 = arith.constant 0 : index
    %92 = vector.load %arg3[%c9, %c0_46] : memref<16x128xf32, #tpu.memory_space<vmem>>, vector<1x32xf32>
    %93 = vector.shape_cast %92 : vector<1x32xf32> to vector<1x1x32xf32>
    %94 = vector.broadcast %93 : vector<1x1x32xf32> to vector<2x8x32xf32>
    %95 = arith.mulf %65, %94 : vector<2x8x32xf32>
    "tpu.trace_start"() <{level = 10 : i32, message = "bqc,bkc->bqk"}> : () -> ()
    %cst_47 = arith.constant dense<0.000000e+00> : vector<2x8x8xf32>
    %96 = tpu.matmul %95, %66, %cst_47 {dimension_numbers = #tpu.dot_dimension_numbers<[2], [2], [1], [1], [0, 0, 0, 1, 1, 1], [0], [0]>} : vector<2x8x32xf32>, vector<2x8x32xf32>, vector<2x8x8xf32> -> vector<2x8x8xf32>
    "tpu.trace_stop"() : () -> ()
    %cst_48 = arith.constant 0.353553385 : f32
    %97 = vector.broadcast %cst_48 : f32 to vector<2x8x8xf32>
    %98 = arith.mulf %96, %97 : vector<2x8x8xf32>
    %99 = vector.broadcast %43 : vector<2x1x8xf32> to vector<2x8x8xf32>
    %100 = arith.addf %98, %99 : vector<2x8x8xf32>
    %cst_49 = arith.constant dense<0xFF800000> : vector<2x8xf32>
    %101 = vector.multi_reduction <maximumf>, %100, %cst_49 [2] : vector<2x8x8xf32> to vector<2x8xf32>
    %102 = vector.shape_cast %101 : vector<2x8xf32> to vector<2x8x1xf32>
    %103 = vector.broadcast %102 : vector<2x8x1xf32> to vector<2x8x8xf32>
    %104 = arith.subf %100, %103 : vector<2x8x8xf32>
    %105 = math.exp %104 : vector<2x8x8xf32>
    %cst_50 = arith.constant dense<0.000000e+00> : vector<2x8xf32>
    %106 = vector.multi_reduction <add>, %105, %cst_50 [2] : vector<2x8x8xf32> to vector<2x8xf32>
    %107 = vector.shape_cast %106 : vector<2x8xf32> to vector<2x8x1xf32>
    %108 = vector.broadcast %107 : vector<2x8x1xf32> to vector<2x8x8xf32>
    %109 = arith.divf %105, %108 : vector<2x8x8xf32>
    %110 = vector.shape_cast %92 : vector<1x32xf32> to vector<1x1x32xf32>
    %111 = vector.broadcast %110 : vector<1x1x32xf32> to vector<2x8x32xf32>
    %112 = arith.mulf %67, %111 : vector<2x8x32xf32>
    "tpu.trace_start"() <{level = 10 : i32, message = "bqk,bkc->bqc"}> : () -> ()
    %cst_51 = arith.constant dense<0.000000e+00> : vector<2x8x32xf32>
    %113 = tpu.matmul %109, %112, %cst_51 {dimension_numbers = #tpu.dot_dimension_numbers<[2], [1], [1], [2], [0, 0, 0, 1, 1, 2], [0], [0]>} : vector<2x8x8xf32>, vector<2x8x32xf32>, vector<2x8x32xf32> -> vector<2x8x32xf32>
    "tpu.trace_stop"() : () -> ()
    %114 = arith.addf %91, %113 : vector<2x8x32xf32>
    %c10 = arith.constant 10 : index
    %c0_52 = arith.constant 0 : index
    %115 = vector.load %arg3[%c10, %c0_52] : memref<16x128xf32, #tpu.memory_space<vmem>>, vector<1x32xf32>
    %116 = vector.shape_cast %115 : vector<1x32xf32> to vector<1x1x32xf32>
    %117 = vector.broadcast %116 : vector<1x1x32xf32> to vector<2x8x32xf32>
    %118 = arith.mulf %65, %117 : vector<2x8x32xf32>
    "tpu.trace_start"() <{level = 10 : i32, message = "bqc,bkc->bqk"}> : () -> ()
    %cst_53 = arith.constant dense<0.000000e+00> : vector<2x8x8xf32>
    %119 = tpu.matmul %118, %66, %cst_53 {dimension_numbers = #tpu.dot_dimension_numbers<[2], [2], [1], [1], [0, 0, 0, 1, 1, 1], [0], [0]>} : vector<2x8x32xf32>, vector<2x8x32xf32>, vector<2x8x8xf32> -> vector<2x8x8xf32>
    "tpu.trace_stop"() : () -> ()
    %cst_54 = arith.constant 0.353553385 : f32
    %120 = vector.broadcast %cst_54 : f32 to vector<2x8x8xf32>
    %121 = arith.mulf %119, %120 : vector<2x8x8xf32>
    %122 = vector.broadcast %43 : vector<2x1x8xf32> to vector<2x8x8xf32>
    %123 = arith.addf %121, %122 : vector<2x8x8xf32>
    %cst_55 = arith.constant dense<0xFF800000> : vector<2x8xf32>
    %124 = vector.multi_reduction <maximumf>, %123, %cst_55 [2] : vector<2x8x8xf32> to vector<2x8xf32>
    %125 = vector.shape_cast %124 : vector<2x8xf32> to vector<2x8x1xf32>
    %126 = vector.broadcast %125 : vector<2x8x1xf32> to vector<2x8x8xf32>
    %127 = arith.subf %123, %126 : vector<2x8x8xf32>
    %128 = math.exp %127 : vector<2x8x8xf32>
    %cst_56 = arith.constant dense<0.000000e+00> : vector<2x8xf32>
    %129 = vector.multi_reduction <add>, %128, %cst_56 [2] : vector<2x8x8xf32> to vector<2x8xf32>
    %130 = vector.shape_cast %129 : vector<2x8xf32> to vector<2x8x1xf32>
    %131 = vector.broadcast %130 : vector<2x8x1xf32> to vector<2x8x8xf32>
    %132 = arith.divf %128, %131 : vector<2x8x8xf32>
    %133 = vector.shape_cast %115 : vector<1x32xf32> to vector<1x1x32xf32>
    %134 = vector.broadcast %133 : vector<1x1x32xf32> to vector<2x8x32xf32>
    %135 = arith.mulf %67, %134 : vector<2x8x32xf32>
    "tpu.trace_start"() <{level = 10 : i32, message = "bqk,bkc->bqc"}> : () -> ()
    %cst_57 = arith.constant dense<0.000000e+00> : vector<2x8x32xf32>
    %136 = tpu.matmul %132, %135, %cst_57 {dimension_numbers = #tpu.dot_dimension_numbers<[2], [1], [1], [2], [0, 0, 0, 1, 1, 2], [0], [0]>} : vector<2x8x8xf32>, vector<2x8x32xf32>, vector<2x8x32xf32> -> vector<2x8x32xf32>
    "tpu.trace_stop"() : () -> ()
    %137 = arith.addf %114, %136 : vector<2x8x32xf32>
    %c11 = arith.constant 11 : index
    %c0_58 = arith.constant 0 : index
    %138 = vector.load %arg3[%c11, %c0_58] : memref<16x128xf32, #tpu.memory_space<vmem>>, vector<1x32xf32>
    %139 = vector.shape_cast %138 : vector<1x32xf32> to vector<1x1x32xf32>
    %140 = vector.broadcast %139 : vector<1x1x32xf32> to vector<2x8x32xf32>
    %141 = arith.mulf %65, %140 : vector<2x8x32xf32>
    "tpu.trace_start"() <{level = 10 : i32, message = "bqc,bkc->bqk"}> : () -> ()
    %cst_59 = arith.constant dense<0.000000e+00> : vector<2x8x8xf32>
    %142 = tpu.matmul %141, %66, %cst_59 {dimension_numbers = #tpu.dot_dimension_numbers<[2], [2], [1], [1], [0, 0, 0, 1, 1, 1], [0], [0]>} : vector<2x8x32xf32>, vector<2x8x32xf32>, vector<2x8x8xf32> -> vector<2x8x8xf32>
    "tpu.trace_stop"() : () -> ()
    %cst_60 = arith.constant 0.353553385 : f32
    %143 = vector.broadcast %cst_60 : f32 to vector<2x8x8xf32>
    %144 = arith.mulf %142, %143 : vector<2x8x8xf32>
    %145 = vector.broadcast %43 : vector<2x1x8xf32> to vector<2x8x8xf32>
    %146 = arith.addf %144, %145 : vector<2x8x8xf32>
    %cst_61 = arith.constant dense<0xFF800000> : vector<2x8xf32>
    %147 = vector.multi_reduction <maximumf>, %146, %cst_61 [2] : vector<2x8x8xf32> to vector<2x8xf32>
    %148 = vector.shape_cast %147 : vector<2x8xf32> to vector<2x8x1xf32>
    %149 = vector.broadcast %148 : vector<2x8x1xf32> to vector<2x8x8xf32>
    %150 = arith.subf %146, %149 : vector<2x8x8xf32>
    %151 = math.exp %150 : vector<2x8x8xf32>
    %cst_62 = arith.constant dense<0.000000e+00> : vector<2x8xf32>
    %152 = vector.multi_reduction <add>, %151, %cst_62 [2] : vector<2x8x8xf32> to vector<2x8xf32>
    %153 = vector.shape_cast %152 : vector<2x8xf32> to vector<2x8x1xf32>
    %154 = vector.broadcast %153 : vector<2x8x1xf32> to vector<2x8x8xf32>
    %155 = arith.divf %151, %154 : vector<2x8x8xf32>
    %156 = vector.shape_cast %138 : vector<1x32xf32> to vector<1x1x32xf32>
    %157 = vector.broadcast %156 : vector<1x1x32xf32> to vector<2x8x32xf32>
    %158 = arith.mulf %67, %157 : vector<2x8x32xf32>
    "tpu.trace_start"() <{level = 10 : i32, message = "bqk,bkc->bqc"}> : () -> ()
    %cst_63 = arith.constant dense<0.000000e+00> : vector<2x8x32xf32>
    %159 = tpu.matmul %155, %158, %cst_63 {dimension_numbers = #tpu.dot_dimension_numbers<[2], [1], [1], [2], [0, 0, 0, 1, 1, 2], [0], [0]>} : vector<2x8x8xf32>, vector<2x8x32xf32>, vector<2x8x32xf32> -> vector<2x8x32xf32>
    "tpu.trace_stop"() : () -> ()
    %160 = arith.addf %137, %159 : vector<2x8x32xf32>
    %161 = vector.shape_cast %160 : vector<2x8x32xf32> to vector<16x32xf32>
    %c0_64 = arith.constant 0 : index
    %c0_65 = arith.constant 0 : index
    %c0_66 = arith.constant 0 : index
    %162 = vector.load %arg6[%c0_64, %c0_65, %c0_66] : memref<2x32x32xf32, #tpu.memory_space<vmem>>, vector<1x32x32xf32>
    %163 = vector.shape_cast %162 : vector<1x32x32xf32> to vector<32x32xf32>
    %cst_67 = arith.constant dense<0.000000e+00> : vector<16x32xf32>
    %164 = tpu.matmul %161, %163, %cst_67 {dimension_numbers = #tpu.dot_dimension_numbers<[1], [0], [0], [1], [0, 0, 1, 1], [], []>} : vector<16x32xf32>, vector<32x32xf32>, vector<16x32xf32> -> vector<16x32xf32>
    %c0_68 = arith.constant 0 : index
    %c3 = arith.constant 3 : index
    %c0_69 = arith.constant 0 : index
    %165 = vector.load %arg4[%c0_68, %c3, %c0_69] : memref<2x10x128xf32, #tpu.memory_space<vmem>>, vector<1x1x32xf32>
    %166 = vector.shape_cast %165 : vector<1x1x32xf32> to vector<1x32xf32>
    %167 = vector.broadcast %166 : vector<1x32xf32> to vector<16x32xf32>
    %168 = arith.addf %164, %167 : vector<16x32xf32>
    %169 = arith.addf %37, %168 : vector<16x32xf32>
    %c0_70 = arith.constant 0 : index
    %c6 = arith.constant 6 : index
    %c0_71 = arith.constant 0 : index
    %170 = vector.load %arg4[%c0_70, %c6, %c0_71] : memref<2x10x128xf32, #tpu.memory_space<vmem>>, vector<1x1x32xf32>
    %171 = vector.shape_cast %170 : vector<1x1x32xf32> to vector<1x32xf32>
    %c0_72 = arith.constant 0 : index
    %c7 = arith.constant 7 : index
    %c0_73 = arith.constant 0 : index
    %172 = vector.load %arg4[%c0_72, %c7, %c0_73] : memref<2x10x128xf32, #tpu.memory_space<vmem>>, vector<1x1x32xf32>
    %173 = vector.shape_cast %172 : vector<1x1x32xf32> to vector<1x32xf32>
    %cst_74 = arith.constant dense<0.000000e+00> : vector<16xf32>
    %174 = vector.multi_reduction <add>, %169, %cst_74 [1] : vector<16x32xf32> to vector<16xf32>
    %175 = vector.shape_cast %174 : vector<16xf32> to vector<16x1xf32>
    %cst_75 = arith.constant 3.200000e+01 : f32
    %176 = vector.broadcast %cst_75 : f32 to vector<16x1xf32>
    %177 = arith.divf %175, %176 : vector<16x1xf32>
    %178 = vector.broadcast %177 : vector<16x1xf32> to vector<16x32xf32>
    %179 = arith.subf %169, %178 : vector<16x32xf32>
    %180 = arith.mulf %179, %179 : vector<16x32xf32>
    %cst_76 = arith.constant dense<0.000000e+00> : vector<16xf32>
    %181 = vector.multi_reduction <add>, %180, %cst_76 [1] : vector<16x32xf32> to vector<16xf32>
    %182 = vector.shape_cast %181 : vector<16xf32> to vector<16x1xf32>
    %cst_77 = arith.constant 3.200000e+01 : f32
    %183 = vector.broadcast %cst_77 : f32 to vector<16x1xf32>
    %184 = arith.divf %182, %183 : vector<16x1xf32>
    %185 = vector.broadcast %177 : vector<16x1xf32> to vector<16x32xf32>
    %186 = arith.subf %169, %185 : vector<16x32xf32>
    %cst_78 = arith.constant 9.99999996E-13 : f32
    %187 = vector.broadcast %cst_78 : f32 to vector<16x1xf32>
    %188 = arith.addf %184, %187 : vector<16x1xf32>
    %189 = math.rsqrt %188 : vector<16x1xf32>
    %190 = vector.broadcast %189 : vector<16x1xf32> to vector<16x32xf32>
    %191 = arith.mulf %186, %190 : vector<16x32xf32>
    %192 = vector.broadcast %171 : vector<1x32xf32> to vector<16x32xf32>
    %193 = arith.mulf %191, %192 : vector<16x32xf32>
    %194 = vector.broadcast %173 : vector<1x32xf32> to vector<16x32xf32>
    %195 = arith.addf %193, %194 : vector<16x32xf32>
    %c0_79 = arith.constant 0 : index
    %c0_80 = arith.constant 0 : index
    %c0_81 = arith.constant 0 : index
    %196 = vector.load %arg7[%c0_79, %c0_80, %c0_81] : memref<2x32x64xf32, #tpu.memory_space<vmem>>, vector<1x32x64xf32>
    %197 = vector.shape_cast %196 : vector<1x32x64xf32> to vector<32x64xf32>
    %cst_82 = arith.constant dense<0.000000e+00> : vector<16x64xf32>
    %198 = tpu.matmul %195, %197, %cst_82 {dimension_numbers = #tpu.dot_dimension_numbers<[1], [0], [0], [1], [0, 0, 1, 1], [], []>} : vector<16x32xf32>, vector<32x64xf32>, vector<16x64xf32> -> vector<16x64xf32>
    %c0_83 = arith.constant 0 : index
    %c4 = arith.constant 4 : index
    %c0_84 = arith.constant 0 : index
    %199 = vector.load %arg4[%c0_83, %c4, %c0_84] : memref<2x10x128xf32, #tpu.memory_space<vmem>>, vector<1x1x64xf32>
    %200 = vector.shape_cast %199 : vector<1x1x64xf32> to vector<1x64xf32>
    %201 = vector.broadcast %200 : vector<1x64xf32> to vector<16x64xf32>
    %202 = arith.addf %198, %201 : vector<16x64xf32>
    %cst_85 = arith.constant 5.000000e-01 : f32
    %203 = vector.broadcast %cst_85 : f32 to vector<16x64xf32>
    %204 = arith.mulf %203, %202 : vector<16x64xf32>
    %cst_86 = arith.constant 4.471500e-02 : f32
    %205 = vector.broadcast %cst_86 : f32 to vector<16x64xf32>
    %206 = arith.mulf %205, %202 : vector<16x64xf32>
    %207 = arith.mulf %206, %202 : vector<16x64xf32>
    %208 = arith.mulf %207, %202 : vector<16x64xf32>
    %209 = arith.addf %202, %208 : vector<16x64xf32>
    %cst_87 = arith.constant 0.797884583 : f32
    %210 = vector.broadcast %cst_87 : f32 to vector<16x64xf32>
    %211 = arith.mulf %210, %209 : vector<16x64xf32>
    %212 = math.tanh %211 : vector<16x64xf32>
    %cst_88 = arith.constant 1.000000e+00 : f32
    %213 = vector.broadcast %cst_88 : f32 to vector<16x64xf32>
    %214 = arith.addf %213, %212 : vector<16x64xf32>
    %215 = arith.mulf %204, %214 : vector<16x64xf32>
    %c0_89 = arith.constant 0 : index
    %c0_90 = arith.constant 0 : index
    %c0_91 = arith.constant 0 : index
    %216 = vector.load %arg8[%c0_89, %c0_90, %c0_91] : memref<2x64x32xf32, #tpu.memory_space<vmem>>, vector<1x64x32xf32>
    %217 = vector.shape_cast %216 : vector<1x64x32xf32> to vector<64x32xf32>
    %cst_92 = arith.constant dense<0.000000e+00> : vector<16x32xf32>
    %218 = tpu.matmul %215, %217, %cst_92 {dimension_numbers = #tpu.dot_dimension_numbers<[1], [0], [0], [1], [0, 0, 1, 1], [], []>} : vector<16x64xf32>, vector<64x32xf32>, vector<16x32xf32> -> vector<16x32xf32>
    %c0_93 = arith.constant 0 : index
    %c5 = arith.constant 5 : index
    %c0_94 = arith.constant 0 : index
    %219 = vector.load %arg4[%c0_93, %c5, %c0_94] : memref<2x10x128xf32, #tpu.memory_space<vmem>>, vector<1x1x32xf32>
    %220 = vector.shape_cast %219 : vector<1x1x32xf32> to vector<1x32xf32>
    %221 = vector.broadcast %220 : vector<1x32xf32> to vector<16x32xf32>
    %222 = arith.addf %218, %221 : vector<16x32xf32>
    %223 = arith.addf %195, %222 : vector<16x32xf32>
    %c0_95 = arith.constant 0 : index
    %c8_96 = arith.constant 8 : index
    %c0_97 = arith.constant 0 : index
    %224 = vector.load %arg4[%c0_95, %c8_96, %c0_97] : memref<2x10x128xf32, #tpu.memory_space<vmem>>, vector<1x1x32xf32>
    %225 = vector.shape_cast %224 : vector<1x1x32xf32> to vector<1x32xf32>
    %c0_98 = arith.constant 0 : index
    %c9_99 = arith.constant 9 : index
    %c0_100 = arith.constant 0 : index
    %226 = vector.load %arg4[%c0_98, %c9_99, %c0_100] : memref<2x10x128xf32, #tpu.memory_space<vmem>>, vector<1x1x32xf32>
    %227 = vector.shape_cast %226 : vector<1x1x32xf32> to vector<1x32xf32>
    %cst_101 = arith.constant dense<0.000000e+00> : vector<16xf32>
    %228 = vector.multi_reduction <add>, %223, %cst_101 [1] : vector<16x32xf32> to vector<16xf32>
    %229 = vector.shape_cast %228 : vector<16xf32> to vector<16x1xf32>
    %cst_102 = arith.constant 3.200000e+01 : f32
    %230 = vector.broadcast %cst_102 : f32 to vector<16x1xf32>
    %231 = arith.divf %229, %230 : vector<16x1xf32>
    %232 = vector.broadcast %231 : vector<16x1xf32> to vector<16x32xf32>
    %233 = arith.subf %223, %232 : vector<16x32xf32>
    %234 = arith.mulf %233, %233 : vector<16x32xf32>
    %cst_103 = arith.constant dense<0.000000e+00> : vector<16xf32>
    %235 = vector.multi_reduction <add>, %234, %cst_103 [1] : vector<16x32xf32> to vector<16xf32>
    %236 = vector.shape_cast %235 : vector<16xf32> to vector<16x1xf32>
    %cst_104 = arith.constant 3.200000e+01 : f32
    %237 = vector.broadcast %cst_104 : f32 to vector<16x1xf32>
    %238 = arith.divf %236, %237 : vector<16x1xf32>
    %239 = vector.broadcast %231 : vector<16x1xf32> to vector<16x32xf32>
    %240 = arith.subf %223, %239 : vector<16x32xf32>
    %cst_105 = arith.constant 9.99999996E-13 : f32
    %241 = vector.broadcast %cst_105 : f32 to vector<16x1xf32>
    %242 = arith.addf %238, %241 : vector<16x1xf32>
    %243 = math.rsqrt %242 : vector<16x1xf32>
    %244 = vector.broadcast %243 : vector<16x1xf32> to vector<16x32xf32>
    %245 = arith.mulf %240, %244 : vector<16x32xf32>
    %246 = vector.broadcast %225 : vector<1x32xf32> to vector<16x32xf32>
    %247 = arith.mulf %245, %246 : vector<16x32xf32>
    %248 = vector.broadcast %227 : vector<1x32xf32> to vector<16x32xf32>
    %249 = arith.addf %247, %248 : vector<16x32xf32>
    %c1_106 = arith.constant 1 : index
    %c0_107 = arith.constant 0 : index
    %c0_108 = arith.constant 0 : index
    %c0_109 = arith.constant 0 : index
    %250 = vector.load %arg5[%c1_106, %c0_107, %c0_108, %c0_109] : memref<2x3x32x32xf32, #tpu.memory_space<vmem>>, vector<1x1x32x32xf32>
    %251 = vector.shape_cast %250 : vector<1x1x32x32xf32> to vector<32x32xf32>
    %cst_110 = arith.constant dense<0.000000e+00> : vector<16x32xf32>
    %252 = tpu.matmul %249, %251, %cst_110 {dimension_numbers = #tpu.dot_dimension_numbers<[1], [0], [0], [1], [0, 0, 1, 1], [], []>} : vector<16x32xf32>, vector<32x32xf32>, vector<16x32xf32> -> vector<16x32xf32>
    %c1_111 = arith.constant 1 : index
    %c0_112 = arith.constant 0 : index
    %c0_113 = arith.constant 0 : index
    %253 = vector.load %arg4[%c1_111, %c0_112, %c0_113] : memref<2x10x128xf32, #tpu.memory_space<vmem>>, vector<1x1x32xf32>
    %254 = vector.shape_cast %253 : vector<1x1x32xf32> to vector<1x32xf32>
    %255 = vector.broadcast %254 : vector<1x32xf32> to vector<16x32xf32>
    %256 = arith.addf %252, %255 : vector<16x32xf32>
    %c1_114 = arith.constant 1 : index
    %c1_115 = arith.constant 1 : index
    %c0_116 = arith.constant 0 : index
    %c0_117 = arith.constant 0 : index
    %257 = vector.load %arg5[%c1_114, %c1_115, %c0_116, %c0_117] : memref<2x3x32x32xf32, #tpu.memory_space<vmem>>, vector<1x1x32x32xf32>
    %258 = vector.shape_cast %257 : vector<1x1x32x32xf32> to vector<32x32xf32>
    %cst_118 = arith.constant dense<0.000000e+00> : vector<16x32xf32>
    %259 = tpu.matmul %249, %258, %cst_118 {dimension_numbers = #tpu.dot_dimension_numbers<[1], [0], [0], [1], [0, 0, 1, 1], [], []>} : vector<16x32xf32>, vector<32x32xf32>, vector<16x32xf32> -> vector<16x32xf32>
    %c1_119 = arith.constant 1 : index
    %c1_120 = arith.constant 1 : index
    %c0_121 = arith.constant 0 : index
    %260 = vector.load %arg4[%c1_119, %c1_120, %c0_121] : memref<2x10x128xf32, #tpu.memory_space<vmem>>, vector<1x1x32xf32>
    %261 = vector.shape_cast %260 : vector<1x1x32xf32> to vector<1x32xf32>
    %262 = vector.broadcast %261 : vector<1x32xf32> to vector<16x32xf32>
    %263 = arith.addf %259, %262 : vector<16x32xf32>
    %c1_122 = arith.constant 1 : index
    %c2_123 = arith.constant 2 : index
    %c0_124 = arith.constant 0 : index
    %c0_125 = arith.constant 0 : index
    %264 = vector.load %arg5[%c1_122, %c2_123, %c0_124, %c0_125] : memref<2x3x32x32xf32, #tpu.memory_space<vmem>>, vector<1x1x32x32xf32>
    %265 = vector.shape_cast %264 : vector<1x1x32x32xf32> to vector<32x32xf32>
    %cst_126 = arith.constant dense<0.000000e+00> : vector<16x32xf32>
    %266 = tpu.matmul %249, %265, %cst_126 {dimension_numbers = #tpu.dot_dimension_numbers<[1], [0], [0], [1], [0, 0, 1, 1], [], []>} : vector<16x32xf32>, vector<32x32xf32>, vector<16x32xf32> -> vector<16x32xf32>
    %c1_127 = arith.constant 1 : index
    %c2_128 = arith.constant 2 : index
    %c0_129 = arith.constant 0 : index
    %267 = vector.load %arg4[%c1_127, %c2_128, %c0_129] : memref<2x10x128xf32, #tpu.memory_space<vmem>>, vector<1x1x32xf32>
    %268 = vector.shape_cast %267 : vector<1x1x32xf32> to vector<1x32xf32>
    %269 = vector.broadcast %268 : vector<1x32xf32> to vector<16x32xf32>
    %270 = arith.addf %266, %269 : vector<16x32xf32>
    %271 = vector.shape_cast %256 : vector<16x32xf32> to vector<2x8x32xf32>
    %272 = vector.shape_cast %263 : vector<16x32xf32> to vector<2x8x32xf32>
    %273 = vector.shape_cast %270 : vector<16x32xf32> to vector<2x8x32xf32>
    %cst_130 = arith.constant 0.000000e+00 : f32
    %274 = vector.broadcast %cst_130 : f32 to vector<2x8x32xf32>
    %c8_131 = arith.constant 8 : index
    %c0_132 = arith.constant 0 : index
    %275 = vector.load %arg3[%c8_131, %c0_132] : memref<16x128xf32, #tpu.memory_space<vmem>>, vector<1x32xf32>
    %276 = vector.shape_cast %275 : vector<1x32xf32> to vector<1x1x32xf32>
    %277 = vector.broadcast %276 : vector<1x1x32xf32> to vector<2x8x32xf32>
    %278 = arith.mulf %271, %277 : vector<2x8x32xf32>
    "tpu.trace_start"() <{level = 10 : i32, message = "bqc,bkc->bqk"}> : () -> ()
    %cst_133 = arith.constant dense<0.000000e+00> : vector<2x8x8xf32>
    %279 = tpu.matmul %278, %272, %cst_133 {dimension_numbers = #tpu.dot_dimension_numbers<[2], [2], [1], [1], [0, 0, 0, 1, 1, 1], [0], [0]>} : vector<2x8x32xf32>, vector<2x8x32xf32>, vector<2x8x8xf32> -> vector<2x8x8xf32>
    "tpu.trace_stop"() : () -> ()
    %cst_134 = arith.constant 0.353553385 : f32
    %280 = vector.broadcast %cst_134 : f32 to vector<2x8x8xf32>
    %281 = arith.mulf %279, %280 : vector<2x8x8xf32>
    %282 = vector.broadcast %43 : vector<2x1x8xf32> to vector<2x8x8xf32>
    %283 = arith.addf %281, %282 : vector<2x8x8xf32>
    %cst_135 = arith.constant dense<0xFF800000> : vector<2x8xf32>
    %284 = vector.multi_reduction <maximumf>, %283, %cst_135 [2] : vector<2x8x8xf32> to vector<2x8xf32>
    %285 = vector.shape_cast %284 : vector<2x8xf32> to vector<2x8x1xf32>
    %286 = vector.broadcast %285 : vector<2x8x1xf32> to vector<2x8x8xf32>
    %287 = arith.subf %283, %286 : vector<2x8x8xf32>
    %288 = math.exp %287 : vector<2x8x8xf32>
    %cst_136 = arith.constant dense<0.000000e+00> : vector<2x8xf32>
    %289 = vector.multi_reduction <add>, %288, %cst_136 [2] : vector<2x8x8xf32> to vector<2x8xf32>
    %290 = vector.shape_cast %289 : vector<2x8xf32> to vector<2x8x1xf32>
    %291 = vector.broadcast %290 : vector<2x8x1xf32> to vector<2x8x8xf32>
    %292 = arith.divf %288, %291 : vector<2x8x8xf32>
    %293 = vector.shape_cast %275 : vector<1x32xf32> to vector<1x1x32xf32>
    %294 = vector.broadcast %293 : vector<1x1x32xf32> to vector<2x8x32xf32>
    %295 = arith.mulf %273, %294 : vector<2x8x32xf32>
    "tpu.trace_start"() <{level = 10 : i32, message = "bqk,bkc->bqc"}> : () -> ()
    %cst_137 = arith.constant dense<0.000000e+00> : vector<2x8x32xf32>
    %296 = tpu.matmul %292, %295, %cst_137 {dimension_numbers = #tpu.dot_dimension_numbers<[2], [1], [1], [2], [0, 0, 0, 1, 1, 2], [0], [0]>} : vector<2x8x8xf32>, vector<2x8x32xf32>, vector<2x8x32xf32> -> vector<2x8x32xf32>
    "tpu.trace_stop"() : () -> ()
    %297 = arith.addf %274, %296 : vector<2x8x32xf32>
    %c9_138 = arith.constant 9 : index
    %c0_139 = arith.constant 0 : index
    %298 = vector.load %arg3[%c9_138, %c0_139] : memref<16x128xf32, #tpu.memory_space<vmem>>, vector<1x32xf32>
    %299 = vector.shape_cast %298 : vector<1x32xf32> to vector<1x1x32xf32>
    %300 = vector.broadcast %299 : vector<1x1x32xf32> to vector<2x8x32xf32>
    %301 = arith.mulf %271, %300 : vector<2x8x32xf32>
    "tpu.trace_start"() <{level = 10 : i32, message = "bqc,bkc->bqk"}> : () -> ()
    %cst_140 = arith.constant dense<0.000000e+00> : vector<2x8x8xf32>
    %302 = tpu.matmul %301, %272, %cst_140 {dimension_numbers = #tpu.dot_dimension_numbers<[2], [2], [1], [1], [0, 0, 0, 1, 1, 1], [0], [0]>} : vector<2x8x32xf32>, vector<2x8x32xf32>, vector<2x8x8xf32> -> vector<2x8x8xf32>
    "tpu.trace_stop"() : () -> ()
    %cst_141 = arith.constant 0.353553385 : f32
    %303 = vector.broadcast %cst_141 : f32 to vector<2x8x8xf32>
    %304 = arith.mulf %302, %303 : vector<2x8x8xf32>
    %305 = vector.broadcast %43 : vector<2x1x8xf32> to vector<2x8x8xf32>
    %306 = arith.addf %304, %305 : vector<2x8x8xf32>
    %cst_142 = arith.constant dense<0xFF800000> : vector<2x8xf32>
    %307 = vector.multi_reduction <maximumf>, %306, %cst_142 [2] : vector<2x8x8xf32> to vector<2x8xf32>
    %308 = vector.shape_cast %307 : vector<2x8xf32> to vector<2x8x1xf32>
    %309 = vector.broadcast %308 : vector<2x8x1xf32> to vector<2x8x8xf32>
    %310 = arith.subf %306, %309 : vector<2x8x8xf32>
    %311 = math.exp %310 : vector<2x8x8xf32>
    %cst_143 = arith.constant dense<0.000000e+00> : vector<2x8xf32>
    %312 = vector.multi_reduction <add>, %311, %cst_143 [2] : vector<2x8x8xf32> to vector<2x8xf32>
    %313 = vector.shape_cast %312 : vector<2x8xf32> to vector<2x8x1xf32>
    %314 = vector.broadcast %313 : vector<2x8x1xf32> to vector<2x8x8xf32>
    %315 = arith.divf %311, %314 : vector<2x8x8xf32>
    %316 = vector.shape_cast %298 : vector<1x32xf32> to vector<1x1x32xf32>
    %317 = vector.broadcast %316 : vector<1x1x32xf32> to vector<2x8x32xf32>
    %318 = arith.mulf %273, %317 : vector<2x8x32xf32>
    "tpu.trace_start"() <{level = 10 : i32, message = "bqk,bkc->bqc"}> : () -> ()
    %cst_144 = arith.constant dense<0.000000e+00> : vector<2x8x32xf32>
    %319 = tpu.matmul %315, %318, %cst_144 {dimension_numbers = #tpu.dot_dimension_numbers<[2], [1], [1], [2], [0, 0, 0, 1, 1, 2], [0], [0]>} : vector<2x8x8xf32>, vector<2x8x32xf32>, vector<2x8x32xf32> -> vector<2x8x32xf32>
    "tpu.trace_stop"() : () -> ()
    %320 = arith.addf %297, %319 : vector<2x8x32xf32>
    %c10_145 = arith.constant 10 : index
    %c0_146 = arith.constant 0 : index
    %321 = vector.load %arg3[%c10_145, %c0_146] : memref<16x128xf32, #tpu.memory_space<vmem>>, vector<1x32xf32>
    %322 = vector.shape_cast %321 : vector<1x32xf32> to vector<1x1x32xf32>
    %323 = vector.broadcast %322 : vector<1x1x32xf32> to vector<2x8x32xf32>
    %324 = arith.mulf %271, %323 : vector<2x8x32xf32>
    "tpu.trace_start"() <{level = 10 : i32, message = "bqc,bkc->bqk"}> : () -> ()
    %cst_147 = arith.constant dense<0.000000e+00> : vector<2x8x8xf32>
    %325 = tpu.matmul %324, %272, %cst_147 {dimension_numbers = #tpu.dot_dimension_numbers<[2], [2], [1], [1], [0, 0, 0, 1, 1, 1], [0], [0]>} : vector<2x8x32xf32>, vector<2x8x32xf32>, vector<2x8x8xf32> -> vector<2x8x8xf32>
    "tpu.trace_stop"() : () -> ()
    %cst_148 = arith.constant 0.353553385 : f32
    %326 = vector.broadcast %cst_148 : f32 to vector<2x8x8xf32>
    %327 = arith.mulf %325, %326 : vector<2x8x8xf32>
    %328 = vector.broadcast %43 : vector<2x1x8xf32> to vector<2x8x8xf32>
    %329 = arith.addf %327, %328 : vector<2x8x8xf32>
    %cst_149 = arith.constant dense<0xFF800000> : vector<2x8xf32>
    %330 = vector.multi_reduction <maximumf>, %329, %cst_149 [2] : vector<2x8x8xf32> to vector<2x8xf32>
    %331 = vector.shape_cast %330 : vector<2x8xf32> to vector<2x8x1xf32>
    %332 = vector.broadcast %331 : vector<2x8x1xf32> to vector<2x8x8xf32>
    %333 = arith.subf %329, %332 : vector<2x8x8xf32>
    %334 = math.exp %333 : vector<2x8x8xf32>
    %cst_150 = arith.constant dense<0.000000e+00> : vector<2x8xf32>
    %335 = vector.multi_reduction <add>, %334, %cst_150 [2] : vector<2x8x8xf32> to vector<2x8xf32>
    %336 = vector.shape_cast %335 : vector<2x8xf32> to vector<2x8x1xf32>
    %337 = vector.broadcast %336 : vector<2x8x1xf32> to vector<2x8x8xf32>
    %338 = arith.divf %334, %337 : vector<2x8x8xf32>
    %339 = vector.shape_cast %321 : vector<1x32xf32> to vector<1x1x32xf32>
    %340 = vector.broadcast %339 : vector<1x1x32xf32> to vector<2x8x32xf32>
    %341 = arith.mulf %273, %340 : vector<2x8x32xf32>
    "tpu.trace_start"() <{level = 10 : i32, message = "bqk,bkc->bqc"}> : () -> ()
    %cst_151 = arith.constant dense<0.000000e+00> : vector<2x8x32xf32>
    %342 = tpu.matmul %338, %341, %cst_151 {dimension_numbers = #tpu.dot_dimension_numbers<[2], [1], [1], [2], [0, 0, 0, 1, 1, 2], [0], [0]>} : vector<2x8x8xf32>, vector<2x8x32xf32>, vector<2x8x32xf32> -> vector<2x8x32xf32>
    "tpu.trace_stop"() : () -> ()
    %343 = arith.addf %320, %342 : vector<2x8x32xf32>
    %c11_152 = arith.constant 11 : index
    %c0_153 = arith.constant 0 : index
    %344 = vector.load %arg3[%c11_152, %c0_153] : memref<16x128xf32, #tpu.memory_space<vmem>>, vector<1x32xf32>
    %345 = vector.shape_cast %344 : vector<1x32xf32> to vector<1x1x32xf32>
    %346 = vector.broadcast %345 : vector<1x1x32xf32> to vector<2x8x32xf32>
    %347 = arith.mulf %271, %346 : vector<2x8x32xf32>
    "tpu.trace_start"() <{level = 10 : i32, message = "bqc,bkc->bqk"}> : () -> ()
    %cst_154 = arith.constant dense<0.000000e+00> : vector<2x8x8xf32>
    %348 = tpu.matmul %347, %272, %cst_154 {dimension_numbers = #tpu.dot_dimension_numbers<[2], [2], [1], [1], [0, 0, 0, 1, 1, 1], [0], [0]>} : vector<2x8x32xf32>, vector<2x8x32xf32>, vector<2x8x8xf32> -> vector<2x8x8xf32>
    "tpu.trace_stop"() : () -> ()
    %cst_155 = arith.constant 0.353553385 : f32
    %349 = vector.broadcast %cst_155 : f32 to vector<2x8x8xf32>
    %350 = arith.mulf %348, %349 : vector<2x8x8xf32>
    %351 = vector.broadcast %43 : vector<2x1x8xf32> to vector<2x8x8xf32>
    %352 = arith.addf %350, %351 : vector<2x8x8xf32>
    %cst_156 = arith.constant dense<0xFF800000> : vector<2x8xf32>
    %353 = vector.multi_reduction <maximumf>, %352, %cst_156 [2] : vector<2x8x8xf32> to vector<2x8xf32>
    %354 = vector.shape_cast %353 : vector<2x8xf32> to vector<2x8x1xf32>
    %355 = vector.broadcast %354 : vector<2x8x1xf32> to vector<2x8x8xf32>
    %356 = arith.subf %352, %355 : vector<2x8x8xf32>
    %357 = math.exp %356 : vector<2x8x8xf32>
    %cst_157 = arith.constant dense<0.000000e+00> : vector<2x8xf32>
    %358 = vector.multi_reduction <add>, %357, %cst_157 [2] : vector<2x8x8xf32> to vector<2x8xf32>
    %359 = vector.shape_cast %358 : vector<2x8xf32> to vector<2x8x1xf32>
    %360 = vector.broadcast %359 : vector<2x8x1xf32> to vector<2x8x8xf32>
    %361 = arith.divf %357, %360 : vector<2x8x8xf32>
    %362 = vector.shape_cast %344 : vector<1x32xf32> to vector<1x1x32xf32>
    %363 = vector.broadcast %362 : vector<1x1x32xf32> to vector<2x8x32xf32>
    %364 = arith.mulf %273, %363 : vector<2x8x32xf32>
    "tpu.trace_start"() <{level = 10 : i32, message = "bqk,bkc->bqc"}> : () -> ()
    %cst_158 = arith.constant dense<0.000000e+00> : vector<2x8x32xf32>
    %365 = tpu.matmul %361, %364, %cst_158 {dimension_numbers = #tpu.dot_dimension_numbers<[2], [1], [1], [2], [0, 0, 0, 1, 1, 2], [0], [0]>} : vector<2x8x8xf32>, vector<2x8x32xf32>, vector<2x8x32xf32> -> vector<2x8x32xf32>
    "tpu.trace_stop"() : () -> ()
    %366 = arith.addf %343, %365 : vector<2x8x32xf32>
    %367 = vector.shape_cast %366 : vector<2x8x32xf32> to vector<16x32xf32>
    %c1_159 = arith.constant 1 : index
    %c0_160 = arith.constant 0 : index
    %c0_161 = arith.constant 0 : index
    %368 = vector.load %arg6[%c1_159, %c0_160, %c0_161] : memref<2x32x32xf32, #tpu.memory_space<vmem>>, vector<1x32x32xf32>
    %369 = vector.shape_cast %368 : vector<1x32x32xf32> to vector<32x32xf32>
    %cst_162 = arith.constant dense<0.000000e+00> : vector<16x32xf32>
    %370 = tpu.matmul %367, %369, %cst_162 {dimension_numbers = #tpu.dot_dimension_numbers<[1], [0], [0], [1], [0, 0, 1, 1], [], []>} : vector<16x32xf32>, vector<32x32xf32>, vector<16x32xf32> -> vector<16x32xf32>
    %c1_163 = arith.constant 1 : index
    %c3_164 = arith.constant 3 : index
    %c0_165 = arith.constant 0 : index
    %371 = vector.load %arg4[%c1_163, %c3_164, %c0_165] : memref<2x10x128xf32, #tpu.memory_space<vmem>>, vector<1x1x32xf32>
    %372 = vector.shape_cast %371 : vector<1x1x32xf32> to vector<1x32xf32>
    %373 = vector.broadcast %372 : vector<1x32xf32> to vector<16x32xf32>
    %374 = arith.addf %370, %373 : vector<16x32xf32>
    %375 = arith.addf %249, %374 : vector<16x32xf32>
    %c1_166 = arith.constant 1 : index
    %c6_167 = arith.constant 6 : index
    %c0_168 = arith.constant 0 : index
    %376 = vector.load %arg4[%c1_166, %c6_167, %c0_168] : memref<2x10x128xf32, #tpu.memory_space<vmem>>, vector<1x1x32xf32>
    %377 = vector.shape_cast %376 : vector<1x1x32xf32> to vector<1x32xf32>
    %c1_169 = arith.constant 1 : index
    %c7_170 = arith.constant 7 : index
    %c0_171 = arith.constant 0 : index
    %378 = vector.load %arg4[%c1_169, %c7_170, %c0_171] : memref<2x10x128xf32, #tpu.memory_space<vmem>>, vector<1x1x32xf32>
    %379 = vector.shape_cast %378 : vector<1x1x32xf32> to vector<1x32xf32>
    %cst_172 = arith.constant dense<0.000000e+00> : vector<16xf32>
    %380 = vector.multi_reduction <add>, %375, %cst_172 [1] : vector<16x32xf32> to vector<16xf32>
    %381 = vector.shape_cast %380 : vector<16xf32> to vector<16x1xf32>
    %cst_173 = arith.constant 3.200000e+01 : f32
    %382 = vector.broadcast %cst_173 : f32 to vector<16x1xf32>
    %383 = arith.divf %381, %382 : vector<16x1xf32>
    %384 = vector.broadcast %383 : vector<16x1xf32> to vector<16x32xf32>
    %385 = arith.subf %375, %384 : vector<16x32xf32>
    %386 = arith.mulf %385, %385 : vector<16x32xf32>
    %cst_174 = arith.constant dense<0.000000e+00> : vector<16xf32>
    %387 = vector.multi_reduction <add>, %386, %cst_174 [1] : vector<16x32xf32> to vector<16xf32>
    %388 = vector.shape_cast %387 : vector<16xf32> to vector<16x1xf32>
    %cst_175 = arith.constant 3.200000e+01 : f32
    %389 = vector.broadcast %cst_175 : f32 to vector<16x1xf32>
    %390 = arith.divf %388, %389 : vector<16x1xf32>
    %391 = vector.broadcast %383 : vector<16x1xf32> to vector<16x32xf32>
    %392 = arith.subf %375, %391 : vector<16x32xf32>
    %cst_176 = arith.constant 9.99999996E-13 : f32
    %393 = vector.broadcast %cst_176 : f32 to vector<16x1xf32>
    %394 = arith.addf %390, %393 : vector<16x1xf32>
    %395 = math.rsqrt %394 : vector<16x1xf32>
    %396 = vector.broadcast %395 : vector<16x1xf32> to vector<16x32xf32>
    %397 = arith.mulf %392, %396 : vector<16x32xf32>
    %398 = vector.broadcast %377 : vector<1x32xf32> to vector<16x32xf32>
    %399 = arith.mulf %397, %398 : vector<16x32xf32>
    %400 = vector.broadcast %379 : vector<1x32xf32> to vector<16x32xf32>
    %401 = arith.addf %399, %400 : vector<16x32xf32>
    %c1_177 = arith.constant 1 : index
    %c0_178 = arith.constant 0 : index
    %c0_179 = arith.constant 0 : index
    %402 = vector.load %arg7[%c1_177, %c0_178, %c0_179] : memref<2x32x64xf32, #tpu.memory_space<vmem>>, vector<1x32x64xf32>
    %403 = vector.shape_cast %402 : vector<1x32x64xf32> to vector<32x64xf32>
    %cst_180 = arith.constant dense<0.000000e+00> : vector<16x64xf32>
    %404 = tpu.matmul %401, %403, %cst_180 {dimension_numbers = #tpu.dot_dimension_numbers<[1], [0], [0], [1], [0, 0, 1, 1], [], []>} : vector<16x32xf32>, vector<32x64xf32>, vector<16x64xf32> -> vector<16x64xf32>
    %c1_181 = arith.constant 1 : index
    %c4_182 = arith.constant 4 : index
    %c0_183 = arith.constant 0 : index
    %405 = vector.load %arg4[%c1_181, %c4_182, %c0_183] : memref<2x10x128xf32, #tpu.memory_space<vmem>>, vector<1x1x64xf32>
    %406 = vector.shape_cast %405 : vector<1x1x64xf32> to vector<1x64xf32>
    %407 = vector.broadcast %406 : vector<1x64xf32> to vector<16x64xf32>
    %408 = arith.addf %404, %407 : vector<16x64xf32>
    %cst_184 = arith.constant 5.000000e-01 : f32
    %409 = vector.broadcast %cst_184 : f32 to vector<16x64xf32>
    %410 = arith.mulf %409, %408 : vector<16x64xf32>
    %cst_185 = arith.constant 4.471500e-02 : f32
    %411 = vector.broadcast %cst_185 : f32 to vector<16x64xf32>
    %412 = arith.mulf %411, %408 : vector<16x64xf32>
    %413 = arith.mulf %412, %408 : vector<16x64xf32>
    %414 = arith.mulf %413, %408 : vector<16x64xf32>
    %415 = arith.addf %408, %414 : vector<16x64xf32>
    %cst_186 = arith.constant 0.797884583 : f32
    %416 = vector.broadcast %cst_186 : f32 to vector<16x64xf32>
    %417 = arith.mulf %416, %415 : vector<16x64xf32>
    %418 = math.tanh %417 : vector<16x64xf32>
    %cst_187 = arith.constant 1.000000e+00 : f32
    %419 = vector.broadcast %cst_187 : f32 to vector<16x64xf32>
    %420 = arith.addf %419, %418 : vector<16x64xf32>
    %421 = arith.mulf %410, %420 : vector<16x64xf32>
    %c1_188 = arith.constant 1 : index
    %c0_189 = arith.constant 0 : index
    %c0_190 = arith.constant 0 : index
    %422 = vector.load %arg8[%c1_188, %c0_189, %c0_190] : memref<2x64x32xf32, #tpu.memory_space<vmem>>, vector<1x64x32xf32>
    %423 = vector.shape_cast %422 : vector<1x64x32xf32> to vector<64x32xf32>
    %cst_191 = arith.constant dense<0.000000e+00> : vector<16x32xf32>
    %424 = tpu.matmul %421, %423, %cst_191 {dimension_numbers = #tpu.dot_dimension_numbers<[1], [0], [0], [1], [0, 0, 1, 1], [], []>} : vector<16x64xf32>, vector<64x32xf32>, vector<16x32xf32> -> vector<16x32xf32>
    %c1_192 = arith.constant 1 : index
    %c5_193 = arith.constant 5 : index
    %c0_194 = arith.constant 0 : index
    %425 = vector.load %arg4[%c1_192, %c5_193, %c0_194] : memref<2x10x128xf32, #tpu.memory_space<vmem>>, vector<1x1x32xf32>
    %426 = vector.shape_cast %425 : vector<1x1x32xf32> to vector<1x32xf32>
    %427 = vector.broadcast %426 : vector<1x32xf32> to vector<16x32xf32>
    %428 = arith.addf %424, %427 : vector<16x32xf32>
    %429 = arith.addf %401, %428 : vector<16x32xf32>
    %c1_195 = arith.constant 1 : index
    %c8_196 = arith.constant 8 : index
    %c0_197 = arith.constant 0 : index
    %430 = vector.load %arg4[%c1_195, %c8_196, %c0_197] : memref<2x10x128xf32, #tpu.memory_space<vmem>>, vector<1x1x32xf32>
    %431 = vector.shape_cast %430 : vector<1x1x32xf32> to vector<1x32xf32>
    %c1_198 = arith.constant 1 : index
    %c9_199 = arith.constant 9 : index
    %c0_200 = arith.constant 0 : index
    %432 = vector.load %arg4[%c1_198, %c9_199, %c0_200] : memref<2x10x128xf32, #tpu.memory_space<vmem>>, vector<1x1x32xf32>
    %433 = vector.shape_cast %432 : vector<1x1x32xf32> to vector<1x32xf32>
    %cst_201 = arith.constant dense<0.000000e+00> : vector<16xf32>
    %434 = vector.multi_reduction <add>, %429, %cst_201 [1] : vector<16x32xf32> to vector<16xf32>
    %435 = vector.shape_cast %434 : vector<16xf32> to vector<16x1xf32>
    %cst_202 = arith.constant 3.200000e+01 : f32
    %436 = vector.broadcast %cst_202 : f32 to vector<16x1xf32>
    %437 = arith.divf %435, %436 : vector<16x1xf32>
    %438 = vector.broadcast %437 : vector<16x1xf32> to vector<16x32xf32>
    %439 = arith.subf %429, %438 : vector<16x32xf32>
    %440 = arith.mulf %439, %439 : vector<16x32xf32>
    %cst_203 = arith.constant dense<0.000000e+00> : vector<16xf32>
    %441 = vector.multi_reduction <add>, %440, %cst_203 [1] : vector<16x32xf32> to vector<16xf32>
    %442 = vector.shape_cast %441 : vector<16xf32> to vector<16x1xf32>
    %cst_204 = arith.constant 3.200000e+01 : f32
    %443 = vector.broadcast %cst_204 : f32 to vector<16x1xf32>
    %444 = arith.divf %442, %443 : vector<16x1xf32>
    %445 = vector.broadcast %437 : vector<16x1xf32> to vector<16x32xf32>
    %446 = arith.subf %429, %445 : vector<16x32xf32>
    %cst_205 = arith.constant 9.99999996E-13 : f32
    %447 = vector.broadcast %cst_205 : f32 to vector<16x1xf32>
    %448 = arith.addf %444, %447 : vector<16x1xf32>
    %449 = math.rsqrt %448 : vector<16x1xf32>
    %450 = vector.broadcast %449 : vector<16x1xf32> to vector<16x32xf32>
    %451 = arith.mulf %446, %450 : vector<16x32xf32>
    %452 = vector.broadcast %431 : vector<1x32xf32> to vector<16x32xf32>
    %453 = arith.mulf %451, %452 : vector<16x32xf32>
    %454 = vector.broadcast %433 : vector<1x32xf32> to vector<16x32xf32>
    %455 = arith.addf %453, %454 : vector<16x32xf32>
    %c0_206 = arith.constant 0 : index
    %c0_207 = arith.constant 0 : index
    %456 = vector.load %arg9[%c0_206, %c0_207] : memref<32x32xf32, #tpu.memory_space<vmem>>, vector<32x32xf32>
    %cst_208 = arith.constant dense<0.000000e+00> : vector<16x32xf32>
    %457 = tpu.matmul %455, %456, %cst_208 {dimension_numbers = #tpu.dot_dimension_numbers<[1], [0], [0], [1], [0, 0, 1, 1], [], []>} : vector<16x32xf32>, vector<32x32xf32>, vector<16x32xf32> -> vector<16x32xf32>
    %c14 = arith.constant 14 : index
    %c0_209 = arith.constant 0 : index
    %458 = vector.load %arg3[%c14, %c0_209] : memref<16x128xf32, #tpu.memory_space<vmem>>, vector<1x32xf32>
    %459 = vector.broadcast %458 : vector<1x32xf32> to vector<16x32xf32>
    %460 = arith.addf %457, %459 : vector<16x32xf32>
    %461 = math.tanh %460 : vector<16x32xf32>
    %c0_210 = arith.constant 0 : index
    %c0_211 = arith.constant 0 : index
    %462 = vector.load %arg10[%c0_210, %c0_211] : memref<32x128xf32, #tpu.memory_space<vmem>>, vector<32x128xf32>
    %cst_212 = arith.constant dense<0.000000e+00> : vector<16x128xf32>
    %463 = tpu.matmul %461, %462, %cst_212 {dimension_numbers = #tpu.dot_dimension_numbers<[1], [0], [0], [1], [0, 0, 1, 1], [], []>} : vector<16x32xf32>, vector<32x128xf32>, vector<16x128xf32> -> vector<16x128xf32>
    %c15 = arith.constant 15 : index
    %c0_213 = arith.constant 0 : index
    %464 = vector.load %arg3[%c15, %c0_213] : memref<16x128xf32, #tpu.memory_space<vmem>>, vector<1x128xf32>
    %465 = vector.broadcast %464 : vector<1x128xf32> to vector<16x128xf32>
    %466 = arith.addf %463, %465 : vector<16x128xf32>
    %c0_214 = arith.constant 0 : index
    %c0_215 = arith.constant 0 : index
    %467 = vector.load %arg11[%c0_214, %c0_215] : memref<16x128xf32, #tpu.memory_space<vmem>>, vector<16x128xf32>
    tpu.vector_store %arg11[%c0_214, %c0_215], %466 {strides = array<i32>} : memref<16x128xf32, #tpu.memory_space<vmem>>, vector<16x128xf32>,
    return
  }
}

</mosaic_0001>

<llo_original>
// kernel: intent_model_forward.1
$region0: #{intent_model_forward.1}
  #allocation0 [shape = 'u32[]', space=smem, size = 0x4, offset = 0x4, fixed_abs, tag = 'smem constant byte address 0x4 - core index']
  #allocation1 [shape = 'u32[72,128]{1,0:T(1,128)}', space=vmem, size = 0x9000, scoped, tag = 'internal scratch']
  %s0 = inlined_call_operand.vmem [shape: s32[16,1], index: 0, kind: input, shape index: {}]
  %s1 = inlined_call_operand.vmem [shape: s32[2,1,8], index: 1, kind: input, shape index: {}]
  %s2 = inlined_call_operand.vmem [shape: f32[100,32], index: 2, kind: input, shape index: {}]
  %s3 = inlined_call_operand.vmem [shape: f32[16,128], index: 3, kind: input, shape index: {}]
  %s4 = inlined_call_operand.vmem [shape: f32[2,10,128], index: 4, kind: input, shape index: {}]
  %s5 = inlined_call_operand.vmem [shape: f32[2,3,32,32], index: 5, kind: input, shape index: {}]
  %s6 = inlined_call_operand.vmem [shape: f32[2,32,32], index: 6, kind: input, shape index: {}]
  %s7 = inlined_call_operand.hbm [shape: f32[2,32,64], index: 7, kind: input, shape index: {}]
  %s8 = inlined_call_operand.vmem [shape: f32[2,64,32], index: 8, kind: input, shape index: {}]
  %s9 = inlined_call_operand.hbm [shape: f32[32,32], index: 9, kind: input, shape index: {}]
  %s10 = inlined_call_operand.hbm [shape: f32[32,128], index: 10, kind: input, shape index: {}]
  %s11 = inlined_call_operand.vmem [shape: f32[16,128], index: 11, kind: output, shape index: {}]
  %s12 = sld [smem:[#allocation0]]
  $region66: #{intent_model_forward.1} parent=0
    _
  %s14 = ssub.s32 1, %s12
  %s15 = scalar_select 0, %s14, %s12
  $region1: #{intent_model_forward.1} parent=0
    #allocation2 [shape = 'u8[32768]{0}', space=vmem, size = 0x8000, scoped, tag = 'input window, operand 7, single buffered']
    #allocation3 [shape = 's32[1]{0}', space=sflag, size = 0x4, scoped, tag = 'scoped memory for intent_model_forward.1']
    #allocation4 [shape = 'u8[16384]{0}', space=vmem, size = 0x4000, scoped, tag = 'input window, operand 9, single buffered']
    #allocation5 [shape = 's32[1]{0}', space=sflag, size = 0x4, scoped, tag = 'scoped memory for intent_model_forward.1']
    #allocation6 [shape = 'u8[16384]{0}', space=vmem, size = 0x4000, scoped, tag = 'input window, operand 10, single buffered']
    %16 = vsyncpa [#allocation3], 0
    %17 = vsyncpa [#allocation5], 0
    // Predicated region
    $region2: #{intent_model_forward.1} parent=1 // pred_check
      _
    $region3: #{intent_model_forward.1} parent=1 // pred_check_branch
      %19 = sbr.rel (0) target = $region5
    $region4: #{intent_model_forward.1} parent=1 // pred_region
      _
    $region5: #{intent_model_forward.1} parent=1 // pred_fallthru
      _
    // Predicated region
    $region6: #{intent_model_forward.1} parent=1 // pred_check
      _
    $region7: #{intent_model_forward.1} parent=1 // pred_check_branch
      %21 = sbr.rel (0) target = $region9
    $region8: #{intent_model_forward.1} parent=1 // pred_region
      _
    $region9: #{intent_model_forward.1} parent=1 // pred_fallthru
      _
    // Predicated region
    $region10: #{intent_model_forward.1} parent=1 // pred_check
      _
    $region11: #{intent_model_forward.1} parent=1 // pred_check_branch
      %23 = sbr.rel (0) target = $region13
    $region12: #{intent_model_forward.1} parent=1 // pred_region
      _
    $region13: #{intent_model_forward.1} parent=1 // pred_fallthru
      _
    // Predicated region
    $region14: #{intent_model_forward.1} parent=1 // pred_check
      _
    $region15: #{intent_model_forward.1} parent=1 // pred_check_branch
      %25 = sbr.rel (0) target = $region17
    $region16: #{intent_model_forward.1} parent=1 // pred_region
      _
    $region17: #{intent_model_forward.1} parent=1 // pred_fallthru
      _
    // Predicated region
    $region18: #{intent_model_forward.1} parent=1 // pred_check
      _
    $region19: #{intent_model_forward.1} parent=1 // pred_check_branch
      %27 = sbr.rel (0) target = $region21
    $region20: #{intent_model_forward.1} parent=1 // pred_region
      _
    $region21: #{intent_model_forward.1} parent=1 // pred_fallthru
      _
    // Predicated region
    $region22: #{intent_model_forward.1} parent=1 // pred_check
      _
    $region23: #{intent_model_forward.1} parent=1 // pred_check_branch
      %29 = sbr.rel (0) target = $region25
    $region24: #{intent_model_forward.1} parent=1 // pred_region
      _
    $region25: #{intent_model_forward.1} parent=1 // pred_fallthru
      _
    // Predicated region
    $region26: #{intent_model_forward.1} parent=1 // pred_check
      _
    $region27: #{intent_model_forward.1} parent=1 // pred_check_branch
      %31 = sbr.rel (0) target = $region29
    $region28: #{intent_model_forward.1} parent=1 // pred_region
      _
    $region29: #{intent_model_forward.1} parent=1 // pred_fallthru
      _
    // Predicated region
    $region30: #{intent_model_forward.1} parent=1 // pred_check
      _
    $region31: #{intent_model_forward.1} parent=1 // pred_check_branch
      %33 = sbr.rel (0) target = $region33
    $region32: #{intent_model_forward.1} parent=1 // pred_region
      %35 = vsyncadd [#allocation3], 0
      %s36 = sshll.u32 %s7, 4
      %s37 = int_to_ptr.hbm [resolvable:$true] %s36
      %s38 = sshll.u32 [#allocation2], 4
      %s39 = int_to_ptr.vmem [resolvable:$true] %s38
      %44 = dma.hbm_to_vmem [thread:$0]  %s37, 1024, %s39, [#allocation3], 128, 128, 8
    $region33: #{intent_model_forward.1} parent=1 // pred_fallthru
      _
    // Predicated region
    $region34: #{intent_model_forward.1} parent=1 // pred_check
      _
    $region35: #{intent_model_forward.1} parent=1 // pred_check_branch
      %46 = sbr.rel (0) target = $region37
    $region36: #{intent_model_forward.1} parent=1 // pred_region
      _
    $region37: #{intent_model_forward.1} parent=1 // pred_fallthru
      _
    // Predicated region
    $region38: #{intent_model_forward.1} parent=1 // pred_check
      _
    $region39: #{intent_model_forward.1} parent=1 // pred_check_branch
      %48 = sbr.rel (0) target = $region41
    $region40: #{intent_model_forward.1} parent=1 // pred_region
      %50 = vsyncadd [#allocation5], 0
      %s51 = sshll.u32 %s9, 4
      %s52 = int_to_ptr.hbm [resolvable:$true] %s51
      %s53 = sshll.u32 [#allocation4], 4
      %s54 = int_to_ptr.vmem [resolvable:$true] %s53
      %59 = dma.hbm_to_vmem [thread:$0]  %s52, 512, %s54, [#allocation5], 128, 128, 8
    $region41: #{intent_model_forward.1} parent=1 // pred_fallthru
      _
    // Predicated region
    $region42: #{intent_model_forward.1} parent=1 // pred_check
      _
    $region43: #{intent_model_forward.1} parent=1 // pred_check_branch
      %61 = sbr.rel (0) target = $region45
    $region44: #{intent_model_forward.1} parent=1 // pred_region
      %63 = vsyncadd [#allocation5], 0
      %s64 = sshll.u32 %s10, 4
      %s65 = int_to_ptr.hbm [resolvable:$true] %s64
      %s66 = sshll.u32 [#allocation6], 4
      %s67 = int_to_ptr.vmem [resolvable:$true] %s66
      %72 = dma.hbm_to_vmem [thread:$0]  %s65, 512, %s67, [#allocation5], 128, 128, 8
    $region45: #{intent_model_forward.1} parent=1 // pred_fallthru
      _
    // Predicated region
    $region46: #{intent_model_forward.1} parent=1 // pred_check
      _
    $region47: #{intent_model_forward.1} parent=1 // pred_check_branch
      %74 = sbr.rel (0) target = $region49
    $region48: #{intent_model_forward.1} parent=1 // pred_region
      %76 = dma.done [#allocation3], 1024
    $region49: #{intent_model_forward.1} parent=1 // pred_fallthru
      _
    // Predicated region
    $region50: #{intent_model_forward.1} parent=1 // pred_check
      _
    $region51: #{intent_model_forward.1} parent=1 // pred_check_branch
      %78 = sbr.rel (0) target = $region53
    $region52: #{intent_model_forward.1} parent=1 // pred_region
      %80 = dma.done [#allocation5], 512
    $region53: #{intent_model_forward.1} parent=1 // pred_fallthru
      _
    // Predicated region
    $region54: #{intent_model_forward.1} parent=1 // pred_check
      _
    $region55: #{intent_model_forward.1} parent=1 // pred_check_branch
      %82 = sbr.rel (0) target = $region57
    $region56: #{intent_model_forward.1} parent=1 // pred_region
      %84 = dma.done [#allocation5], 512
    $region57: #{intent_model_forward.1} parent=1 // pred_fallthru
      _
    %v85 = vld [vmem:[%s0] sm:$0xff]
    %v86 = vld [vmem:[%s0 + $0x8] sm:$0xff]
    %v87 = vlaneseq
    %v88 = vand.u32 %v87, 127
    %89 = vset.pattern.permute.xlu0 0
    %90 = vperm.xlu0 %89, %v85
    %v91 = vpop.permute.xlu0 %90
    %92 = vset.pattern.permute.xlu0 0
    %93 = vperm.xlu0 %92, %v86
    %v94 = vpop.permute.xlu0 %93
    %vm95 = vcmp.eq.s32.totalorder %v88, %v91
    %vm96 = vcmp.eq.s32.totalorder %v88, %v94
    %v97 = vsel %vm95, 1, 0
    %v98 = vsel %vm96, 1, 0
    %v99 = vcvt.s32.f32 %v97
    %v100 = vcvt.s32.f32 %v98
    %v101 = vld [vmem:[%s2] sm:$0xff]
    %v102 = vld [vmem:[%s2 + $0x8] sm:$0xff]
    %v103 = vld [vmem:[%s2 + $0x10] sm:$0xff]
    %v104 = vld [vmem:[%s2 + $0x18] sm:$0xff]
    %v105 = vld [vmem:[%s2 + $0x20] sm:$0xff]
    %v106 = vld [vmem:[%s2 + $0x28] sm:$0xff]
    %v107 = vld [vmem:[%s2 + $0x30] sm:$0xff]
    %v108 = vld [vmem:[%s2 + $0x38] sm:$0xff]
    %v109 = vld [vmem:[%s2 + $0x40] sm:$0xff]
    %v110 = vld [vmem:[%s2 + $0x48] sm:$0xff]
    %v111 = vld [vmem:[%s2 + $0x50] sm:$0xff]
    %v112 = vld [vmem:[%s2 + $0x58] sm:$0xff]
    %v113 = vld [vmem:[%s2 + $0x60] sm:$0xf]
    %vm114 = vcmask 818176
    %v116 = vsel %vm114, %v99, 0
    %v119 = vsel %vm114, %v100, 0
    %vm121 = vcmask 1043456
    %v123 = vsel %vm121, %v113, 0
    %125 = vmatpush.msra.mxu0 0.0
    %126 = vmatpush.msra.mxu0 0.0
    %127 = vmatpush.msra.mxu0 0.0
    %128 = vmatpush.msra.mxu0 %v123
    %129 = vmatpush.msra.mxu0 %v112
    %130 = vmatpush.msra.mxu0 %v111
    %131 = vmatpush.msra.mxu0 %v110
    %132 = vmatpush.msra.mxu0 %v109
    %133 = vmatpush.msra.mxu0 %v108
    %134 = vmatpush.msra.mxu0 %v107
    %135 = vmatpush.msra.mxu0 %v106
    %136 = vmatpush.msra.mxu0 %v105
    %137 = vmatpush.msra.mxu0 %v104
    %138 = vmatpush.msra.mxu0 %v103
    %139 = vmatpush.msra.mxu0 %v102
    %140 = vmatpush.msra.mxu0 %v101
    %141 = vmatmul.f32.gmra.mxu0 %v116
    %v142 = vpop.f32.mrf.mxu0
    %v143 = vadd.f32 0.0, %v142
    %144 = vmatmul.f32.gmra.mxu0 %v119
    %v145 = vpop.f32.mrf.mxu0
    %v146 = vadd.f32 0.0, %v145
    %147 = vdwg.mxu0
    %v148 = vld [vmem:[%s3] sm:$0xff]
    %v149 = vadd.f32 %v143, %v148
    %v150 = vadd.f32 %v146, %v148
    %v151 = vld [vmem:[%s3 + $0xc] sm:$0x1]
    %v152 = vld [vmem:[%s3 + $0xd] sm:$0x1]
    %vm153 = vcmask 261120
    %v154 = vsel %vm153, %v149, 0.0
    %155 = vadd.xlane.f32.xlu0 %v154
    %v156 = vpop.xlane.xlu0 %155
    %v157 = vsel %vm153, %v150, 0.0
    %158 = vadd.xlane.f32.xlu0 %v157
    %v159 = vpop.xlane.xlu0 %158
    %v160 = vrcp.pop 32.0
    %v161 = vmul.f32 32.0, %v160
    %v162 = vsub.f32 1.0, %v161
    %v163 = vmul.f32 %v160, %v162
    %v164 = vadd.f32 %v160, %v163
    %vm165 = vweird.f32 %v160
    %v166 = vsel %vm165, %v160, %v164
    %v167 = vmul.f32 %v156, %v166
    %v168 = vmul.f32 %v159, %v166
    %v169 = vsub.f32 %v149, %v167
    %v170 = vsub.f32 %v150, %v168
    %v171 = vmul.f32 %v169, %v169
    %v172 = vmul.f32 %v170, %v170
    %v173 = vsel %vm153, %v171, 0.0
    %174 = vadd.xlane.f32.xlu0 %v173
    %v175 = vpop.xlane.xlu0 %174
    %v176 = vsel %vm153, %v172, 0.0
    %177 = vadd.xlane.f32.xlu0 %v176
    %v178 = vpop.xlane.xlu0 %177
    %v179 = vmul.f32 %v175, %v166
    %v180 = vmul.f32 %v178, %v166
    %v181 = vadd.f32 %v179, 1e-12
    %v182 = vadd.f32 %v180, 1e-12
    %v183 = vrsqrt.pop %v181
    %v184 = vmul.f32 %v183, %v181
    %v185 = vmul.f32 %v184, %v183
    %v186 = vmul.f32 0.5, %v185
    %v187 = vsub.f32 1.5, %v186
    %v188 = vmul.f32 %v183, %v187
    %vm189 = vweird.f32 %v181
    %vm190 = vweird.f32 %v183
    %vm191 = vmor %vm189, %vm190
    %v192 = vsel %vm191, %v183, %v188
    %v193 = vrsqrt.pop %v182
    %v194 = vmul.f32 %v193, %v182
    %v195 = vmul.f32 %v194, %v193
    %v196 = vmul.f32 0.5, %v195
    %v197 = vsub.f32 1.5, %v196
    %v198 = vmul.f32 %v193, %v197
    %vm199 = vweird.f32 %v182
    %vm200 = vweird.f32 %v193
    %vm201 = vmor %vm199, %vm200
    %v202 = vsel %vm201, %v193, %v198
    %v203 = vmul.f32 %v169, %v192
    %v204 = vmul.f32 %v170, %v202
    %v205 = vperm.slane %v151, 0
    %v206 = vmul.f32 %v203, %v205
    %v207 = vmul.f32 %v204, %v205
    %v208 = vperm.slane %v152, 0
    %v209 = vadd.f32 %v206, %v208
    %v210 = vadd.f32 %v207, %v208
    %v211 = vld [vmem:[%s1] sm:$0x1]
    %v212 = vld [vmem:[%s1 + $0x1] sm:$0x1]
    %v213 = vcvt.s32.f32 %v211
    %v214 = vcvt.s32.f32 %v212
    %v215 = vsub.f32 1.0, %v213
    %v216 = vsub.f32 1.0, %v214
    %v217 = vmul.f32 %v215, -1e+09
    %v218 = vmul.f32 %v216, -1e+09
    %v219 = vld [vmem:[%s5] sm:$0xff]
    %v220 = vld [vmem:[%s5 + $0x8] sm:$0xff]
    %v221 = vld [vmem:[%s5 + $0x10] sm:$0xff]
    %v222 = vld [vmem:[%s5 + $0x18] sm:$0xff]
    %v223 = vld [vmem:[%s4] sm:$0x1]
    %v224 = vperm.slane %v223, 0
    %v226 = vsel %vm153, %v209, 0
    %v229 = vsel %vm153, %v210, 0
    %231 = vmatpush.msra.mxu0 0.0
    %232 = vmatpush.msra.mxu0 0.0
    %233 = vmatpush.msra.mxu0 0.0
    %234 = vmatpush.msra.mxu0 0.0
    %235 = vmatpush.msra.mxu0 0.0
    %236 = vmatpush.msra.mxu0 0.0
    %237 = vmatpush.msra.mxu0 0.0
    %238 = vmatpush.msra.mxu0 0.0
    %239 = vmatpush.msra.mxu0 0.0
    %240 = vmatpush.msra.mxu0 0.0
    %241 = vmatpush.msra.mxu0 0.0
    %242 = vmatpush.msra.mxu0 0.0
    %243 = vmatpush.msra.mxu0 %v222
    %244 = vmatpush.msra.mxu0 %v221
    %245 = vmatpush.msra.mxu0 %v220
    %246 = vmatpush.msra.mxu0 %v219
    %247 = vmatmul.f32.gmra.mxu0 %v226
    %v248 = vpop.f32.mrf.mxu0
    %v249 = vadd.f32 %v224, %v248
    %250 = vmatmul.f32.gmra.mxu0 %v229
    %v251 = vpop.f32.mrf.mxu0
    %v252 = vadd.f32 %v224, %v251
    %253 = vdwg.mxu0
    %s254 = scalar_lea.vmem %s5, 32
    %v255 = vld [vmem:[%s254] sm:$0xff]
    %v256 = vld [vmem:[%s254 + $0x8] sm:$0xff]
    %v257 = vld [vmem:[%s254 + $0x10] sm:$0xff]
    %v258 = vld [vmem:[%s254 + $0x18] sm:$0xff]
    %v259 = vld [vmem:[%s4 + $0x1] sm:$0x1]
    %v260 = vperm.slane %v259, 0
    %261 = vmatpush.msra.mxu0 0.0
    %262 = vmatpush.msra.mxu0 0.0
    %263 = vmatpush.msra.mxu0 0.0
    %264 = vmatpush.msra.mxu0 0.0
    %265 = vmatpush.msra.mxu0 0.0
    %266 = vmatpush.msra.mxu0 0.0
    %267 = vmatpush.msra.mxu0 0.0
    %268 = vmatpush.msra.mxu0 0.0
    %269 = vmatpush.msra.mxu0 0.0
    %270 = vmatpush.msra.mxu0 0.0
    %271 = vmatpush.msra.mxu0 0.0
    %272 = vmatpush.msra.mxu0 0.0
    %273 = vmatpush.msra.mxu0 %v258
    %274 = vmatpush.msra.mxu0 %v257
    %275 = vmatpush.msra.mxu0 %v256
    %276 = vmatpush.msra.mxu0 %v255
    %277 = vmatmul.f32.gmra.mxu0 %v226
    %v278 = vpop.f32.mrf.mxu0
    %v279 = vadd.f32 %v260, %v278
    %280 = vmatmul.f32.gmra.mxu0 %v229
    %v281 = vpop.f32.mrf.mxu0
    %v282 = vadd.f32 %v260, %v281
    %283 = vdwg.mxu0
    %s284 = scalar_lea.vmem %s5, 64
    %v285 = vld [vmem:[%s284] sm:$0xff]
    %v286 = vld [vmem:[%s284 + $0x8] sm:$0xff]
    %v287 = vld [vmem:[%s284 + $0x10] sm:$0xff]
    %v288 = vld [vmem:[%s284 + $0x18] sm:$0xff]
    %v289 = vld [vmem:[%s4 + $0x2] sm:$0x1]
    %v290 = vperm.slane %v289, 0
    %291 = vmatpush.msra.mxu0 0.0
    %292 = vmatpush.msra.mxu0 0.0
    %293 = vmatpush.msra.mxu0 0.0
    %294 = vmatpush.msra.mxu0 0.0
    %295 = vmatpush.msra.mxu0 0.0
    %296 = vmatpush.msra.mxu0 0.0
    %297 = vmatpush.msra.mxu0 0.0
    %298 = vmatpush.msra.mxu0 0.0
    %299 = vmatpush.msra.mxu0 0.0
    %300 = vmatpush.msra.mxu0 0.0
    %301 = vmatpush.msra.mxu0 0.0
    %302 = vmatpush.msra.mxu0 0.0
    %303 = vmatpush.msra.mxu0 %v288
    %304 = vmatpush.msra.mxu0 %v287
    %305 = vmatpush.msra.mxu0 %v286
    %306 = vmatpush.msra.mxu0 %v285
    %307 = vmatmul.f32.gmra.mxu0 %v226
    %v308 = vpop.f32.mrf.mxu0
    %v309 = vadd.f32 %v290, %v308
    %310 = vmatmul.f32.gmra.mxu0 %v229
    %v311 = vpop.f32.mrf.mxu0
    %v312 = vadd.f32 %v290, %v311
    %313 = vdwg.mxu0
    %v314 = vld [vmem:[%s3 + $0x8] sm:$0x1]
    %v315 = vperm.slane %v314, 0
    %v316 = vmul.f32 %v249, %v315
    %v317 = vmul.f32 %v252, %v315
    %v319 = vsel %vm153, %v316, 0
    %v322 = vsel %vm153, %v279, 0
    %324 = vmatpush.xpose.msra.mxu0 0.0
    %325 = vmatpush.xpose.msra.mxu0 0.0
    %326 = vmatpush.xpose.msra.mxu0 0.0
    %327 = vmatpush.xpose.msra.mxu0 0.0
    %328 = vmatpush.xpose.msra.mxu0 0.0
    %329 = vmatpush.xpose.msra.mxu0 0.0
    %330 = vmatpush.xpose.msra.mxu0 0.0
    %331 = vmatpush.xpose.msra.mxu0 0.0
    %332 = vmatpush.xpose.msra.mxu0 0.0
    %333 = vmatpush.xpose.msra.mxu0 0.0
    %334 = vmatpush.xpose.msra.mxu0 0.0
    %335 = vmatpush.xpose.msra.mxu0 0.0
    %336 = vmatpush.xpose.msra.mxu0 0.0
    %337 = vmatpush.xpose.msra.mxu0 0.0
    %338 = vmatpush.xpose.msra.mxu0 0.0
    %339 = vmatpush.xpose.msra.mxu0 %v322
    %340 = vmatmul.f32.gmra.mxu0 %v319
    %v341 = vpop.f32.mrf.mxu0
    %v342 = vadd.f32 0.0, %v341
    %343 = vdwg.mxu0
    %v345 = vsel %vm153, %v317, 0
    %v348 = vsel %vm153, %v282, 0
    %350 = vmatpush.xpose.msra.mxu0 0.0
    %351 = vmatpush.xpose.msra.mxu0 0.0
    %352 = vmatpush.xpose.msra.mxu0 0.0
    %353 = vmatpush.xpose.msra.mxu0 0.0
    %354 = vmatpush.xpose.msra.mxu0 0.0
    %355 = vmatpush.xpose.msra.mxu0 0.0
    %356 = vmatpush.xpose.msra.mxu0 0.0
    %357 = vmatpush.xpose.msra.mxu0 0.0
    %358 = vmatpush.xpose.msra.mxu0 0.0
    %359 = vmatpush.xpose.msra.mxu0 0.0
    %360 = vmatpush.xpose.msra.mxu0 0.0
    %361 = vmatpush.xpose.msra.mxu0 0.0
    %362 = vmatpush.xpose.msra.mxu0 0.0
    %363 = vmatpush.xpose.msra.mxu0 0.0
    %364 = vmatpush.xpose.msra.mxu0 0.0
    %365 = vmatpush.xpose.msra.mxu0 %v348
    %366 = vmatmul.f32.gmra.mxu0 %v345
    %v367 = vpop.f32.mrf.mxu0
    %v368 = vadd.f32 0.0, %v367
    %369 = vdwg.mxu0
    %v370 = vmul.f32 %v342, 0.35355338
    %v371 = vmul.f32 %v368, 0.35355338
    %v374 = vperm.slane %v217, 0
    %v375 = vperm.slane %v218, 0
    %v378 = vadd.f32 %v370, %v374
    %v379 = vadd.f32 %v371, %v375
    %vm380 = vcmask 64512
    %v381 = vsel %vm380, %v378, -inf
    %382 = vmax.xlane.f32.xlu0 %v381
    %v383 = vpop.xlane.xlu0 %382
    %v384 = vsel %vm380, %v379, -inf
    %385 = vmax.xlane.f32.xlu0 %v384
    %v386 = vpop.xlane.xlu0 %385
    %v387 = vsub.f32 %v378, %v383
    %v388 = vsub.f32 %v379, %v386
    %v389 = vmul.f32 %v387, 1.442695
    %v390 = vpow.pop %v389
    %v391 = vmul.f32 %v388, 1.442695
    %v392 = vpow.pop %v391
    %v393 = vsel %vm380, %v390, 0.0
    %394 = vadd.xlane.f32.xlu0 %v393
    %v395 = vpop.xlane.xlu0 %394
    %v396 = vsel %vm380, %v392, 0.0
    %397 = vadd.xlane.f32.xlu0 %v396
    %v398 = vpop.xlane.xlu0 %397
    %v399 = vrcp.pop %v395
    %v400 = vmul.f32 %v395, %v399
    %v401 = vsub.f32 1.0, %v400
    %v402 = vmul.f32 %v399, %v401
    %v403 = vadd.f32 %v399, %v402
    %vm404 = vweird.f32 %v395
    %vm405 = vweird.f32 %v399
    %vm406 = vmor %vm404, %vm405
    %v407 = vsel %vm406, %v399, %v403
    %v408 = vand.u32 2147483647, %v395
    %vm409 = vcmp.eq.f32.partialorder %v408, 8.507059e+37
    %v410 = vand.u32 %v395, 2147483648
    %v411 = vor.u32 1.1754944e-38, %v410
    %v412 = vsel %vm409, %v411, %v407
    %v413 = vmul.f32 %v390, %v412
    %v414 = vrcp.pop %v398
    %v415 = vmul.f32 %v398, %v414
    %v416 = vsub.f32 1.0, %v415
    %v417 = vmul.f32 %v414, %v416
    %v418 = vadd.f32 %v414, %v417
    %vm419 = vweird.f32 %v398
    %vm420 = vweird.f32 %v414
    %vm421 = vmor %vm419, %vm420
    %v422 = vsel %vm421, %v414, %v418
    %v423 = vand.u32 2147483647, %v398
    %vm424 = vcmp.eq.f32.partialorder %v423, 8.507059e+37
    %v425 = vand.u32 %v398, 2147483648
    %v426 = vor.u32 1.1754944e-38, %v425
    %v427 = vsel %vm424, %v426, %v422
    %v428 = vmul.f32 %v392, %v427
    %v429 = vmul.f32 %v309, %v315
    %v430 = vmul.f32 %v312, %v315
    %v431 = vld [vmem:[%s3 + $0x9] sm:$0x1]
    %v432 = vperm.slane %v431, 0
    %v433 = vmul.f32 %v249, %v432
    %v434 = vmul.f32 %v252, %v432
    %v436 = vsel %vm153, %v433, 0
    %438 = vmatpush.xpose.msra.mxu0 0.0
    %439 = vmatpush.xpose.msra.mxu0 0.0
    %440 = vmatpush.xpose.msra.mxu0 0.0
    %441 = vmatpush.xpose.msra.mxu0 0.0
    %442 = vmatpush.xpose.msra.mxu0 0.0
    %443 = vmatpush.xpose.msra.mxu0 0.0
    %444 = vmatpush.xpose.msra.mxu0 0.0
    %445 = vmatpush.xpose.msra.mxu0 0.0
    %446 = vmatpush.xpose.msra.mxu0 0.0
    %447 = vmatpush.xpose.msra.mxu0 0.0
    %448 = vmatpush.xpose.msra.mxu0 0.0
    %449 = vmatpush.xpose.msra.mxu0 0.0
    %450 = vmatpush.xpose.msra.mxu0 0.0
    %451 = vmatpush.xpose.msra.mxu0 0.0
    %452 = vmatpush.xpose.msra.mxu0 0.0
    %453 = vmatpush.xpose.msra.mxu0 %v322
    %454 = vmatmul.f32.gmra.mxu0 %v436
    %v455 = vpop.f32.mrf.mxu0
    %v456 = vadd.f32 0.0, %v455
    %457 = vdwg.mxu0
    %v459 = vsel %vm153, %v434, 0
    %461 = vmatpush.xpose.msra.mxu0 0.0
    %462 = vmatpush.xpose.msra.mxu0 0.0
    %463 = vmatpush.xpose.msra.mxu0 0.0
    %464 = vmatpush.xpose.msra.mxu0 0.0
    %465 = vmatpush.xpose.msra.mxu0 0.0
    %466 = vmatpush.xpose.msra.mxu0 0.0
    %467 = vmatpush.xpose.msra.mxu0 0.0
    %468 = vmatpush.xpose.msra.mxu0 0.0
    %469 = vmatpush.xpose.msra.mxu0 0.0
    %470 = vmatpush.xpose.msra.mxu0 0.0
    %471 = vmatpush.xpose.msra.mxu0 0.0
    %472 = vmatpush.xpose.msra.mxu0 0.0
    %473 = vmatpush.xpose.msra.mxu0 0.0
    %474 = vmatpush.xpose.msra.mxu0 0.0
    %475 = vmatpush.xpose.msra.mxu0 0.0
    %476 = vmatpush.xpose.msra.mxu0 %v348
    %477 = vmatmul.f32.gmra.mxu0 %v459
    %v478 = vpop.f32.mrf.mxu0
    %v479 = vadd.f32 0.0, %v478
    %480 = vdwg.mxu0
    %v481 = vmul.f32 %v456, 0.35355338
    %v482 = vmul.f32 %v479, 0.35355338
    %v483 = vadd.f32 %v481, %v374
    %v484 = vadd.f32 %v482, %v375
    %v485 = vsel %vm380, %v483, -inf
    %486 = vmax.xlane.f32.xlu0 %v485
    %v487 = vpop.xlane.xlu0 %486
    %v488 = vsel %vm380, %v484, -inf
    %489 = vmax.xlane.f32.xlu0 %v488
    %v490 = vpop.xlane.xlu0 %489
    %v491 = vsub.f32 %v483, %v487
    %v492 = vsub.f32 %v484, %v490
    %v493 = vmul.f32 %v491, 1.442695
    %v494 = vpow.pop %v493
    %v495 = vmul.f32 %v492, 1.442695
    %v496 = vpow.pop %v495
    %v497 = vsel %vm380, %v494, 0.0
    %498 = vadd.xlane.f32.xlu0 %v497
    %v499 = vpop.xlane.xlu0 %498
    %v500 = vsel %vm380, %v496, 0.0
    %501 = vadd.xlane.f32.xlu0 %v500
    %v502 = vpop.xlane.xlu0 %501
    %v503 = vrcp.pop %v499
    %v504 = vmul.f32 %v499, %v503
    %v505 = vsub.f32 1.0, %v504
    %v506 = vmul.f32 %v503, %v505
    %v507 = vadd.f32 %v503, %v506
    %vm508 = vweird.f32 %v499
    %vm509 = vweird.f32 %v503
    %vm510 = vmor %vm508, %vm509
    %v511 = vsel %vm510, %v503, %v507
    %v512 = vand.u32 2147483647, %v499
    %vm513 = vcmp.eq.f32.partialorder %v512, 8.507059e+37
    %v514 = vand.u32 %v499, 2147483648
    %v515 = vor.u32 1.1754944e-38, %v514
    %v516 = vsel %vm513, %v515, %v511
    %v517 = vmul.f32 %v494, %v516
    %v518 = vrcp.pop %v502
    %v519 = vmul.f32 %v502, %v518
    %v520 = vsub.f32 1.0, %v519
    %v521 = vmul.f32 %v518, %v520
    %v522 = vadd.f32 %v518, %v521
    %vm523 = vweird.f32 %v502
    %vm524 = vweird.f32 %v518
    %vm525 = vmor %vm523, %vm524
    %v526 = vsel %vm525, %v518, %v522
    %v527 = vand.u32 2147483647, %v502
    %vm528 = vcmp.eq.f32.partialorder %v527, 8.507059e+37
    %v529 = vand.u32 %v502, 2147483648
    %v530 = vor.u32 1.1754944e-38, %v529
    %v531 = vsel %vm528, %v530, %v526
    %v532 = vmul.f32 %v496, %v531
    %v533 = vmul.f32 %v309, %v432
    %v534 = vmul.f32 %v312, %v432
    %v536 = vsel %vm380, %v517, 0
    %538 = vmatpush.msra.mxu0 0.0
    %539 = vmatpush.msra.mxu0 0.0
    %540 = vmatpush.msra.mxu0 0.0
    %541 = vmatpush.msra.mxu0 0.0
    %542 = vmatpush.msra.mxu0 0.0
    %543 = vmatpush.msra.mxu0 0.0
    %544 = vmatpush.msra.mxu0 0.0
    %545 = vmatpush.msra.mxu0 0.0
    %546 = vmatpush.msra.mxu0 0.0
    %547 = vmatpush.msra.mxu0 0.0
    %548 = vmatpush.msra.mxu0 0.0
    %549 = vmatpush.msra.mxu0 0.0
    %550 = vmatpush.msra.mxu0 0.0
    %551 = vmatpush.msra.mxu0 0.0
    %552 = vmatpush.msra.mxu0 0.0
    %553 = vmatpush.msra.mxu0 %v533
    %554 = vmatmul.f32.gmra.mxu0 %v536
    %v555 = vpop.f32.mrf.mxu0
    %v556 = vadd.f32 0.0, %v555
    %557 = vdwg.mxu0
    %v559 = vsel %vm380, %v532, 0
    %561 = vmatpush.msra.mxu0 0.0
    %562 = vmatpush.msra.mxu0 0.0
    %563 = vmatpush.msra.mxu0 0.0
    %564 = vmatpush.msra.mxu0 0.0
    %565 = vmatpush.msra.mxu0 0.0
    %566 = vmatpush.msra.mxu0 0.0
    %567 = vmatpush.msra.mxu0 0.0
    %568 = vmatpush.msra.mxu0 0.0
    %569 = vmatpush.msra.mxu0 0.0
    %570 = vmatpush.msra.mxu0 0.0
    %571 = vmatpush.msra.mxu0 0.0
    %572 = vmatpush.msra.mxu0 0.0
    %573 = vmatpush.msra.mxu0 0.0
    %574 = vmatpush.msra.mxu0 0.0
    %575 = vmatpush.msra.mxu0 0.0
    %576 = vmatpush.msra.mxu0 %v534
    %577 = vmatmul.f32.gmra.mxu0 %v559
    %v578 = vpop.f32.mrf.mxu0
    %v579 = vadd.f32 0.0, %v578
    %580 = vdwg.mxu0
    %v582 = vsel %vm380, %v413, 0
    %584 = vmatpush.msra.mxu0 0.0
    %585 = vmatpush.msra.mxu0 0.0
    %586 = vmatpush.msra.mxu0 0.0
    %587 = vmatpush.msra.mxu0 0.0
    %588 = vmatpush.msra.mxu0 0.0
    %589 = vmatpush.msra.mxu0 0.0
    %590 = vmatpush.msra.mxu0 0.0
    %591 = vmatpush.msra.mxu0 0.0
    %592 = vmatpush.msra.mxu0 0.0
    %593 = vmatpush.msra.mxu0 0.0
    %594 = vmatpush.msra.mxu0 0.0
    %595 = vmatpush.msra.mxu0 0.0
    %596 = vmatpush.msra.mxu0 0.0
    %597 = vmatpush.msra.mxu0 0.0
    %598 = vmatpush.msra.mxu0 0.0
    %599 = vmatpush.msra.mxu0 %v429
    %600 = vmatmul.f32.gmra.mxu0 %v582
    %v601 = vpop.f32.mrf.mxu0
    %v602 = vadd.f32 %v556, %v601
    %603 = vdwg.mxu0
    %v605 = vsel %vm380, %v428, 0
    %607 = vmatpush.msra.mxu0 0.0
    %608 = vmatpush.msra.mxu0 0.0
    %609 = vmatpush.msra.mxu0 0.0
    %610 = vmatpush.msra.mxu0 0.0
    %611 = vmatpush.msra.mxu0 0.0
    %612 = vmatpush.msra.mxu0 0.0
    %613 = vmatpush.msra.mxu0 0.0
    %614 = vmatpush.msra.mxu0 0.0
    %615 = vmatpush.msra.mxu0 0.0
    %616 = vmatpush.msra.mxu0 0.0
    %617 = vmatpush.msra.mxu0 0.0
    %618 = vmatpush.msra.mxu0 0.0
    %619 = vmatpush.msra.mxu0 0.0
    %620 = vmatpush.msra.mxu0 0.0
    %621 = vmatpush.msra.mxu0 0.0
    %622 = vmatpush.msra.mxu0 %v430
    %623 = vmatmul.f32.gmra.mxu0 %v605
    %v624 = vpop.f32.mrf.mxu0
    %v625 = vadd.f32 %v579, %v624
    %626 = vdwg.mxu0
    %v627 = vld [vmem:[%s3 + $0xa] sm:$0x1]
    %v628 = vperm.slane %v627, 0
    %v629 = vmul.f32 %v249, %v628
    %v630 = vmul.f32 %v252, %v628
    %v632 = vsel %vm153, %v629, 0
    %634 = vmatpush.xpose.msra.mxu0 0.0
    %635 = vmatpush.xpose.msra.mxu0 0.0
    %636 = vmatpush.xpose.msra.mxu0 0.0
    %637 = vmatpush.xpose.msra.mxu0 0.0
    %638 = vmatpush.xpose.msra.mxu0 0.0
    %639 = vmatpush.xpose.msra.mxu0 0.0
    %640 = vmatpush.xpose.msra.mxu0 0.0
    %641 = vmatpush.xpose.msra.mxu0 0.0
    %642 = vmatpush.xpose.msra.mxu0 0.0
    %643 = vmatpush.xpose.msra.mxu0 0.0
    %644 = vmatpush.xpose.msra.mxu0 0.0
    %645 = vmatpush.xpose.msra.mxu0 0.0
    %646 = vmatpush.xpose.msra.mxu0 0.0
    %647 = vmatpush.xpose.msra.mxu0 0.0
    %648 = vmatpush.xpose.msra.mxu0 0.0
    %649 = vmatpush.xpose.msra.mxu0 %v322
    %650 = vmatmul.f32.gmra.mxu0 %v632
    %v651 = vpop.f32.mrf.mxu0
    %v652 = vadd.f32 0.0, %v651
    %653 = vdwg.mxu0
    %v655 = vsel %vm153, %v630, 0
    %657 = vmatpush.xpose.msra.mxu0 0.0
    %658 = vmatpush.xpose.msra.mxu0 0.0
    %659 = vmatpush.xpose.msra.mxu0 0.0
    %660 = vmatpush.xpose.msra.mxu0 0.0
    %661 = vmatpush.xpose.msra.mxu0 0.0
    %662 = vmatpush.xpose.msra.mxu0 0.0
    %663 = vmatpush.xpose.msra.mxu0 0.0
    %664 = vmatpush.xpose.msra.mxu0 0.0
    %665 = vmatpush.xpose.msra.mxu0 0.0
    %666 = vmatpush.xpose.msra.mxu0 0.0
    %667 = vmatpush.xpose.msra.mxu0 0.0
    %668 = vmatpush.xpose.msra.mxu0 0.0
    %669 = vmatpush.xpose.msra.mxu0 0.0
    %670 = vmatpush.xpose.msra.mxu0 0.0
    %671 = vmatpush.xpose.msra.mxu0 0.0
    %672 = vmatpush.xpose.msra.mxu0 %v348
    %673 = vmatmul.f32.gmra.mxu0 %v655
    %v674 = vpop.f32.mrf.mxu0
    %v675 = vadd.f32 0.0, %v674
    %676 = vdwg.mxu0
    %v677 = vmul.f32 %v652, 0.35355338
    %v678 = vmul.f32 %v675, 0.35355338
    %v679 = vadd.f32 %v677, %v374
    %v680 = vadd.f32 %v678, %v375
    %v681 = vsel %vm380, %v679, -inf
    %682 = vmax.xlane.f32.xlu0 %v681
    %v683 = vpop.xlane.xlu0 %682
    %v684 = vsel %vm380, %v680, -inf
    %685 = vmax.xlane.f32.xlu0 %v684
    %v686 = vpop.xlane.xlu0 %685
    %v687 = vsub.f32 %v679, %v683
    %v688 = vsub.f32 %v680, %v686
    %v689 = vmul.f32 %v687, 1.442695
    %v690 = vpow.pop %v689
    %v691 = vmul.f32 %v688, 1.442695
    %v692 = vpow.pop %v691
    %v693 = vsel %vm380, %v690, 0.0
    %694 = vadd.xlane.f32.xlu0 %v693
    %v695 = vpop.xlane.xlu0 %694
    %v696 = vsel %vm380, %v692, 0.0
    %697 = vadd.xlane.f32.xlu0 %v696
    %v698 = vpop.xlane.xlu0 %697
    %v699 = vrcp.pop %v695
    %v700 = vmul.f32 %v695, %v699
    %v701 = vsub.f32 1.0, %v700
    %v702 = vmul.f32 %v699, %v701
    %v703 = vadd.f32 %v699, %v702
    %vm704 = vweird.f32 %v695
    %vm705 = vweird.f32 %v699
    %vm706 = vmor %vm704, %vm705
    %v707 = vsel %vm706, %v699, %v703
    %v708 = vand.u32 2147483647, %v695
    %vm709 = vcmp.eq.f32.partialorder %v708, 8.507059e+37
    %v710 = vand.u32 %v695, 2147483648
    %v711 = vor.u32 1.1754944e-38, %v710
    %v712 = vsel %vm709, %v711, %v707
    %v713 = vmul.f32 %v690, %v712
    %v714 = vrcp.pop %v698
    %v715 = vmul.f32 %v698, %v714
    %v716 = vsub.f32 1.0, %v715
    %v717 = vmul.f32 %v714, %v716
    %v718 = vadd.f32 %v714, %v717
    %vm719 = vweird.f32 %v698
    %vm720 = vweird.f32 %v714
    %vm721 = vmor %vm719, %vm720
    %v722 = vsel %vm721, %v714, %v718
    %v723 = vand.u32 2147483647, %v698
    %vm724 = vcmp.eq.f32.partialorder %v723, 8.507059e+37
    %v725 = vand.u32 %v698, 2147483648
    %v726 = vor.u32 1.1754944e-38, %v725
    %v727 = vsel %vm724, %v726, %v722
    %v728 = vmul.f32 %v692, %v727
    %v729 = vmul.f32 %v309, %v628
    %v730 = vmul.f32 %v312, %v628
    %v732 = vsel %vm380, %v713, 0
    %734 = vmatpush.msra.mxu0 0.0
    %735 = vmatpush.msra.mxu0 0.0
    %736 = vmatpush.msra.mxu0 0.0
    %737 = vmatpush.msra.mxu0 0.0
    %738 = vmatpush.msra.mxu0 0.0
    %739 = vmatpush.msra.mxu0 0.0
    %740 = vmatpush.msra.mxu0 0.0
    %741 = vmatpush.msra.mxu0 0.0
    %742 = vmatpush.msra.mxu0 0.0
    %743 = vmatpush.msra.mxu0 0.0
    %744 = vmatpush.msra.mxu0 0.0
    %745 = vmatpush.msra.mxu0 0.0
    %746 = vmatpush.msra.mxu0 0.0
    %747 = vmatpush.msra.mxu0 0.0
    %748 = vmatpush.msra.mxu0 0.0
    %749 = vmatpush.msra.mxu0 %v729
    %750 = vmatmul.f32.gmra.mxu0 %v732
    %v751 = vpop.f32.mrf.mxu0
    %v752 = vadd.f32 0.0, %v751
    %753 = vdwg.mxu0
    %v755 = vsel %vm380, %v728, 0
    %757 = vmatpush.msra.mxu0 0.0
    %758 = vmatpush.msra.mxu0 0.0
    %759 = vmatpush.msra.mxu0 0.0
    %760 = vmatpush.msra.mxu0 0.0
    %761 = vmatpush.msra.mxu0 0.0
    %762 = vmatpush.msra.mxu0 0.0
    %763 = vmatpush.msra.mxu0 0.0
    %764 = vmatpush.msra.mxu0 0.0
    %765 = vmatpush.msra.mxu0 0.0
    %766 = vmatpush.msra.mxu0 0.0
    %767 = vmatpush.msra.mxu0 0.0
    %768 = vmatpush.msra.mxu0 0.0
    %769 = vmatpush.msra.mxu0 0.0
    %770 = vmatpush.msra.mxu0 0.0
    %771 = vmatpush.msra.mxu0 0.0
    %772 = vmatpush.msra.mxu0 %v730
    %773 = vmatmul.f32.gmra.mxu0 %v755
    %v774 = vpop.f32.mrf.mxu0
    %v775 = vadd.f32 0.0, %v774
    %776 = vdwg.mxu0
    %v777 = vadd.f32 %v602, %v752
    %v778 = vadd.f32 %v625, %v775
    %v779 = vld [vmem:[%s3 + $0xb] sm:$0x1]
    %v780 = vperm.slane %v779, 0
    %v781 = vmul.f32 %v249, %v780
    %v782 = vmul.f32 %v252, %v780
    %v784 = vsel %vm153, %v781, 0
    %786 = vmatpush.xpose.msra.mxu0 0.0
    %787 = vmatpush.xpose.msra.mxu0 0.0
    %788 = vmatpush.xpose.msra.mxu0 0.0
    %789 = vmatpush.xpose.msra.mxu0 0.0
    %790 = vmatpush.xpose.msra.mxu0 0.0
    %791 = vmatpush.xpose.msra.mxu0 0.0
    %792 = vmatpush.xpose.msra.mxu0 0.0
    %793 = vmatpush.xpose.msra.mxu0 0.0
    %794 = vmatpush.xpose.msra.mxu0 0.0
    %795 = vmatpush.xpose.msra.mxu0 0.0
    %796 = vmatpush.xpose.msra.mxu0 0.0
    %797 = vmatpush.xpose.msra.mxu0 0.0
    %798 = vmatpush.xpose.msra.mxu0 0.0
    %799 = vmatpush.xpose.msra.mxu0 0.0
    %800 = vmatpush.xpose.msra.mxu0 0.0
    %801 = vmatpush.xpose.msra.mxu0 %v322
    %802 = vmatmul.f32.gmra.mxu0 %v784
    %v803 = vpop.f32.mrf.mxu0
    %v804 = vadd.f32 0.0, %v803
    %805 = vdwg.mxu0
    %v807 = vsel %vm153, %v782, 0
    %809 = vmatpush.xpose.msra.mxu0 0.0
    %810 = vmatpush.xpose.msra.mxu0 0.0
    %811 = vmatpush.xpose.msra.mxu0 0.0
    %812 = vmatpush.xpose.msra.mxu0 0.0
    %813 = vmatpush.xpose.msra.mxu0 0.0
    %814 = vmatpush.xpose.msra.mxu0 0.0
    %815 = vmatpush.xpose.msra.mxu0 0.0
    %816 = vmatpush.xpose.msra.mxu0 0.0
    %817 = vmatpush.xpose.msra.mxu0 0.0
    %818 = vmatpush.xpose.msra.mxu0 0.0
    %819 = vmatpush.xpose.msra.mxu0 0.0
    %820 = vmatpush.xpose.msra.mxu0 0.0
    %821 = vmatpush.xpose.msra.mxu0 0.0
    %822 = vmatpush.xpose.msra.mxu0 0.0
    %823 = vmatpush.xpose.msra.mxu0 0.0
    %824 = vmatpush.xpose.msra.mxu0 %v348
    %825 = vmatmul.f32.gmra.mxu0 %v807
    %v826 = vpop.f32.mrf.mxu0
    %v827 = vadd.f32 0.0, %v826
    %828 = vdwg.mxu0
    %v829 = vmul.f32 %v804, 0.35355338
    %v830 = vmul.f32 %v827, 0.35355338
    %v831 = vadd.f32 %v829, %v374
    %v832 = vadd.f32 %v830, %v375
    %v833 = vsel %vm380, %v831, -inf
    %834 = vmax.xlane.f32.xlu0 %v833
    %v835 = vpop.xlane.xlu0 %834
    %v836 = vsel %vm380, %v832, -inf
    %837 = vmax.xlane.f32.xlu0 %v836
    %v838 = vpop.xlane.xlu0 %837
    %v839 = vsub.f32 %v831, %v835
    %v840 = vsub.f32 %v832, %v838
    %v841 = vmul.f32 %v839, 1.442695
    %v842 = vpow.pop %v841
    %v843 = vmul.f32 %v840, 1.442695
    %v844 = vpow.pop %v843
    %v845 = vsel %vm380, %v842, 0.0
    %846 = vadd.xlane.f32.xlu0 %v845
    %v847 = vpop.xlane.xlu0 %846
    %v848 = vsel %vm380, %v844, 0.0
    %849 = vadd.xlane.f32.xlu0 %v848
    %v850 = vpop.xlane.xlu0 %849
    %v851 = vrcp.pop %v847
    %v852 = vmul.f32 %v847, %v851
    %v853 = vsub.f32 1.0, %v852
    %v854 = vmul.f32 %v851, %v853
    %v855 = vadd.f32 %v851, %v854
    %vm856 = vweird.f32 %v847
    %vm857 = vweird.f32 %v851
    %vm858 = vmor %vm856, %vm857
    %v859 = vsel %vm858, %v851, %v855
    %v860 = vand.u32 2147483647, %v847
    %vm861 = vcmp.eq.f32.partialorder %v860, 8.507059e+37
    %v862 = vand.u32 %v847, 2147483648
    %v863 = vor.u32 1.1754944e-38, %v862
    %v864 = vsel %vm861, %v863, %v859
    %v865 = vmul.f32 %v842, %v864
    %v866 = vrcp.pop %v850
    %v867 = vmul.f32 %v850, %v866
    %v868 = vsub.f32 1.0, %v867
    %v869 = vmul.f32 %v866, %v868
    %v870 = vadd.f32 %v866, %v869
    %vm871 = vweird.f32 %v850
    %vm872 = vweird.f32 %v866
    %vm873 = vmor %vm871, %vm872
    %v874 = vsel %vm873, %v866, %v870
    %v875 = vand.u32 2147483647, %v850
    %vm876 = vcmp.eq.f32.partialorder %v875, 8.507059e+37
    %v877 = vand.u32 %v850, 2147483648
    %v878 = vor.u32 1.1754944e-38, %v877
    %v879 = vsel %vm876, %v878, %v874
    %v880 = vmul.f32 %v844, %v879
    %v881 = vmul.f32 %v309, %v780
    %v882 = vmul.f32 %v312, %v780
    %v884 = vsel %vm380, %v865, 0
    %886 = vmatpush.msra.mxu0 0.0
    %887 = vmatpush.msra.mxu0 0.0
    %888 = vmatpush.msra.mxu0 0.0
    %889 = vmatpush.msra.mxu0 0.0
    %890 = vmatpush.msra.mxu0 0.0
    %891 = vmatpush.msra.mxu0 0.0
    %892 = vmatpush.msra.mxu0 0.0
    %893 = vmatpush.msra.mxu0 0.0
    %894 = vmatpush.msra.mxu0 0.0
    %895 = vmatpush.msra.mxu0 0.0
    %896 = vmatpush.msra.mxu0 0.0
    %897 = vmatpush.msra.mxu0 0.0
    %898 = vmatpush.msra.mxu0 0.0
    %899 = vmatpush.msra.mxu0 0.0
    %900 = vmatpush.msra.mxu0 0.0
    %901 = vmatpush.msra.mxu0 %v881
    %902 = vmatmul.f32.gmra.mxu0 %v884
    %v903 = vpop.f32.mrf.mxu0
    %v904 = vadd.f32 0.0, %v903
    %905 = vdwg.mxu0
    %v907 = vsel %vm380, %v880, 0
    %909 = vmatpush.msra.mxu0 0.0
    %910 = vmatpush.msra.mxu0 0.0
    %911 = vmatpush.msra.mxu0 0.0
    %912 = vmatpush.msra.mxu0 0.0
    %913 = vmatpush.msra.mxu0 0.0
    %914 = vmatpush.msra.mxu0 0.0
    %915 = vmatpush.msra.mxu0 0.0
    %916 = vmatpush.msra.mxu0 0.0
    %917 = vmatpush.msra.mxu0 0.0
    %918 = vmatpush.msra.mxu0 0.0
    %919 = vmatpush.msra.mxu0 0.0
    %920 = vmatpush.msra.mxu0 0.0
    %921 = vmatpush.msra.mxu0 0.0
    %922 = vmatpush.msra.mxu0 0.0
    %923 = vmatpush.msra.mxu0 0.0
    %924 = vmatpush.msra.mxu0 %v882
    %925 = vmatmul.f32.gmra.mxu0 %v907
    %v926 = vpop.f32.mrf.mxu0
    %v927 = vadd.f32 0.0, %v926
    %928 = vdwg.mxu0
    %v929 = vadd.f32 %v777, %v904
    %v930 = vadd.f32 %v778, %v927
    %v931 = vld [vmem:[%s6] sm:$0xff]
    %v932 = vld [vmem:[%s6 + $0x8] sm:$0xff]
    %v933 = vld [vmem:[%s6 + $0x10] sm:$0xff]
    %v934 = vld [vmem:[%s6 + $0x18] sm:$0xff]
    %v935 = vld [vmem:[%s4 + $0x3] sm:$0x1]
    %v936 = vperm.slane %v935, 0
    %v938 = vsel %vm153, %v929, 0
    %v941 = vsel %vm153, %v930, 0
    %943 = vmatpush.msra.mxu0 0.0
    %944 = vmatpush.msra.mxu0 0.0
    %945 = vmatpush.msra.mxu0 0.0
    %946 = vmatpush.msra.mxu0 0.0
    %947 = vmatpush.msra.mxu0 0.0
    %948 = vmatpush.msra.mxu0 0.0
    %949 = vmatpush.msra.mxu0 0.0
    %950 = vmatpush.msra.mxu0 0.0
    %951 = vmatpush.msra.mxu0 0.0
    %952 = vmatpush.msra.mxu0 0.0
    %953 = vmatpush.msra.mxu0 0.0
    %954 = vmatpush.msra.mxu0 0.0
    %955 = vmatpush.msra.mxu0 %v934
    %956 = vmatpush.msra.mxu0 %v933
    %957 = vmatpush.msra.mxu0 %v932
    %958 = vmatpush.msra.mxu0 %v931
    %959 = vmatmul.f32.gmra.mxu0 %v938
    %v960 = vpop.f32.mrf.mxu0
    %v961 = vadd.f32 %v936, %v960
    %962 = vmatmul.f32.gmra.mxu0 %v941
    %v963 = vpop.f32.mrf.mxu0
    %v964 = vadd.f32 %v936, %v963
    %965 = vdwg.mxu0
    %v966 = vadd.f32 %v209, %v961
    %v967 = vadd.f32 %v210, %v964
    %v968 = vld [vmem:[%s4 + $0x6] sm:$0x1]
    %v969 = vld [vmem:[%s4 + $0x7] sm:$0x1]
    %v970 = vsel %vm153, %v966, 0.0
    %971 = vadd.xlane.f32.xlu0 %v970
    %v972 = vpop.xlane.xlu0 %971
    %v973 = vsel %vm153, %v967, 0.0
    %974 = vadd.xlane.f32.xlu0 %v973
    %v975 = vpop.xlane.xlu0 %974
    %v976 = vmul.f32 %v972, %v166
    %v977 = vmul.f32 %v975, %v166
    %v978 = vsub.f32 %v966, %v976
    %v979 = vsub.f32 %v967, %v977
    %v980 = vmul.f32 %v978, %v978
    %v981 = vmul.f32 %v979, %v979
    %v982 = vsel %vm153, %v980, 0.0
    %983 = vadd.xlane.f32.xlu0 %v982
    %v984 = vpop.xlane.xlu0 %983
    %v985 = vsel %vm153, %v981, 0.0
    %986 = vadd.xlane.f32.xlu0 %v985
    %v987 = vpop.xlane.xlu0 %986
    %v988 = vmul.f32 %v984, %v166
    %v989 = vmul.f32 %v987, %v166
    %v990 = vadd.f32 %v988, 1e-12
    %v991 = vadd.f32 %v989, 1e-12
    %v992 = vrsqrt.pop %v990
    %v993 = vmul.f32 %v992, %v990
    %v994 = vmul.f32 %v993, %v992
    %v995 = vmul.f32 0.5, %v994
    %v996 = vsub.f32 1.5, %v995
    %v997 = vmul.f32 %v992, %v996
    %vm998 = vweird.f32 %v990
    %vm999 = vweird.f32 %v992
    %vm1000 = vmor %vm998, %vm999
    %v1001 = vsel %vm1000, %v992, %v997
    %v1002 = vrsqrt.pop %v991
    %v1003 = vmul.f32 %v1002, %v991
    %v1004 = vmul.f32 %v1003, %v1002
    %v1005 = vmul.f32 0.5, %v1004
    %v1006 = vsub.f32 1.5, %v1005
    %v1007 = vmul.f32 %v1002, %v1006
    %vm1008 = vweird.f32 %v991
    %vm1009 = vweird.f32 %v1002
    %vm1010 = vmor %vm1008, %vm1009
    %v1011 = vsel %vm1010, %v1002, %v1007
    %v1012 = vmul.f32 %v978, %v1001
    %v1013 = vmul.f32 %v979, %v1011
    %v1014 = vperm.slane %v968, 0
    %v1015 = vmul.f32 %v1012, %v1014
    %v1016 = vmul.f32 %v1013, %v1014
    %v1017 = vperm.slane %v969, 0
    %v1018 = vadd.f32 %v1015, %v1017
    %v1019 = vadd.f32 %v1016, %v1017
    %v1020 = vld [vmem:[#allocation2] sm:$0xff]
    %v1021 = vld [vmem:[#allocation2 + $0x8] sm:$0xff]
    %v1022 = vld [vmem:[#allocation2 + $0x10] sm:$0xff]
    %v1023 = vld [vmem:[#allocation2 + $0x18] sm:$0xff]
    %v1024 = vld [vmem:[%s4 + $0x4] sm:$0x1]
    %v1025 = vperm.slane %v1024, 0
    %v1027 = vsel %vm153, %v1018, 0
    %v1030 = vsel %vm153, %v1019, 0
    %1032 = vmatpush.msra.mxu0 0.0
    %1033 = vmatpush.msra.mxu0 0.0
    %1034 = vmatpush.msra.mxu0 0.0
    %1035 = vmatpush.msra.mxu0 0.0
    %1036 = vmatpush.msra.mxu0 0.0
    %1037 = vmatpush.msra.mxu0 0.0
    %1038 = vmatpush.msra.mxu0 0.0
    %1039 = vmatpush.msra.mxu0 0.0
    %1040 = vmatpush.msra.mxu0 0.0
    %1041 = vmatpush.msra.mxu0 0.0
    %1042 = vmatpush.msra.mxu0 0.0
    %1043 = vmatpush.msra.mxu0 0.0
    %1044 = vmatpush.msra.mxu0 %v1023
    %1045 = vmatpush.msra.mxu0 %v1022
    %1046 = vmatpush.msra.mxu0 %v1021
    %1047 = vmatpush.msra.mxu0 %v1020
    %1048 = vmatmul.f32.gmra.mxu0 %v1027
    %v1049 = vpop.f32.mrf.mxu0
    %v1050 = vadd.f32 %v1025, %v1049
    %1051 = vmatmul.f32.gmra.mxu0 %v1030
    %v1052 = vpop.f32.mrf.mxu0
    %v1053 = vadd.f32 %v1025, %v1052
    %1054 = vdwg.mxu0
    %v1055 = vmul.f32 %v1050, 0.5
    %v1056 = vmul.f32 %v1053, 0.5
    %v1057 = vmul.f32 %v1050, 0.044715
    %v1058 = vmul.f32 %v1053, 0.044715
    %v1059 = vmul.f32 %v1057, %v1050
    %v1060 = vmul.f32 %v1058, %v1053
    %v1061 = vmul.f32 %v1059, %v1050
    %v1062 = vmul.f32 %v1060, %v1053
    %v1063 = vadd.f32 %v1050, %v1061
    %v1064 = vadd.f32 %v1053, %v1062
    %v1065 = vmul.f32 %v1063, 0.7978846
    %v1066 = vmul.f32 %v1064, 0.7978846
    %v1067 = vtanh.pop %v1065
    %v1068 = vtanh.pop %v1066
    %v1069 = vadd.f32 %v1067, 1.0
    %v1070 = vadd.f32 %v1068, 1.0
    %v1071 = vmul.f32 %v1055, %v1069
    %v1072 = vmul.f32 %v1056, %v1070
    %v1073 = vld [vmem:[%s8] sm:$0xff]
    %v1074 = vld [vmem:[%s8 + $0x8] sm:$0xff]
    %v1075 = vld [vmem:[%s8 + $0x10] sm:$0xff]
    %v1076 = vld [vmem:[%s8 + $0x18] sm:$0xff]
    %v1077 = vld [vmem:[%s8 + $0x20] sm:$0xff]
    %v1078 = vld [vmem:[%s8 + $0x28] sm:$0xff]
    %v1079 = vld [vmem:[%s8 + $0x30] sm:$0xff]
    %v1080 = vld [vmem:[%s8 + $0x38] sm:$0xff]
    %v1081 = vld [vmem:[%s4 + $0x5] sm:$0x1]
    %v1082 = vperm.slane %v1081, 0
    %vm1083 = vcmask 523264
    %v1085 = vsel %vm1083, %v1071, 0
    %v1088 = vsel %vm1083, %v1072, 0
    %1090 = vmatpush.msra.mxu0 0.0
    %1091 = vmatpush.msra.mxu0 0.0
    %1092 = vmatpush.msra.mxu0 0.0
    %1093 = vmatpush.msra.mxu0 0.0
    %1094 = vmatpush.msra.mxu0 0.0
    %1095 = vmatpush.msra.mxu0 0.0
    %1096 = vmatpush.msra.mxu0 0.0
    %1097 = vmatpush.msra.mxu0 0.0
    %1098 = vmatpush.msra.mxu0 %v1080
    %1099 = vmatpush.msra.mxu0 %v1079
    %1100 = vmatpush.msra.mxu0 %v1078
    %1101 = vmatpush.msra.mxu0 %v1077
    %1102 = vmatpush.msra.mxu0 %v1076
    %1103 = vmatpush.msra.mxu0 %v1075
    %1104 = vmatpush.msra.mxu0 %v1074
    %1105 = vmatpush.msra.mxu0 %v1073
    %1106 = vmatmul.f32.gmra.mxu0 %v1085
    %v1107 = vpop.f32.mrf.mxu0
    %v1108 = vadd.f32 %v1082, %v1107
    %1109 = vmatmul.f32.gmra.mxu0 %v1088
    %v1110 = vpop.f32.mrf.mxu0
    %v1111 = vadd.f32 %v1082, %v1110
    %1112 = vdwg.mxu0
    %v1113 = vadd.f32 %v1018, %v1108
    %v1114 = vadd.f32 %v1019, %v1111
    %v1115 = vld [vmem:[%s4 + $0x8] sm:$0x1]
    %v1116 = vld [vmem:[%s4 + $0x9] sm:$0x1]
    %v1117 = vsel %vm153, %v1113, 0.0
    %1118 = vadd.xlane.f32.xlu0 %v1117
    %v1119 = vpop.xlane.xlu0 %1118
    %v1120 = vsel %vm153, %v1114, 0.0
    %1121 = vadd.xlane.f32.xlu0 %v1120
    %v1122 = vpop.xlane.xlu0 %1121
    %v1123 = vmul.f32 %v1119, %v166
    %v1124 = vmul.f32 %v1122, %v166
    %v1125 = vsub.f32 %v1113, %v1123
    %v1126 = vsub.f32 %v1114, %v1124
    %v1127 = vmul.f32 %v1125, %v1125
    %v1128 = vmul.f32 %v1126, %v1126
    %v1129 = vsel %vm153, %v1127, 0.0
    %1130 = vadd.xlane.f32.xlu0 %v1129
    %v1131 = vpop.xlane.xlu0 %1130
    %v1132 = vsel %vm153, %v1128, 0.0
    %1133 = vadd.xlane.f32.xlu0 %v1132
    %v1134 = vpop.xlane.xlu0 %1133
    %v1135 = vmul.f32 %v1131, %v166
    %v1136 = vmul.f32 %v1134, %v166
    %v1137 = vadd.f32 %v1135, 1e-12
    %v1138 = vadd.f32 %v1136, 1e-12
    %v1139 = vrsqrt.pop %v1137
    %v1140 = vmul.f32 %v1139, %v1137
    %v1141 = vmul.f32 %v1140, %v1139
    %v1142 = vmul.f32 0.5, %v1141
    %v1143 = vsub.f32 1.5, %v1142
    %v1144 = vmul.f32 %v1139, %v1143
    %vm1145 = vweird.f32 %v1137
    %vm1146 = vweird.f32 %v1139
    %vm1147 = vmor %vm1145, %vm1146
    %v1148 = vsel %vm1147, %v1139, %v1144
    %v1149 = vrsqrt.pop %v1138
    %v1150 = vmul.f32 %v1149, %v1138
    %v1151 = vmul.f32 %v1150, %v1149
    %v1152 = vmul.f32 0.5, %v1151
    %v1153 = vsub.f32 1.5, %v1152
    %v1154 = vmul.f32 %v1149, %v1153
    %vm1155 = vweird.f32 %v1138
    %vm1156 = vweird.f32 %v1149
    %vm1157 = vmor %vm1155, %vm1156
    %v1158 = vsel %vm1157, %v1149, %v1154
    %v1159 = vmul.f32 %v1125, %v1148
    %v1160 = vmul.f32 %v1126, %v1158
    %v1161 = vperm.slane %v1115, 0
    %v1162 = vmul.f32 %v1159, %v1161
    %v1163 = vmul.f32 %v1160, %v1161
    %v1164 = vperm.slane %v1116, 0
    %v1165 = vadd.f32 %v1162, %v1164
    %v1166 = vadd.f32 %v1163, %v1164
    %s1167 = scalar_lea.vmem %s5, 96
    %v1168 = vld [vmem:[%s1167] sm:$0xff]
    %v1169 = vld [vmem:[%s1167 + $0x8] sm:$0xff]
    %v1170 = vld [vmem:[%s1167 + $0x10] sm:$0xff]
    %v1171 = vld [vmem:[%s1167 + $0x18] sm:$0xff]
    %s1172 = scalar_lea.vmem %s4, 16
    %v1173 = vld [vmem:[%s1172] sm:$0x1]
    %v1174 = vperm.slane %v1173, 0
    %v1176 = vsel %vm153, %v1165, 0
    %v1179 = vsel %vm153, %v1166, 0
    %1181 = vmatpush.msra.mxu0 0.0
    %1182 = vmatpush.msra.mxu0 0.0
    %1183 = vmatpush.msra.mxu0 0.0
    %1184 = vmatpush.msra.mxu0 0.0
    %1185 = vmatpush.msra.mxu0 0.0
    %1186 = vmatpush.msra.mxu0 0.0
    %1187 = vmatpush.msra.mxu0 0.0
    %1188 = vmatpush.msra.mxu0 0.0
    %1189 = vmatpush.msra.mxu0 0.0
    %1190 = vmatpush.msra.mxu0 0.0
    %1191 = vmatpush.msra.mxu0 0.0
    %1192 = vmatpush.msra.mxu0 0.0
    %1193 = vmatpush.msra.mxu0 %v1171
    %1194 = vmatpush.msra.mxu0 %v1170
    %1195 = vmatpush.msra.mxu0 %v1169
    %1196 = vmatpush.msra.mxu0 %v1168
    %1197 = vmatmul.f32.gmra.mxu0 %v1176
    %v1198 = vpop.f32.mrf.mxu0
    %v1199 = vadd.f32 %v1174, %v1198
    %1200 = vmatmul.f32.gmra.mxu0 %v1179
    %v1201 = vpop.f32.mrf.mxu0
    %v1202 = vadd.f32 %v1174, %v1201
    %1203 = vdwg.mxu0
    %s1204 = scalar_lea.vmem %s5, 128
    %v1205 = vld [vmem:[%s1204] sm:$0xff]
    %v1206 = vld [vmem:[%s1204 + $0x8] sm:$0xff]
    %v1207 = vld [vmem:[%s1204 + $0x10] sm:$0xff]
    %v1208 = vld [vmem:[%s1204 + $0x18] sm:$0xff]
    %v1209 = vld [vmem:[%s1172 + $0x1] sm:$0x1]
    %v1210 = vperm.slane %v1209, 0
    %1211 = vmatpush.msra.mxu0 0.0
    %1212 = vmatpush.msra.mxu0 0.0
    %1213 = vmatpush.msra.mxu0 0.0
    %1214 = vmatpush.msra.mxu0 0.0
    %1215 = vmatpush.msra.mxu0 0.0
    %1216 = vmatpush.msra.mxu0 0.0
    %1217 = vmatpush.msra.mxu0 0.0
    %1218 = vmatpush.msra.mxu0 0.0
    %1219 = vmatpush.msra.mxu0 0.0
    %1220 = vmatpush.msra.mxu0 0.0
    %1221 = vmatpush.msra.mxu0 0.0
    %1222 = vmatpush.msra.mxu0 0.0
    %1223 = vmatpush.msra.mxu0 %v1208
    %1224 = vmatpush.msra.mxu0 %v1207
    %1225 = vmatpush.msra.mxu0 %v1206
    %1226 = vmatpush.msra.mxu0 %v1205
    %1227 = vmatmul.f32.gmra.mxu0 %v1176
    %v1228 = vpop.f32.mrf.mxu0
    %v1229 = vadd.f32 %v1210, %v1228
    %1230 = vmatmul.f32.gmra.mxu0 %v1179
    %v1231 = vpop.f32.mrf.mxu0
    %v1232 = vadd.f32 %v1210, %v1231
    %1233 = vdwg.mxu0
    %s1234 = scalar_lea.vmem %s5, 160
    %v1235 = vld [vmem:[%s1234] sm:$0xff]
    %v1236 = vld [vmem:[%s1234 + $0x8] sm:$0xff]
    %v1237 = vld [vmem:[%s1234 + $0x10] sm:$0xff]
    %v1238 = vld [vmem:[%s1234 + $0x18] sm:$0xff]
    %v1239 = vld [vmem:[%s1172 + $0x2] sm:$0x1]
    %v1240 = vperm.slane %v1239, 0
    %1241 = vmatpush.msra.mxu0 0.0
    %1242 = vmatpush.msra.mxu0 0.0
    %1243 = vmatpush.msra.mxu0 0.0
    %1244 = vmatpush.msra.mxu0 0.0
    %1245 = vmatpush.msra.mxu0 0.0
    %1246 = vmatpush.msra.mxu0 0.0
    %1247 = vmatpush.msra.mxu0 0.0
    %1248 = vmatpush.msra.mxu0 0.0
    %1249 = vmatpush.msra.mxu0 0.0
    %1250 = vmatpush.msra.mxu0 0.0
    %1251 = vmatpush.msra.mxu0 0.0
    %1252 = vmatpush.msra.mxu0 0.0
    %1253 = vmatpush.msra.mxu0 %v1238
    %1254 = vmatpush.msra.mxu0 %v1237
    %1255 = vmatpush.msra.mxu0 %v1236
    %1256 = vmatpush.msra.mxu0 %v1235
    %1257 = vmatmul.f32.gmra.mxu0 %v1176
    %v1258 = vpop.f32.mrf.mxu0
    %v1259 = vadd.f32 %v1240, %v1258
    %1260 = vmatmul.f32.gmra.mxu0 %v1179
    %v1261 = vpop.f32.mrf.mxu0
    %v1262 = vadd.f32 %v1240, %v1261
    %1263 = vdwg.mxu0
    %v1264 = vld [vmem:[%s3 + $0x8] sm:$0x1]
    %v1265 = vperm.slane %v1264, 0
    %v1266 = vmul.f32 %v1199, %v1265
    %v1267 = vmul.f32 %v1202, %v1265
    %v1269 = vsel %vm153, %v1266, 0
    %v1272 = vsel %vm153, %v1229, 0
    %1274 = vmatpush.xpose.msra.mxu0 0.0
    %1275 = vmatpush.xpose.msra.mxu0 0.0
    %1276 = vmatpush.xpose.msra.mxu0 0.0
    %1277 = vmatpush.xpose.msra.mxu0 0.0
    %1278 = vmatpush.xpose.msra.mxu0 0.0
    %1279 = vmatpush.xpose.msra.mxu0 0.0
    %1280 = vmatpush.xpose.msra.mxu0 0.0
    %1281 = vmatpush.xpose.msra.mxu0 0.0
    %1282 = vmatpush.xpose.msra.mxu0 0.0
    %1283 = vmatpush.xpose.msra.mxu0 0.0
    %1284 = vmatpush.xpose.msra.mxu0 0.0
    %1285 = vmatpush.xpose.msra.mxu0 0.0
    %1286 = vmatpush.xpose.msra.mxu0 0.0
    %1287 = vmatpush.xpose.msra.mxu0 0.0
    %1288 = vmatpush.xpose.msra.mxu0 0.0
    %1289 = vmatpush.xpose.msra.mxu0 %v1272
    %1290 = vmatmul.f32.gmra.mxu0 %v1269
    %v1291 = vpop.f32.mrf.mxu0
    %v1292 = vadd.f32 0.0, %v1291
    %1293 = vdwg.mxu0
    %v1295 = vsel %vm153, %v1267, 0
    %v1298 = vsel %vm153, %v1232, 0
    %1300 = vmatpush.xpose.msra.mxu0 0.0
    %1301 = vmatpush.xpose.msra.mxu0 0.0
    %1302 = vmatpush.xpose.msra.mxu0 0.0
    %1303 = vmatpush.xpose.msra.mxu0 0.0
    %1304 = vmatpush.xpose.msra.mxu0 0.0
    %1305 = vmatpush.xpose.msra.mxu0 0.0
    %1306 = vmatpush.xpose.msra.mxu0 0.0
    %1307 = vmatpush.xpose.msra.mxu0 0.0
    %1308 = vmatpush.xpose.msra.mxu0 0.0
    %1309 = vmatpush.xpose.msra.mxu0 0.0
    %1310 = vmatpush.xpose.msra.mxu0 0.0
    %1311 = vmatpush.xpose.msra.mxu0 0.0
    %1312 = vmatpush.xpose.msra.mxu0 0.0
    %1313 = vmatpush.xpose.msra.mxu0 0.0
    %1314 = vmatpush.xpose.msra.mxu0 0.0
    %1315 = vmatpush.xpose.msra.mxu0 %v1298
    %1316 = vmatmul.f32.gmra.mxu0 %v1295
    %v1317 = vpop.f32.mrf.mxu0
    %v1318 = vadd.f32 0.0, %v1317
    %1319 = vdwg.mxu0
    %v1320 = vmul.f32 %v1292, 0.35355338
    %v1321 = vmul.f32 %v1318, 0.35355338
    %v1322 = vadd.f32 %v1320, %v374
    %v1323 = vadd.f32 %v1321, %v375
    %v1324 = vsel %vm380, %v1322, -inf
    %1325 = vmax.xlane.f32.xlu0 %v1324
    %v1326 = vpop.xlane.xlu0 %1325
    %v1327 = vsel %vm380, %v1323, -inf
    %1328 = vmax.xlane.f32.xlu0 %v1327
    %v1329 = vpop.xlane.xlu0 %1328
    %v1330 = vsub.f32 %v1322, %v1326
    %v1331 = vsub.f32 %v1323, %v1329
    %v1332 = vmul.f32 %v1330, 1.442695
    %v1333 = vpow.pop %v1332
    %v1334 = vmul.f32 %v1331, 1.442695
    %v1335 = vpow.pop %v1334
    %v1336 = vsel %vm380, %v1333, 0.0
    %1337 = vadd.xlane.f32.xlu0 %v1336
    %v1338 = vpop.xlane.xlu0 %1337
    %v1339 = vsel %vm380, %v1335, 0.0
    %1340 = vadd.xlane.f32.xlu0 %v1339
    %v1341 = vpop.xlane.xlu0 %1340
    %v1342 = vrcp.pop %v1338
    %v1343 = vmul.f32 %v1338, %v1342
    %v1344 = vsub.f32 1.0, %v1343
    %v1345 = vmul.f32 %v1342, %v1344
    %v1346 = vadd.f32 %v1342, %v1345
    %vm1347 = vweird.f32 %v1338
    %vm1348 = vweird.f32 %v1342
    %vm1349 = vmor %vm1347, %vm1348
    %v1350 = vsel %vm1349, %v1342, %v1346
    %v1351 = vand.u32 2147483647, %v1338
    %vm1352 = vcmp.eq.f32.partialorder %v1351, 8.507059e+37
    %v1353 = vand.u32 %v1338, 2147483648
    %v1354 = vor.u32 1.1754944e-38, %v1353
    %v1355 = vsel %vm1352, %v1354, %v1350
    %v1356 = vmul.f32 %v1333, %v1355
    %v1357 = vrcp.pop %v1341
    %v1358 = vmul.f32 %v1341, %v1357
    %v1359 = vsub.f32 1.0, %v1358
    %v1360 = vmul.f32 %v1357, %v1359
    %v1361 = vadd.f32 %v1357, %v1360
    %vm1362 = vweird.f32 %v1341
    %vm1363 = vweird.f32 %v1357
    %vm1364 = vmor %vm1362, %vm1363
    %v1365 = vsel %vm1364, %v1357, %v1361
    %v1366 = vand.u32 2147483647, %v1341
    %vm1367 = vcmp.eq.f32.partialorder %v1366, 8.507059e+37
    %v1368 = vand.u32 %v1341, 2147483648
    %v1369 = vor.u32 1.1754944e-38, %v1368
    %v1370 = vsel %vm1367, %v1369, %v1365
    %v1371 = vmul.f32 %v1335, %v1370
    %v1372 = vmul.f32 %v1259, %v1265
    %v1373 = vmul.f32 %v1262, %v1265
    %v1374 = vld [vmem:[%s3 + $0x9] sm:$0x1]
    %v1375 = vperm.slane %v1374, 0
    %v1376 = vmul.f32 %v1199, %v1375
    %v1377 = vmul.f32 %v1202, %v1375
    %v1379 = vsel %vm153, %v1376, 0
    %1381 = vmatpush.xpose.msra.mxu0 0.0
    %1382 = vmatpush.xpose.msra.mxu0 0.0
    %1383 = vmatpush.xpose.msra.mxu0 0.0
    %1384 = vmatpush.xpose.msra.mxu0 0.0
    %1385 = vmatpush.xpose.msra.mxu0 0.0
    %1386 = vmatpush.xpose.msra.mxu0 0.0
    %1387 = vmatpush.xpose.msra.mxu0 0.0
    %1388 = vmatpush.xpose.msra.mxu0 0.0
    %1389 = vmatpush.xpose.msra.mxu0 0.0
    %1390 = vmatpush.xpose.msra.mxu0 0.0
    %1391 = vmatpush.xpose.msra.mxu0 0.0
    %1392 = vmatpush.xpose.msra.mxu0 0.0
    %1393 = vmatpush.xpose.msra.mxu0 0.0
    %1394 = vmatpush.xpose.msra.mxu0 0.0
    %1395 = vmatpush.xpose.msra.mxu0 0.0
    %1396 = vmatpush.xpose.msra.mxu0 %v1272
    %1397 = vmatmul.f32.gmra.mxu0 %v1379
    %v1398 = vpop.f32.mrf.mxu0
    %v1399 = vadd.f32 0.0, %v1398
    %1400 = vdwg.mxu0
    %v1402 = vsel %vm153, %v1377, 0
    %1404 = vmatpush.xpose.msra.mxu0 0.0
    %1405 = vmatpush.xpose.msra.mxu0 0.0
    %1406 = vmatpush.xpose.msra.mxu0 0.0
    %1407 = vmatpush.xpose.msra.mxu0 0.0
    %1408 = vmatpush.xpose.msra.mxu0 0.0
    %1409 = vmatpush.xpose.msra.mxu0 0.0
    %1410 = vmatpush.xpose.msra.mxu0 0.0
    %1411 = vmatpush.xpose.msra.mxu0 0.0
    %1412 = vmatpush.xpose.msra.mxu0 0.0
    %1413 = vmatpush.xpose.msra.mxu0 0.0
    %1414 = vmatpush.xpose.msra.mxu0 0.0
    %1415 = vmatpush.xpose.msra.mxu0 0.0
    %1416 = vmatpush.xpose.msra.mxu0 0.0
    %1417 = vmatpush.xpose.msra.mxu0 0.0
    %1418 = vmatpush.xpose.msra.mxu0 0.0
    %1419 = vmatpush.xpose.msra.mxu0 %v1298
    %1420 = vmatmul.f32.gmra.mxu0 %v1402
    %v1421 = vpop.f32.mrf.mxu0
    %v1422 = vadd.f32 0.0, %v1421
    %1423 = vdwg.mxu0
    %v1424 = vmul.f32 %v1399, 0.35355338
    %v1425 = vmul.f32 %v1422, 0.35355338
    %v1426 = vadd.f32 %v1424, %v374
    %v1427 = vadd.f32 %v1425, %v375
    %v1428 = vsel %vm380, %v1426, -inf
    %1429 = vmax.xlane.f32.xlu0 %v1428
    %v1430 = vpop.xlane.xlu0 %1429
    %v1431 = vsel %vm380, %v1427, -inf
    %1432 = vmax.xlane.f32.xlu0 %v1431
    %v1433 = vpop.xlane.xlu0 %1432
    %v1434 = vsub.f32 %v1426, %v1430
    %v1435 = vsub.f32 %v1427, %v1433
    %v1436 = vmul.f32 %v1434, 1.442695
    %v1437 = vpow.pop %v1436
    %v1438 = vmul.f32 %v1435, 1.442695
    %v1439 = vpow.pop %v1438
    %v1440 = vsel %vm380, %v1437, 0.0
    %1441 = vadd.xlane.f32.xlu0 %v1440
    %v1442 = vpop.xlane.xlu0 %1441
    %v1443 = vsel %vm380, %v1439, 0.0
    %1444 = vadd.xlane.f32.xlu0 %v1443
    %v1445 = vpop.xlane.xlu0 %1444
    %v1446 = vrcp.pop %v1442
    %v1447 = vmul.f32 %v1442, %v1446
    %v1448 = vsub.f32 1.0, %v1447
    %v1449 = vmul.f32 %v1446, %v1448
    %v1450 = vadd.f32 %v1446, %v1449
    %vm1451 = vweird.f32 %v1442
    %vm1452 = vweird.f32 %v1446
    %vm1453 = vmor %vm1451, %vm1452
    %v1454 = vsel %vm1453, %v1446, %v1450
    %v1455 = vand.u32 2147483647, %v1442
    %vm1456 = vcmp.eq.f32.partialorder %v1455, 8.507059e+37
    %v1457 = vand.u32 %v1442, 2147483648
    %v1458 = vor.u32 1.1754944e-38, %v1457
    %v1459 = vsel %vm1456, %v1458, %v1454
    %v1460 = vmul.f32 %v1437, %v1459
    %v1461 = vrcp.pop %v1445
    %v1462 = vmul.f32 %v1445, %v1461
    %v1463 = vsub.f32 1.0, %v1462
    %v1464 = vmul.f32 %v1461, %v1463
    %v1465 = vadd.f32 %v1461, %v1464
    %vm1466 = vweird.f32 %v1445
    %vm1467 = vweird.f32 %v1461
    %vm1468 = vmor %vm1466, %vm1467
    %v1469 = vsel %vm1468, %v1461, %v1465
    %v1470 = vand.u32 2147483647, %v1445
    %vm1471 = vcmp.eq.f32.partialorder %v1470, 8.507059e+37
    %v1472 = vand.u32 %v1445, 2147483648
    %v1473 = vor.u32 1.1754944e-38, %v1472
    %v1474 = vsel %vm1471, %v1473, %v1469
    %v1475 = vmul.f32 %v1439, %v1474
    %v1476 = vmul.f32 %v1259, %v1375
    %v1477 = vmul.f32 %v1262, %v1375
    %v1479 = vsel %vm380, %v1460, 0
    %1481 = vmatpush.msra.mxu0 0.0
    %1482 = vmatpush.msra.mxu0 0.0
    %1483 = vmatpush.msra.mxu0 0.0
    %1484 = vmatpush.msra.mxu0 0.0
    %1485 = vmatpush.msra.mxu0 0.0
    %1486 = vmatpush.msra.mxu0 0.0
    %1487 = vmatpush.msra.mxu0 0.0
    %1488 = vmatpush.msra.mxu0 0.0
    %1489 = vmatpush.msra.mxu0 0.0
    %1490 = vmatpush.msra.mxu0 0.0
    %1491 = vmatpush.msra.mxu0 0.0
    %1492 = vmatpush.msra.mxu0 0.0
    %1493 = vmatpush.msra.mxu0 0.0
    %1494 = vmatpush.msra.mxu0 0.0
    %1495 = vmatpush.msra.mxu0 0.0
    %1496 = vmatpush.msra.mxu0 %v1476
    %1497 = vmatmul.f32.gmra.mxu0 %v1479
    %v1498 = vpop.f32.mrf.mxu0
    %v1499 = vadd.f32 0.0, %v1498
    %1500 = vdwg.mxu0
    %v1502 = vsel %vm380, %v1475, 0
    %1504 = vmatpush.msra.mxu0 0.0
    %1505 = vmatpush.msra.mxu0 0.0
    %1506 = vmatpush.msra.mxu0 0.0
    %1507 = vmatpush.msra.mxu0 0.0
    %1508 = vmatpush.msra.mxu0 0.0
    %1509 = vmatpush.msra.mxu0 0.0
    %1510 = vmatpush.msra.mxu0 0.0
    %1511 = vmatpush.msra.mxu0 0.0
    %1512 = vmatpush.msra.mxu0 0.0
    %1513 = vmatpush.msra.mxu0 0.0
    %1514 = vmatpush.msra.mxu0 0.0
    %1515 = vmatpush.msra.mxu0 0.0
    %1516 = vmatpush.msra.mxu0 0.0
    %1517 = vmatpush.msra.mxu0 0.0
    %1518 = vmatpush.msra.mxu0 0.0
    %1519 = vmatpush.msra.mxu0 %v1477
    %1520 = vmatmul.f32.gmra.mxu0 %v1502
    %v1521 = vpop.f32.mrf.mxu0
    %v1522 = vadd.f32 0.0, %v1521
    %1523 = vdwg.mxu0
    %v1525 = vsel %vm380, %v1356, 0
    %1527 = vmatpush.msra.mxu0 0.0
    %1528 = vmatpush.msra.mxu0 0.0
    %1529 = vmatpush.msra.mxu0 0.0
    %1530 = vmatpush.msra.mxu0 0.0
    %1531 = vmatpush.msra.mxu0 0.0
    %1532 = vmatpush.msra.mxu0 0.0
    %1533 = vmatpush.msra.mxu0 0.0
    %1534 = vmatpush.msra.mxu0 0.0
    %1535 = vmatpush.msra.mxu0 0.0
    %1536 = vmatpush.msra.mxu0 0.0
    %1537 = vmatpush.msra.mxu0 0.0
    %1538 = vmatpush.msra.mxu0 0.0
    %1539 = vmatpush.msra.mxu0 0.0
    %1540 = vmatpush.msra.mxu0 0.0
    %1541 = vmatpush.msra.mxu0 0.0
    %1542 = vmatpush.msra.mxu0 %v1372
    %1543 = vmatmul.f32.gmra.mxu0 %v1525
    %v1544 = vpop.f32.mrf.mxu0
    %v1545 = vadd.f32 %v1499, %v1544
    %1546 = vdwg.mxu0
    %v1548 = vsel %vm380, %v1371, 0
    %1550 = vmatpush.msra.mxu0 0.0
    %1551 = vmatpush.msra.mxu0 0.0
    %1552 = vmatpush.msra.mxu0 0.0
    %1553 = vmatpush.msra.mxu0 0.0
    %1554 = vmatpush.msra.mxu0 0.0
    %1555 = vmatpush.msra.mxu0 0.0
    %1556 = vmatpush.msra.mxu0 0.0
    %1557 = vmatpush.msra.mxu0 0.0
    %1558 = vmatpush.msra.mxu0 0.0
    %1559 = vmatpush.msra.mxu0 0.0
    %1560 = vmatpush.msra.mxu0 0.0
    %1561 = vmatpush.msra.mxu0 0.0
    %1562 = vmatpush.msra.mxu0 0.0
    %1563 = vmatpush.msra.mxu0 0.0
    %1564 = vmatpush.msra.mxu0 0.0
    %1565 = vmatpush.msra.mxu0 %v1373
    %1566 = vmatmul.f32.gmra.mxu0 %v1548
    %v1567 = vpop.f32.mrf.mxu0
    %v1568 = vadd.f32 %v1522, %v1567
    %1569 = vdwg.mxu0
    %v1570 = vld [vmem:[%s3 + $0xa] sm:$0x1]
    %v1571 = vperm.slane %v1570, 0
    %v1572 = vmul.f32 %v1199, %v1571
    %v1573 = vmul.f32 %v1202, %v1571
    %v1575 = vsel %vm153, %v1572, 0
    %1577 = vmatpush.xpose.msra.mxu0 0.0
    %1578 = vmatpush.xpose.msra.mxu0 0.0
    %1579 = vmatpush.xpose.msra.mxu0 0.0
    %1580 = vmatpush.xpose.msra.mxu0 0.0
    %1581 = vmatpush.xpose.msra.mxu0 0.0
    %1582 = vmatpush.xpose.msra.mxu0 0.0
    %1583 = vmatpush.xpose.msra.mxu0 0.0
    %1584 = vmatpush.xpose.msra.mxu0 0.0
    %1585 = vmatpush.xpose.msra.mxu0 0.0
    %1586 = vmatpush.xpose.msra.mxu0 0.0
    %1587 = vmatpush.xpose.msra.mxu0 0.0
    %1588 = vmatpush.xpose.msra.mxu0 0.0
    %1589 = vmatpush.xpose.msra.mxu0 0.0
    %1590 = vmatpush.xpose.msra.mxu0 0.0
    %1591 = vmatpush.xpose.msra.mxu0 0.0
    %1592 = vmatpush.xpose.msra.mxu0 %v1272
    %1593 = vmatmul.f32.gmra.mxu0 %v1575
    %v1594 = vpop.f32.mrf.mxu0
    %v1595 = vadd.f32 0.0, %v1594
    %1596 = vdwg.mxu0
    %v1598 = vsel %vm153, %v1573, 0
    %1600 = vmatpush.xpose.msra.mxu0 0.0
    %1601 = vmatpush.xpose.msra.mxu0 0.0
    %1602 = vmatpush.xpose.msra.mxu0 0.0
    %1603 = vmatpush.xpose.msra.mxu0 0.0
    %1604 = vmatpush.xpose.msra.mxu0 0.0
    %1605 = vmatpush.xpose.msra.mxu0 0.0
    %1606 = vmatpush.xpose.msra.mxu0 0.0
    %1607 = vmatpush.xpose.msra.mxu0 0.0
    %1608 = vmatpush.xpose.msra.mxu0 0.0
    %1609 = vmatpush.xpose.msra.mxu0 0.0
    %1610 = vmatpush.xpose.msra.mxu0 0.0
    %1611 = vmatpush.xpose.msra.mxu0 0.0
    %1612 = vmatpush.xpose.msra.mxu0 0.0
    %1613 = vmatpush.xpose.msra.mxu0 0.0
    %1614 = vmatpush.xpose.msra.mxu0 0.0
    %1615 = vmatpush.xpose.msra.mxu0 %v1298
    %1616 = vmatmul.f32.gmra.mxu0 %v1598
    %v1617 = vpop.f32.mrf.mxu0
    %v1618 = vadd.f32 0.0, %v1617
    %1619 = vdwg.mxu0
    %v1620 = vmul.f32 %v1595, 0.35355338
    %v1621 = vmul.f32 %v1618, 0.35355338
    %v1622 = vadd.f32 %v1620, %v374
    %v1623 = vadd.f32 %v1621, %v375
    %v1624 = vsel %vm380, %v1622, -inf
    %1625 = vmax.xlane.f32.xlu0 %v1624
    %v1626 = vpop.xlane.xlu0 %1625
    %v1627 = vsel %vm380, %v1623, -inf
    %1628 = vmax.xlane.f32.xlu0 %v1627
    %v1629 = vpop.xlane.xlu0 %1628
    %v1630 = vsub.f32 %v1622, %v1626
    %v1631 = vsub.f32 %v1623, %v1629
    %v1632 = vmul.f32 %v1630, 1.442695
    %v1633 = vpow.pop %v1632
    %v1634 = vmul.f32 %v1631, 1.442695
    %v1635 = vpow.pop %v1634
    %v1636 = vsel %vm380, %v1633, 0.0
    %1637 = vadd.xlane.f32.xlu0 %v1636
    %v1638 = vpop.xlane.xlu0 %1637
    %v1639 = vsel %vm380, %v1635, 0.0
    %1640 = vadd.xlane.f32.xlu0 %v1639
    %v1641 = vpop.xlane.xlu0 %1640
    %v1642 = vrcp.pop %v1638
    %v1643 = vmul.f32 %v1638, %v1642
    %v1644 = vsub.f32 1.0, %v1643
    %v1645 = vmul.f32 %v1642, %v1644
    %v1646 = vadd.f32 %v1642, %v1645
    %vm1647 = vweird.f32 %v1638
    %vm1648 = vweird.f32 %v1642
    %vm1649 = vmor %vm1647, %vm1648
    %v1650 = vsel %vm1649, %v1642, %v1646
    %v1651 = vand.u32 2147483647, %v1638
    %vm1652 = vcmp.eq.f32.partialorder %v1651, 8.507059e+37
    %v1653 = vand.u32 %v1638, 2147483648
    %v1654 = vor.u32 1.1754944e-38, %v1653
    %v1655 = vsel %vm1652, %v1654, %v1650
    %v1656 = vmul.f32 %v1633, %v1655
    %v1657 = vrcp.pop %v1641
    %v1658 = vmul.f32 %v1641, %v1657
    %v1659 = vsub.f32 1.0, %v1658
    %v1660 = vmul.f32 %v1657, %v1659
    %v1661 = vadd.f32 %v1657, %v1660
    %vm1662 = vweird.f32 %v1641
    %vm1663 = vweird.f32 %v1657
    %vm1664 = vmor %vm1662, %vm1663
    %v1665 = vsel %vm1664, %v1657, %v1661
    %v1666 = vand.u32 2147483647, %v1641
    %vm1667 = vcmp.eq.f32.partialorder %v1666, 8.507059e+37
    %v1668 = vand.u32 %v1641, 2147483648
    %v1669 = vor.u32 1.1754944e-38, %v1668
    %v1670 = vsel %vm1667, %v1669, %v1665
    %v1671 = vmul.f32 %v1635, %v1670
    %v1672 = vmul.f32 %v1259, %v1571
    %v1673 = vmul.f32 %v1262, %v1571
    %v1675 = vsel %vm380, %v1656, 0
    %1677 = vmatpush.msra.mxu0 0.0
    %1678 = vmatpush.msra.mxu0 0.0
    %1679 = vmatpush.msra.mxu0 0.0
    %1680 = vmatpush.msra.mxu0 0.0
    %1681 = vmatpush.msra.mxu0 0.0
    %1682 = vmatpush.msra.mxu0 0.0
    %1683 = vmatpush.msra.mxu0 0.0
    %1684 = vmatpush.msra.mxu0 0.0
    %1685 = vmatpush.msra.mxu0 0.0
    %1686 = vmatpush.msra.mxu0 0.0
    %1687 = vmatpush.msra.mxu0 0.0
    %1688 = vmatpush.msra.mxu0 0.0
    %1689 = vmatpush.msra.mxu0 0.0
    %1690 = vmatpush.msra.mxu0 0.0
    %1691 = vmatpush.msra.mxu0 0.0
    %1692 = vmatpush.msra.mxu0 %v1672
    %1693 = vmatmul.f32.gmra.mxu0 %v1675
    %v1694 = vpop.f32.mrf.mxu0
    %v1695 = vadd.f32 0.0, %v1694
    %1696 = vdwg.mxu0
    %v1698 = vsel %vm380, %v1671, 0
    %1700 = vmatpush.msra.mxu0 0.0
    %1701 = vmatpush.msra.mxu0 0.0
    %1702 = vmatpush.msra.mxu0 0.0
    %1703 = vmatpush.msra.mxu0 0.0
    %1704 = vmatpush.msra.mxu0 0.0
    %1705 = vmatpush.msra.mxu0 0.0
    %1706 = vmatpush.msra.mxu0 0.0
    %1707 = vmatpush.msra.mxu0 0.0
    %1708 = vmatpush.msra.mxu0 0.0
    %1709 = vmatpush.msra.mxu0 0.0
    %1710 = vmatpush.msra.mxu0 0.0
    %1711 = vmatpush.msra.mxu0 0.0
    %1712 = vmatpush.msra.mxu0 0.0
    %1713 = vmatpush.msra.mxu0 0.0
    %1714 = vmatpush.msra.mxu0 0.0
    %1715 = vmatpush.msra.mxu0 %v1673
    %1716 = vmatmul.f32.gmra.mxu0 %v1698
    %v1717 = vpop.f32.mrf.mxu0
    %v1718 = vadd.f32 0.0, %v1717
    %1719 = vdwg.mxu0
    %v1720 = vadd.f32 %v1545, %v1695
    %v1721 = vadd.f32 %v1568, %v1718
    %v1722 = vld [vmem:[%s3 + $0xb] sm:$0x1]
    %v1723 = vperm.slane %v1722, 0
    %v1724 = vmul.f32 %v1199, %v1723
    %v1725 = vmul.f32 %v1202, %v1723
    %v1727 = vsel %vm153, %v1724, 0
    %1729 = vmatpush.xpose.msra.mxu0 0.0
    %1730 = vmatpush.xpose.msra.mxu0 0.0
    %1731 = vmatpush.xpose.msra.mxu0 0.0
    %1732 = vmatpush.xpose.msra.mxu0 0.0
    %1733 = vmatpush.xpose.msra.mxu0 0.0
    %1734 = vmatpush.xpose.msra.mxu0 0.0
    %1735 = vmatpush.xpose.msra.mxu0 0.0
    %1736 = vmatpush.xpose.msra.mxu0 0.0
    %1737 = vmatpush.xpose.msra.mxu0 0.0
    %1738 = vmatpush.xpose.msra.mxu0 0.0
    %1739 = vmatpush.xpose.msra.mxu0 0.0
    %1740 = vmatpush.xpose.msra.mxu0 0.0
    %1741 = vmatpush.xpose.msra.mxu0 0.0
    %1742 = vmatpush.xpose.msra.mxu0 0.0
    %1743 = vmatpush.xpose.msra.mxu0 0.0
    %1744 = vmatpush.xpose.msra.mxu0 %v1272
    %1745 = vmatmul.f32.gmra.mxu0 %v1727
    %v1746 = vpop.f32.mrf.mxu0
    %v1747 = vadd.f32 0.0, %v1746
    %1748 = vdwg.mxu0
    %v1750 = vsel %vm153, %v1725, 0
    %1752 = vmatpush.xpose.msra.mxu0 0.0
    %1753 = vmatpush.xpose.msra.mxu0 0.0
    %1754 = vmatpush.xpose.msra.mxu0 0.0
    %1755 = vmatpush.xpose.msra.mxu0 0.0
    %1756 = vmatpush.xpose.msra.mxu0 0.0
    %1757 = vmatpush.xpose.msra.mxu0 0.0
    %1758 = vmatpush.xpose.msra.mxu0 0.0
    %1759 = vmatpush.xpose.msra.mxu0 0.0
    %1760 = vmatpush.xpose.msra.mxu0 0.0
    %1761 = vmatpush.xpose.msra.mxu0 0.0
    %1762 = vmatpush.xpose.msra.mxu0 0.0
    %1763 = vmatpush.xpose.msra.mxu0 0.0
    %1764 = vmatpush.xpose.msra.mxu0 0.0
    %1765 = vmatpush.xpose.msra.mxu0 0.0
    %1766 = vmatpush.xpose.msra.mxu0 0.0
    %1767 = vmatpush.xpose.msra.mxu0 %v1298
    %1768 = vmatmul.f32.gmra.mxu0 %v1750
    %v1769 = vpop.f32.mrf.mxu0
    %v1770 = vadd.f32 0.0, %v1769
    %1771 = vdwg.mxu0
    %v1772 = vmul.f32 %v1747, 0.35355338
    %v1773 = vmul.f32 %v1770, 0.35355338
    %v1774 = vadd.f32 %v1772, %v374
    %v1775 = vadd.f32 %v1773, %v375
    %v1776 = vsel %vm380, %v1774, -inf
    %1777 = vmax.xlane.f32.xlu0 %v1776
    %v1778 = vpop.xlane.xlu0 %1777
    %v1779 = vsel %vm380, %v1775, -inf
    %1780 = vmax.xlane.f32.xlu0 %v1779
    %v1781 = vpop.xlane.xlu0 %1780
    %v1782 = vsub.f32 %v1774, %v1778
    %v1783 = vsub.f32 %v1775, %v1781
    %v1784 = vmul.f32 %v1782, 1.442695
    %v1785 = vpow.pop %v1784
    %v1786 = vmul.f32 %v1783, 1.442695
    %v1787 = vpow.pop %v1786
    %v1788 = vsel %vm380, %v1785, 0.0
    %1789 = vadd.xlane.f32.xlu0 %v1788
    %v1790 = vpop.xlane.xlu0 %1789
    %v1791 = vsel %vm380, %v1787, 0.0
    %1792 = vadd.xlane.f32.xlu0 %v1791
    %v1793 = vpop.xlane.xlu0 %1792
    %v1794 = vrcp.pop %v1790
    %v1795 = vmul.f32 %v1790, %v1794
    %v1796 = vsub.f32 1.0, %v1795
    %v1797 = vmul.f32 %v1794, %v1796
    %v1798 = vadd.f32 %v1794, %v1797
    %vm1799 = vweird.f32 %v1790
    %vm1800 = vweird.f32 %v1794
    %vm1801 = vmor %vm1799, %vm1800
    %v1802 = vsel %vm1801, %v1794, %v1798
    %v1803 = vand.u32 2147483647, %v1790
    %vm1804 = vcmp.eq.f32.partialorder %v1803, 8.507059e+37
    %v1805 = vand.u32 %v1790, 2147483648
    %v1806 = vor.u32 1.1754944e-38, %v1805
    %v1807 = vsel %vm1804, %v1806, %v1802
    %v1808 = vmul.f32 %v1785, %v1807
    %v1809 = vrcp.pop %v1793
    %v1810 = vmul.f32 %v1793, %v1809
    %v1811 = vsub.f32 1.0, %v1810
    %v1812 = vmul.f32 %v1809, %v1811
    %v1813 = vadd.f32 %v1809, %v1812
    %vm1814 = vweird.f32 %v1793
    %vm1815 = vweird.f32 %v1809
    %vm1816 = vmor %vm1814, %vm1815
    %v1817 = vsel %vm1816, %v1809, %v1813
    %v1818 = vand.u32 2147483647, %v1793
    %vm1819 = vcmp.eq.f32.partialorder %v1818, 8.507059e+37
    %v1820 = vand.u32 %v1793, 2147483648
    %v1821 = vor.u32 1.1754944e-38, %v1820
    %v1822 = vsel %vm1819, %v1821, %v1817
    %v1823 = vmul.f32 %v1787, %v1822
    %v1824 = vmul.f32 %v1259, %v1723
    %v1825 = vmul.f32 %v1262, %v1723
    %v1827 = vsel %vm380, %v1808, 0
    %1829 = vmatpush.msra.mxu0 0.0
    %1830 = vmatpush.msra.mxu0 0.0
    %1831 = vmatpush.msra.mxu0 0.0
    %1832 = vmatpush.msra.mxu0 0.0
    %1833 = vmatpush.msra.mxu0 0.0
    %1834 = vmatpush.msra.mxu0 0.0
    %1835 = vmatpush.msra.mxu0 0.0
    %1836 = vmatpush.msra.mxu0 0.0
    %1837 = vmatpush.msra.mxu0 0.0
    %1838 = vmatpush.msra.mxu0 0.0
    %1839 = vmatpush.msra.mxu0 0.0
    %1840 = vmatpush.msra.mxu0 0.0
    %1841 = vmatpush.msra.mxu0 0.0
    %1842 = vmatpush.msra.mxu0 0.0
    %1843 = vmatpush.msra.mxu0 0.0
    %1844 = vmatpush.msra.mxu0 %v1824
    %1845 = vmatmul.f32.gmra.mxu0 %v1827
    %v1846 = vpop.f32.mrf.mxu0
    %v1847 = vadd.f32 0.0, %v1846
    %1848 = vdwg.mxu0
    %v1850 = vsel %vm380, %v1823, 0
    %1852 = vmatpush.msra.mxu0 0.0
    %1853 = vmatpush.msra.mxu0 0.0
    %1854 = vmatpush.msra.mxu0 0.0
    %1855 = vmatpush.msra.mxu0 0.0
    %1856 = vmatpush.msra.mxu0 0.0
    %1857 = vmatpush.msra.mxu0 0.0
    %1858 = vmatpush.msra.mxu0 0.0
    %1859 = vmatpush.msra.mxu0 0.0
    %1860 = vmatpush.msra.mxu0 0.0
    %1861 = vmatpush.msra.mxu0 0.0
    %1862 = vmatpush.msra.mxu0 0.0
    %1863 = vmatpush.msra.mxu0 0.0
    %1864 = vmatpush.msra.mxu0 0.0
    %1865 = vmatpush.msra.mxu0 0.0
    %1866 = vmatpush.msra.mxu0 0.0
    %1867 = vmatpush.msra.mxu0 %v1825
    %1868 = vmatmul.f32.gmra.mxu0 %v1850
    %v1869 = vpop.f32.mrf.mxu0
    %v1870 = vadd.f32 0.0, %v1869
    %1871 = vdwg.mxu0
    %v1872 = vadd.f32 %v1720, %v1847
    %v1873 = vadd.f32 %v1721, %v1870
    %s1874 = scalar_lea.vmem %s6, 32
    %v1875 = vld [vmem:[%s1874] sm:$0xff]
    %v1876 = vld [vmem:[%s1874 + $0x8] sm:$0xff]
    %v1877 = vld [vmem:[%s1874 + $0x10] sm:$0xff]
    %v1878 = vld [vmem:[%s1874 + $0x18] sm:$0xff]
    %v1879 = vld [vmem:[%s1172 + $0x3] sm:$0x1]
    %v1880 = vperm.slane %v1879, 0
    %v1882 = vsel %vm153, %v1872, 0
    %v1885 = vsel %vm153, %v1873, 0
    %1887 = vmatpush.msra.mxu0 0.0
    %1888 = vmatpush.msra.mxu0 0.0
    %1889 = vmatpush.msra.mxu0 0.0
    %1890 = vmatpush.msra.mxu0 0.0
    %1891 = vmatpush.msra.mxu0 0.0
    %1892 = vmatpush.msra.mxu0 0.0
    %1893 = vmatpush.msra.mxu0 0.0
    %1894 = vmatpush.msra.mxu0 0.0
    %1895 = vmatpush.msra.mxu0 0.0
    %1896 = vmatpush.msra.mxu0 0.0
    %1897 = vmatpush.msra.mxu0 0.0
    %1898 = vmatpush.msra.mxu0 0.0
    %1899 = vmatpush.msra.mxu0 %v1878
    %1900 = vmatpush.msra.mxu0 %v1877
    %1901 = vmatpush.msra.mxu0 %v1876
    %1902 = vmatpush.msra.mxu0 %v1875
    %1903 = vmatmul.f32.gmra.mxu0 %v1882
    %v1904 = vpop.f32.mrf.mxu0
    %v1905 = vadd.f32 %v1880, %v1904
    %1906 = vmatmul.f32.gmra.mxu0 %v1885
    %v1907 = vpop.f32.mrf.mxu0
    %v1908 = vadd.f32 %v1880, %v1907
    %1909 = vdwg.mxu0
    %v1910 = vadd.f32 %v1165, %v1905
    %v1911 = vadd.f32 %v1166, %v1908
    %v1912 = vld [vmem:[%s1172 + $0x6] sm:$0x1]
    %v1913 = vld [vmem:[%s1172 + $0x7] sm:$0x1]
    %v1914 = vsel %vm153, %v1910, 0.0
    %1915 = vadd.xlane.f32.xlu0 %v1914
    %v1916 = vpop.xlane.xlu0 %1915
    %v1917 = vsel %vm153, %v1911, 0.0
    %1918 = vadd.xlane.f32.xlu0 %v1917
    %v1919 = vpop.xlane.xlu0 %1918
    %v1920 = vmul.f32 %v1916, %v166
    %v1921 = vmul.f32 %v1919, %v166
    %v1922 = vsub.f32 %v1910, %v1920
    %v1923 = vsub.f32 %v1911, %v1921
    %v1924 = vmul.f32 %v1922, %v1922
    %v1925 = vmul.f32 %v1923, %v1923
    %v1926 = vsel %vm153, %v1924, 0.0
    %1927 = vadd.xlane.f32.xlu0 %v1926
    %v1928 = vpop.xlane.xlu0 %1927
    %v1929 = vsel %vm153, %v1925, 0.0
    %1930 = vadd.xlane.f32.xlu0 %v1929
    %v1931 = vpop.xlane.xlu0 %1930
    %v1932 = vmul.f32 %v1928, %v166
    %v1933 = vmul.f32 %v1931, %v166
    %v1934 = vadd.f32 %v1932, 1e-12
    %v1935 = vadd.f32 %v1933, 1e-12
    %v1936 = vrsqrt.pop %v1934
    %v1937 = vmul.f32 %v1936, %v1934
    %v1938 = vmul.f32 %v1937, %v1936
    %v1939 = vmul.f32 0.5, %v1938
    %v1940 = vsub.f32 1.5, %v1939
    %v1941 = vmul.f32 %v1936, %v1940
    %vm1942 = vweird.f32 %v1934
    %vm1943 = vweird.f32 %v1936
    %vm1944 = vmor %vm1942, %vm1943
    %v1945 = vsel %vm1944, %v1936, %v1941
    %v1946 = vrsqrt.pop %v1935
    %v1947 = vmul.f32 %v1946, %v1935
    %v1948 = vmul.f32 %v1947, %v1946
    %v1949 = vmul.f32 0.5, %v1948
    %v1950 = vsub.f32 1.5, %v1949
    %v1951 = vmul.f32 %v1946, %v1950
    %vm1952 = vweird.f32 %v1935
    %vm1953 = vweird.f32 %v1946
    %vm1954 = vmor %vm1952, %vm1953
    %v1955 = vsel %vm1954, %v1946, %v1951
    %v1956 = vmul.f32 %v1922, %v1945
    %v1957 = vmul.f32 %v1923, %v1955
    %v1958 = vperm.slane %v1912, 0
    %v1959 = vmul.f32 %v1956, %v1958
    %v1960 = vmul.f32 %v1957, %v1958
    %v1961 = vperm.slane %v1913, 0
    %v1962 = vadd.f32 %v1959, %v1961
    %v1963 = vadd.f32 %v1960, %v1961
    %s1964 = scalar_lea.vmem [#allocation2], 32
    %v1965 = vld [vmem:[%s1964] sm:$0xff]
    %v1966 = vld [vmem:[%s1964 + $0x8] sm:$0xff]
    %v1967 = vld [vmem:[%s1964 + $0x10] sm:$0xff]
    %v1968 = vld [vmem:[%s1964 + $0x18] sm:$0xff]
    %v1969 = vld [vmem:[%s1172 + $0x4] sm:$0x1]
    %v1970 = vperm.slane %v1969, 0
    %v1972 = vsel %vm153, %v1962, 0
    %v1975 = vsel %vm153, %v1963, 0
    %1977 = vmatpush.msra.mxu0 0.0
    %1978 = vmatpush.msra.mxu0 0.0
    %1979 = vmatpush.msra.mxu0 0.0
    %1980 = vmatpush.msra.mxu0 0.0
    %1981 = vmatpush.msra.mxu0 0.0
    %1982 = vmatpush.msra.mxu0 0.0
    %1983 = vmatpush.msra.mxu0 0.0
    %1984 = vmatpush.msra.mxu0 0.0
    %1985 = vmatpush.msra.mxu0 0.0
    %1986 = vmatpush.msra.mxu0 0.0
    %1987 = vmatpush.msra.mxu0 0.0
    %1988 = vmatpush.msra.mxu0 0.0
    %1989 = vmatpush.msra.mxu0 %v1968
    %1990 = vmatpush.msra.mxu0 %v1967
    %1991 = vmatpush.msra.mxu0 %v1966
    %1992 = vmatpush.msra.mxu0 %v1965
    %1993 = vmatmul.f32.gmra.mxu0 %v1972
    %v1994 = vpop.f32.mrf.mxu0
    %v1995 = vadd.f32 %v1970, %v1994
    %1996 = vmatmul.f32.gmra.mxu0 %v1975
    %v1997 = vpop.f32.mrf.mxu0
    %v1998 = vadd.f32 %v1970, %v1997
    %1999 = vdwg.mxu0
    %v2000 = vmul.f32 %v1995, 0.5
    %v2001 = vmul.f32 %v1998, 0.5
    %v2002 = vmul.f32 %v1995, 0.044715
    %v2003 = vmul.f32 %v1998, 0.044715
    %v2004 = vmul.f32 %v2002, %v1995
    %v2005 = vmul.f32 %v2003, %v1998
    %v2006 = vmul.f32 %v2004, %v1995
    %v2007 = vmul.f32 %v2005, %v1998
    %v2008 = vadd.f32 %v1995, %v2006
    %v2009 = vadd.f32 %v1998, %v2007
    %v2010 = vmul.f32 %v2008, 0.7978846
    %v2011 = vmul.f32 %v2009, 0.7978846
    %v2012 = vtanh.pop %v2010
    %v2013 = vtanh.pop %v2011
    %v2014 = vadd.f32 %v2012, 1.0
    %v2015 = vadd.f32 %v2013, 1.0
    %v2016 = vmul.f32 %v2000, %v2014
    %v2017 = vmul.f32 %v2001, %v2015
    %s2018 = scalar_lea.vmem %s8, 64
    %v2019 = vld [vmem:[%s2018] sm:$0xff]
    %v2020 = vld [vmem:[%s2018 + $0x8] sm:$0xff]
    %v2021 = vld [vmem:[%s2018 + $0x10] sm:$0xff]
    %v2022 = vld [vmem:[%s2018 + $0x18] sm:$0xff]
    %v2023 = vld [vmem:[%s2018 + $0x20] sm:$0xff]
    %v2024 = vld [vmem:[%s2018 + $0x28] sm:$0xff]
    %v2025 = vld [vmem:[%s2018 + $0x30] sm:$0xff]
    %v2026 = vld [vmem:[%s2018 + $0x38] sm:$0xff]
    %v2027 = vld [vmem:[%s1172 + $0x5] sm:$0x1]
    %v2028 = vperm.slane %v2027, 0
    %v2030 = vsel %vm1083, %v2016, 0
    %v2033 = vsel %vm1083, %v2017, 0
    %2035 = vmatpush.msra.mxu0 0.0
    %2036 = vmatpush.msra.mxu0 0.0
    %2037 = vmatpush.msra.mxu0 0.0
    %2038 = vmatpush.msra.mxu0 0.0
    %2039 = vmatpush.msra.mxu0 0.0
    %2040 = vmatpush.msra.mxu0 0.0
    %2041 = vmatpush.msra.mxu0 0.0
    %2042 = vmatpush.msra.mxu0 0.0
    %2043 = vmatpush.msra.mxu0 %v2026
    %2044 = vmatpush.msra.mxu0 %v2025
    %2045 = vmatpush.msra.mxu0 %v2024
    %2046 = vmatpush.msra.mxu0 %v2023
    %2047 = vmatpush.msra.mxu0 %v2022
    %2048 = vmatpush.msra.mxu0 %v2021
    %2049 = vmatpush.msra.mxu0 %v2020
    %2050 = vmatpush.msra.mxu0 %v2019
    %2051 = vmatmul.f32.gmra.mxu0 %v2030
    %v2052 = vpop.f32.mrf.mxu0
    %v2053 = vadd.f32 %v2028, %v2052
    %2054 = vmatmul.f32.gmra.mxu0 %v2033
    %v2055 = vpop.f32.mrf.mxu0
    %v2056 = vadd.f32 %v2028, %v2055
    %2057 = vdwg.mxu0
    %v2058 = vadd.f32 %v1962, %v2053
    %v2059 = vadd.f32 %v1963, %v2056
    %v2060 = vld [vmem:[%s1172 + $0x8] sm:$0x1]
    %v2061 = vld [vmem:[%s1172 + $0x9] sm:$0x1]
    %v2062 = vsel %vm153, %v2058, 0.0
    %2063 = vadd.xlane.f32.xlu0 %v2062
    %v2064 = vpop.xlane.xlu0 %2063
    %v2065 = vsel %vm153, %v2059, 0.0
    %2066 = vadd.xlane.f32.xlu0 %v2065
    %v2067 = vpop.xlane.xlu0 %2066
    %v2068 = vmul.f32 %v2064, %v166
    %v2069 = vmul.f32 %v2067, %v166
    %v2070 = vsub.f32 %v2058, %v2068
    %v2071 = vsub.f32 %v2059, %v2069
    %v2072 = vmul.f32 %v2070, %v2070
    %v2073 = vmul.f32 %v2071, %v2071
    %v2074 = vsel %vm153, %v2072, 0.0
    %2075 = vadd.xlane.f32.xlu0 %v2074
    %v2076 = vpop.xlane.xlu0 %2075
    %v2077 = vsel %vm153, %v2073, 0.0
    %2078 = vadd.xlane.f32.xlu0 %v2077
    %v2079 = vpop.xlane.xlu0 %2078
    %v2080 = vmul.f32 %v2076, %v166
    %v2081 = vmul.f32 %v2079, %v166
    %v2082 = vadd.f32 %v2080, 1e-12
    %v2083 = vadd.f32 %v2081, 1e-12
    %v2084 = vrsqrt.pop %v2082
    %v2085 = vmul.f32 %v2084, %v2082
    %v2086 = vmul.f32 %v2085, %v2084
    %v2087 = vmul.f32 0.5, %v2086
    %v2088 = vsub.f32 1.5, %v2087
    %v2089 = vmul.f32 %v2084, %v2088
    %vm2090 = vweird.f32 %v2082
    %vm2091 = vweird.f32 %v2084
    %vm2092 = vmor %vm2090, %vm2091
    %v2093 = vsel %vm2092, %v2084, %v2089
    %v2094 = vrsqrt.pop %v2083
    %v2095 = vmul.f32 %v2094, %v2083
    %v2096 = vmul.f32 %v2095, %v2094
    %v2097 = vmul.f32 0.5, %v2096
    %v2098 = vsub.f32 1.5, %v2097
    %v2099 = vmul.f32 %v2094, %v2098
    %vm2100 = vweird.f32 %v2083
    %vm2101 = vweird.f32 %v2094
    %vm2102 = vmor %vm2100, %vm2101
    %v2103 = vsel %vm2102, %v2094, %v2099
    %v2104 = vmul.f32 %v2070, %v2093
    %v2105 = vmul.f32 %v2071, %v2103
    %v2106 = vperm.slane %v2060, 0
    %v2107 = vmul.f32 %v2104, %v2106
    %v2108 = vmul.f32 %v2105, %v2106
    %v2109 = vperm.slane %v2061, 0
    %v2110 = vadd.f32 %v2107, %v2109
    %v2111 = vadd.f32 %v2108, %v2109
    %v2112 = vld [vmem:[#allocation4] sm:$0xff]
    %v2113 = vld [vmem:[#allocation4 + $0x8] sm:$0xff]
    %v2114 = vld [vmem:[#allocation4 + $0x10] sm:$0xff]
    %v2115 = vld [vmem:[#allocation4 + $0x18] sm:$0xff]
    %v2116 = vld [vmem:[%s3 + $0xe] sm:$0x1]
    %v2117 = vperm.slane %v2116, 0
    %v2119 = vsel %vm153, %v2110, 0
    %v2122 = vsel %vm153, %v2111, 0
    %2124 = vmatpush.msra.mxu0 0.0
    %2125 = vmatpush.msra.mxu0 0.0
    %2126 = vmatpush.msra.mxu0 0.0
    %2127 = vmatpush.msra.mxu0 0.0
    %2128 = vmatpush.msra.mxu0 0.0
    %2129 = vmatpush.msra.mxu0 0.0
    %2130 = vmatpush.msra.mxu0 0.0
    %2131 = vmatpush.msra.mxu0 0.0
    %2132 = vmatpush.msra.mxu0 0.0
    %2133 = vmatpush.msra.mxu0 0.0
    %2134 = vmatpush.msra.mxu0 0.0
    %2135 = vmatpush.msra.mxu0 0.0
    %2136 = vmatpush.msra.mxu0 %v2115
    %2137 = vmatpush.msra.mxu0 %v2114
    %2138 = vmatpush.msra.mxu0 %v2113
    %2139 = vmatpush.msra.mxu0 %v2112
    %2140 = vmatmul.f32.gmra.mxu0 %v2119
    %v2141 = vpop.f32.mrf.mxu0
    %v2142 = vadd.f32 %v2117, %v2141
    %2143 = vmatmul.f32.gmra.mxu0 %v2122
    %v2144 = vpop.f32.mrf.mxu0
    %v2145 = vadd.f32 %v2117, %v2144
    %2146 = vdwg.mxu0
    %v2147 = vtanh.pop %v2142
    %v2148 = vtanh.pop %v2145
    %v2149 = vld [vmem:[#allocation6] sm:$0xff]
    %v2150 = vld [vmem:[#allocation6 + $0x8] sm:$0xff]
    %v2151 = vld [vmem:[#allocation6 + $0x10] sm:$0xff]
    %v2152 = vld [vmem:[#allocation6 + $0x18] sm:$0xff]
    %v2153 = vld [vmem:[%s3 + $0xf] sm:$0x1]
    %v2154 = vperm.slane %v2153, 0
    %v2156 = vsel %vm153, %v2147, 0
    %v2159 = vsel %vm153, %v2148, 0
    %2161 = vmatpush.msra.mxu0 0.0
    %2162 = vmatpush.msra.mxu0 0.0
    %2163 = vmatpush.msra.mxu0 0.0
    %2164 = vmatpush.msra.mxu0 0.0
    %2165 = vmatpush.msra.mxu0 0.0
    %2166 = vmatpush.msra.mxu0 0.0
    %2167 = vmatpush.msra.mxu0 0.0
    %2168 = vmatpush.msra.mxu0 0.0
    %2169 = vmatpush.msra.mxu0 0.0
    %2170 = vmatpush.msra.mxu0 0.0
    %2171 = vmatpush.msra.mxu0 0.0
    %2172 = vmatpush.msra.mxu0 0.0
    %2173 = vmatpush.msra.mxu0 %v2152
    %2174 = vmatpush.msra.mxu0 %v2151
    %2175 = vmatpush.msra.mxu0 %v2150
    %2176 = vmatpush.msra.mxu0 %v2149
    %2177 = vmatmul.f32.gmra.mxu0 %v2156
    %v2178 = vpop.f32.mrf.mxu0
    %v2179 = vadd.f32 %v2154, %v2178
    %2180 = vmatmul.f32.gmra.mxu0 %v2159
    %v2181 = vpop.f32.mrf.mxu0
    %v2182 = vadd.f32 %v2154, %v2181
    %2183 = vdwg.mxu0
    %2184 = vst [vmem:[%s11] sm:$0xff] %v2179
    %2185 = vst [vmem:[%s11 + $0x8] sm:$0xff] %v2182
    // Predicated region
    $region58: #{intent_model_forward.1} parent=1 // pred_check
      _
    $region59: #{intent_model_forward.1} parent=1 // pred_check_branch
      %2187 = sbr.rel (0) target = $region61
    $region60: #{intent_model_forward.1} parent=1 // pred_region
      _
    $region61: #{intent_model_forward.1} parent=1 // pred_fallthru
      _
    // Predicated region
    $region62: #{intent_model_forward.1} parent=1 // pred_check
      _
    $region63: #{intent_model_forward.1} parent=1 // pred_check_branch
      %2189 = sbr.rel (0) target = $region65
    $region64: #{intent_model_forward.1} parent=1 // pred_region
      _
    $region65: #{intent_model_forward.1} parent=1 // pred_fallthru
      _
    %2190 = vsyncpa [#allocation3], 1
    %2191 = vsyncpa [#allocation5], 1

</llo_original>
